<compile_context>
chip_gen: v7x
topology: tpu7x:2x2x1
jax: 0.10.0
libtpu: 0.0.40
codegen_flags: <defaults>
</compile_context>

<pallas_src>
import functools

import jax
import jax.numpy as jnp
from jax.experimental import pallas as pl
from jax.experimental.pallas import tpu as pltpu


def _conv_bn_kernel(w_ref, x_ref, g_ref, b_ref, o_ref, *, eps, p_total):
    # w_ref: (Tc, Cin)  x_ref: (Cin, P)  g_ref/b_ref: (Tc, 1)  o_ref: (Tc, P)
    # 1x1 conv == matmul on the MXU; accumulate in f32 regardless of the weight
    # storage dtype (cast is a VPU op, hidden under the weight DMA).
    w = w_ref[...].astype(jnp.float32)
    y = jnp.dot(w, x_ref[...], preferred_element_type=jnp.float32)      # (Tc, P)

    # Training-mode BatchNorm2d over the pixel (lane) axis, per out-channel.
    # Two-pass centered variance: avoids the E[y^2] - mean^2 cancellation that
    # can go negative and NaN through rsqrt on realistic activations.
    inv_p = 1.0 / p_total
    mean = jnp.sum(y, axis=1, keepdims=True) * inv_p                    # (Tc, 1)
    yc = y - mean
    var = jnp.sum(yc * yc, axis=1, keepdims=True) * inv_p               # biased
    var = jnp.maximum(var, 0.0)                                         # belt & braces
    scale = jax.lax.rsqrt(var + eps) * g_ref[...]                       # (Tc, 1)
    o_ref[...] = (yc * scale + b_ref[...]).astype(o_ref.dtype)


def _num_cout_blocks():
    """2-way Cout split only pays on dual-TensorCore chips (megacore / v7x).

    On single-TC v5e / v6e the grid is a serial loop and the second step is
    pure ~0.35 us overhead, so use a single block there.
    """
    try:
        kind = jax.devices()[0].device_kind.lower()
    except Exception:
        return 2  # neutral fallback (split is harmless, just not useful)
    if any(tag in kind for tag in ("v4", "v5p", "v7")):
        return 2
    return 1


def conv2d_bn(x_nchw, weight_oihw, gamma, beta, *, eps=1e-3,
              weight_dtype=jnp.float32):
    """x_nchw: (N, Cin, H, W) f32; weight_oihw: (Cout, Cin, 1, 1); gamma/beta: (Cout,)."""
    N, Cin, H, W = x_nchw.shape
    Cout = weight_oihw.shape[0]
    P = N * H * W

    # Pure-reshape glue (no standalone XLA transposes on the hot path).
    if N == 1:
        x2d = x_nchw.reshape(Cin, P)
    else:
        # Fallback for batched inputs (the traced module has N == 1).
        x2d = jnp.transpose(x_nchw, (1, 0, 2, 3)).reshape(Cin, P)
    # weight_dtype=jnp.bfloat16 halves the dominant HBM stream but costs
    # ~2e-3 RMS output error at Cin=2064 -> keep f32 by default (see header).
    w2d = weight_oihw.reshape(Cout, Cin).astype(weight_dtype)
    g2d = gamma.reshape(Cout, 1).astype(jnp.float32)
    b2d = beta.reshape(Cout, 1).astype(jnp.float32)

    n_blocks = _num_cout_blocks()
    if n_blocks == 1:
        tile_cout = Cout                               # single (Cout, Cin) block
    else:
        half = -(-Cout // 2)                           # ceil(Cout / 2)
        tile_cout = min(Cout, -(-half // 8) * 8)       # round up to sublane quantum
        # NOTE: with Cout=344 and tile=176 the last block's rows 344..351 are
        # Pallas padding; their BN stats run on unspecified data but are purely
        # per-row and dropped on the masked writeback -> real outputs unaffected.
    grid = (pl.cdiv(Cout, tile_cout),)

    flops = 2 * P * Cin * Cout
    w_bytes = Cout * Cin * jnp.dtype(weight_dtype).itemsize
    bytes_accessed = w_bytes + 4 * (Cin * P + Cout * P + 2 * Cout)

    out2d = pl.pallas_call(
        functools.partial(_conv_bn_kernel, eps=eps, p_total=float(P)),
        out_shape=jax.ShapeDtypeStruct((Cout, P), jnp.float32),
        grid=grid,
        in_specs=[
            pl.BlockSpec((tile_cout, Cin), lambda j: (j, 0)),  # weight slice
            pl.BlockSpec((Cin, P), lambda j: (0, 0)),          # activations (resident)
            pl.BlockSpec((tile_cout, 1), lambda j: (j, 0)),    # gamma slice
            pl.BlockSpec((tile_cout, 1), lambda j: (j, 0)),    # beta slice
        ],
        out_specs=pl.BlockSpec((tile_cout, P), lambda j: (j, 0)),
        compiler_params=pltpu.CompilerParams(dimension_semantics=("parallel",)),
        cost_estimate=pl.CostEstimate(
            flops=flops, transcendentals=Cout, bytes_accessed=bytes_accessed),
    )(w2d, x2d, g2d, b2d)

    # (Cout, P) -> (N, Cout, H, W): pure reshape for N == 1.
    if N == 1:
        return out2d.reshape(1, Cout, H, W)
    return jnp.transpose(out2d.reshape(Cout, N, H, W), (1, 0, 2, 3))


def _reference(x_nchw, weight_oihw, gamma, beta, eps=1e-3):
    """Pure-JAX reference of Conv2d(1x1, bias=False) + training-mode BatchNorm2d."""
    N, Cin, H, W = x_nchw.shape
    Cout = weight_oihw.shape[0]
    x2d = jnp.transpose(x_nchw, (0, 2, 3, 1)).reshape(-1, Cin)          # (P, Cin)
    y = x2d @ weight_oihw.reshape(Cout, Cin).T                          # (P, Cout)
    mean = jnp.mean(y, axis=0, keepdims=True)
    var = jnp.mean((y - mean) ** 2, axis=0, keepdims=True)              # biased
    yn = (y - mean) / jnp.sqrt(var + eps) * gamma + beta
    return jnp.transpose(yn.reshape(N, H, W, Cout), (0, 3, 1, 2))


if __name__ == "__main__":
    # Shapes implied by the module: x (1, 2064, 7, 7), conv 2064 -> 344, 1x1.
    N, Cin, H, W, Cout = 1, 2064, 7, 7, 344
    key = jax.random.PRNGKey(0)
    kx, kw, kg, kb = jax.random.split(key, 4)

    x = jax.random.normal(kx, (N, Cin, H, W), dtype=jnp.float32)
    w = jax.random.normal(kw, (Cout, Cin, 1, 1), dtype=jnp.float32) * (1.0 / jnp.sqrt(Cin))
    gamma = 1.0 + 0.1 * jax.random.normal(kg, (Cout,), dtype=jnp.float32)
    beta = 0.1 * jax.random.normal(kb, (Cout,), dtype=jnp.float32)

    out = conv2d_bn(x, w, gamma, beta, eps=1e-3)
    out = jax.block_until_ready(out)

    ref = _reference(x, w, gamma, beta, eps=1e-3)
    assert out.shape == (N, Cout, H, W), out.shape
    max_err = float(jnp.max(jnp.abs(out - ref)))
    assert jnp.allclose(out, ref, atol=1e-3, rtol=1e-3), (
        f"mismatch vs reference, max abs err = {max_err}")

    print("KERNEL_OK")
</pallas_src>

<mosaic_0001>
module attributes {stable_mosaic.version = 11 : i64} {
  func.func @_conv_bn_kernel(%arg0: i32, %arg1: memref<344x2064xf32, #tpu.memory_space<vmem>>, %arg2: memref<2064x49xf32, #tpu.memory_space<vmem>>, %arg3: memref<344x1xf32, #tpu.memory_space<vmem>>, %arg4: memref<344x1xf32, #tpu.memory_space<vmem>>, %arg5: memref<344x49xf32, #tpu.memory_space<vmem>>) attributes {dimension_semantics = [#tpu.dimension_semantics<parallel>], iteration_bounds = array<i64: 1>, scalar_prefetch = 0 : i64, scratch_operands = 0 : i64, tpu.core_type = #tpu.core_type<tc>, window_params = [{transform_indices = @transform_0, window_bounds = array<i64: 344, 2064>}, {pipeline_mode = #tpu.pipeline_mode<synchronous>, transform_indices = @transform_1, window_bounds = array<i64: 2064, 49>}, {transform_indices = @transform_2, window_bounds = array<i64: 344, 1>}, {transform_indices = @transform_3, window_bounds = array<i64: 344, 1>}, {transform_indices = @transform_4, window_bounds = array<i64: 344, 49>}]} {
    %c0 = arith.constant 0 : index
    %c0_0 = arith.constant 0 : index
    %0 = vector.load %arg1[%c0, %c0_0] : memref<344x2064xf32, #tpu.memory_space<vmem>>, vector<344x2064xf32>
    %c0_1 = arith.constant 0 : index
    %c0_2 = arith.constant 0 : index
    %1 = vector.load %arg2[%c0_1, %c0_2] : memref<2064x49xf32, #tpu.memory_space<vmem>>, vector<2064x49xf32>
    %cst = arith.constant dense<0.000000e+00> : vector<344x49xf32>
    %2 = tpu.matmul %0, %1, %cst {dimension_numbers = #tpu.dot_dimension_numbers<[1], [0], [0], [1], [0, 0, 1, 1], [], []>} : vector<344x2064xf32>, vector<2064x49xf32>, vector<344x49xf32> -> vector<344x49xf32>
    %cst_3 = arith.constant dense<0.000000e+00> : vector<344xf32>
    %3 = vector.multi_reduction <add>, %2, %cst_3 [1] : vector<344x49xf32> to vector<344xf32>
    %4 = vector.shape_cast %3 : vector<344xf32> to vector<344x1xf32>
    %cst_4 = arith.constant 0.0204081628 : f32
    %5 = vector.broadcast %cst_4 : f32 to vector<344x1xf32>
    %6 = arith.mulf %4, %5 : vector<344x1xf32>
    %7 = vector.broadcast %6 : vector<344x1xf32> to vector<344x49xf32>
    %8 = arith.subf %2, %7 : vector<344x49xf32>
    %9 = arith.mulf %8, %8 : vector<344x49xf32>
    %cst_5 = arith.constant dense<0.000000e+00> : vector<344xf32>
    %10 = vector.multi_reduction <add>, %9, %cst_5 [1] : vector<344x49xf32> to vector<344xf32>
    %11 = vector.shape_cast %10 : vector<344xf32> to vector<344x1xf32>
    %cst_6 = arith.constant 0.0204081628 : f32
    %12 = vector.broadcast %cst_6 : f32 to vector<344x1xf32>
    %13 = arith.mulf %11, %12 : vector<344x1xf32>
    %cst_7 = arith.constant 0.000000e+00 : f32
    %14 = vector.broadcast %cst_7 : f32 to vector<344x1xf32>
    %15 = arith.maximumf %13, %14 : vector<344x1xf32>
    %cst_8 = arith.constant 1.000000e-03 : f32
    %16 = vector.broadcast %cst_8 : f32 to vector<344x1xf32>
    %17 = arith.addf %15, %16 : vector<344x1xf32>
    %18 = math.rsqrt %17 : vector<344x1xf32>
    %c0_9 = arith.constant 0 : index
    %c0_10 = arith.constant 0 : index
    %19 = vector.load %arg3[%c0_9, %c0_10] : memref<344x1xf32, #tpu.memory_space<vmem>>, vector<344x1xf32>
    %20 = arith.mulf %18, %19 : vector<344x1xf32>
    %21 = vector.broadcast %20 : vector<344x1xf32> to vector<344x49xf32>
    %22 = arith.mulf %8, %21 : vector<344x49xf32>
    %c0_11 = arith.constant 0 : index
    %c0_12 = arith.constant 0 : index
    %23 = vector.load %arg4[%c0_11, %c0_12] : memref<344x1xf32, #tpu.memory_space<vmem>>, vector<344x1xf32>
    %24 = vector.broadcast %23 : vector<344x1xf32> to vector<344x49xf32>
    %25 = arith.addf %22, %24 : vector<344x49xf32>
    %c0_13 = arith.constant 0 : index
    %c0_14 = arith.constant 0 : index
    %26 = vector.load %arg5[%c0_13, %c0_14] : memref<344x49xf32, #tpu.memory_space<vmem>>, vector<344x49xf32>
    tpu.vector_store %arg5[%c0_13, %c0_14], %25 {strides = array<i32>} : memref<344x49xf32, #tpu.memory_space<vmem>>, vector<344x49xf32>,
    return
  }
  func.func @transform_0(%arg0: i32) -> (i32, i32) {
    %c0_i32 = arith.constant 0 : i32
    %c0_i32_0 = arith.constant 0 : i32
    return %arg0, %c0_i32 : i32, i32
  }
  func.func @transform_1(%arg0: i32) -> (i32, i32) {
    %c0_i32 = arith.constant 0 : i32
    %c0_i32_0 = arith.constant 0 : i32
    %c0_i32_1 = arith.constant 0 : i32
    return %c0_i32, %c0_i32_0 : i32, i32
  }
  func.func @transform_2(%arg0: i32) -> (i32, i32) {
    %c0_i32 = arith.constant 0 : i32
    %c0_i32_0 = arith.constant 0 : i32
    return %arg0, %c0_i32 : i32, i32
  }
  func.func @transform_3(%arg0: i32) -> (i32, i32) {
    %c0_i32 = arith.constant 0 : i32
    %c0_i32_0 = arith.constant 0 : i32
    return %arg0, %c0_i32 : i32, i32
  }
  func.func @transform_4(%arg0: i32) -> (i32, i32) {
    %c0_i32 = arith.constant 0 : i32
    %c0_i32_0 = arith.constant 0 : i32
    return %arg0, %c0_i32 : i32, i32
  }
}

</mosaic_0001>

<llo_original>
// kernel: tpu_custom_call.1
$region0: #{tpu_custom_call.1}
  #allocation0 [shape = 'u32[]', space=smem, size = 0x4, offset = 0x4, fixed_abs, tag = 'smem constant byte address 0x4 - core index']
  #allocation1 [shape = 'u32[144,128]{1,0:T(1,128)}', space=vmem, size = 0x12000, scoped, tag = 'internal scratch']
  %s0 = inlined_call_operand.hbm [shape: f32[344,2064], index: 0, kind: input, shape index: {}]
  %s1 = inlined_call_operand.vmem [shape: f32[2064,49], index: 1, kind: input, shape index: {}]
  %s2 = inlined_call_operand.vmem [shape: f32[344,1], index: 2, kind: input, shape index: {}]
  %s3 = inlined_call_operand.vmem [shape: f32[344,1], index: 3, kind: input, shape index: {}]
  %s4 = inlined_call_operand.vmem [shape: f32[344,49], index: 4, kind: output, shape index: {}]
  %s5 = sld [smem:[#allocation0]]
  $region30: #{tpu_custom_call.1} parent=0
    _
  %s7 = ssub.s32 1, %s5
  %s8 = scalar_select 0, %s7, %s5
  $region1: #{tpu_custom_call.1} parent=0
    #allocation2 [shape = 'u8[2994176]{0}', space=vmem, size = 0x2db000, scoped, tag = 'input window, operand 0, single buffered']
    #allocation3 [shape = 's32[1]{0}', space=sflag, size = 0x4, scoped, tag = 'scoped memory for tpu_custom_call.1']
    %9 = vsyncpa [#allocation3], 0
    // Predicated region
    $region2: #{tpu_custom_call.1} parent=1 // pred_check
      _
    $region3: #{tpu_custom_call.1} parent=1 // pred_check_branch
      %11 = sbr.rel (0) target = $region5
    $region4: #{tpu_custom_call.1} parent=1 // pred_region
      %s13 = ssub.s32 93568, 93568
      %14 = vsyncadd [#allocation3], %s13
      %s15 = sshll.u32 [#allocation2], 4
      %s16 = int_to_ptr.vmem [resolvable:$true] %s15
      %21 = dma.hbm_to_vmem [thread:$0]  %s0, 93568, %s16, [#allocation3], 2176, 2176, 136
    $region5: #{tpu_custom_call.1} parent=1 // pred_fallthru
      _
    // Predicated region
    $region6: #{tpu_custom_call.1} parent=1 // pred_check
      _
    $region7: #{tpu_custom_call.1} parent=1 // pred_check_branch
      %23 = sbr.rel (0) target = $region9
    $region8: #{tpu_custom_call.1} parent=1 // pred_region
      _
    $region9: #{tpu_custom_call.1} parent=1 // pred_fallthru
      _
    // Predicated region
    $region10: #{tpu_custom_call.1} parent=1 // pred_check
      _
    $region11: #{tpu_custom_call.1} parent=1 // pred_check_branch
      %25 = sbr.rel (0) target = $region13
    $region12: #{tpu_custom_call.1} parent=1 // pred_region
      _
    $region13: #{tpu_custom_call.1} parent=1 // pred_fallthru
      _
    // Predicated region
    $region14: #{tpu_custom_call.1} parent=1 // pred_check
      _
    $region15: #{tpu_custom_call.1} parent=1 // pred_check_branch
      %27 = sbr.rel (0) target = $region17
    $region16: #{tpu_custom_call.1} parent=1 // pred_region
      _
    $region17: #{tpu_custom_call.1} parent=1 // pred_fallthru
      _
    // Predicated region
    $region18: #{tpu_custom_call.1} parent=1 // pred_check
      _
    $region19: #{tpu_custom_call.1} parent=1 // pred_check_branch
      %29 = sbr.rel (0) target = $region21
    $region20: #{tpu_custom_call.1} parent=1 // pred_region
      %30 = dma.done [#allocation3], 93568
    $region21: #{tpu_custom_call.1} parent=1 // pred_fallthru
      _
    %v31 = vld [vmem:[#allocation2] sm:$0xff]
    %v32 = vld [vmem:[#allocation2 + $0x8] sm:$0xff]
    %v33 = vld [vmem:[#allocation2 + $0x10] sm:$0xff]
    %v34 = vld [vmem:[#allocation2 + $0x18] sm:$0xff]
    %v35 = vld [vmem:[#allocation2 + $0x20] sm:$0xff]
    %v36 = vld [vmem:[#allocation2 + $0x28] sm:$0xff]
    %v37 = vld [vmem:[#allocation2 + $0x30] sm:$0xff]
    %v38 = vld [vmem:[#allocation2 + $0x38] sm:$0xff]
    %v39 = vld [vmem:[#allocation2 + $0x40] sm:$0xff]
    %v40 = vld [vmem:[#allocation2 + $0x48] sm:$0xff]
    %v41 = vld [vmem:[#allocation2 + $0x50] sm:$0xff]
    %v42 = vld [vmem:[#allocation2 + $0x58] sm:$0xff]
    %v43 = vld [vmem:[#allocation2 + $0x60] sm:$0xff]
    %v44 = vld [vmem:[#allocation2 + $0x68] sm:$0xff]
    %v45 = vld [vmem:[#allocation2 + $0x70] sm:$0xff]
    %v46 = vld [vmem:[#allocation2 + $0x78] sm:$0xff]
    %v47 = vld [vmem:[#allocation2 + $0x80] sm:$0xff]
    %v48 = vld [vmem:[#allocation2 + $0x88] sm:$0xff]
    %v49 = vld [vmem:[#allocation2 + $0x90] sm:$0xff]
    %v50 = vld [vmem:[#allocation2 + $0x98] sm:$0xff]
    %v51 = vld [vmem:[#allocation2 + $0xa0] sm:$0xff]
    %v52 = vld [vmem:[#allocation2 + $0xa8] sm:$0xff]
    %v53 = vld [vmem:[#allocation2 + $0xb0] sm:$0xff]
    %v54 = vld [vmem:[#allocation2 + $0xb8] sm:$0xff]
    %v55 = vld [vmem:[#allocation2 + $0xc0] sm:$0xff]
    %v56 = vld [vmem:[#allocation2 + $0xc8] sm:$0xff]
    %v57 = vld [vmem:[#allocation2 + $0xd0] sm:$0xff]
    %v58 = vld [vmem:[#allocation2 + $0xd8] sm:$0xff]
    %v59 = vld [vmem:[#allocation2 + $0xe0] sm:$0xff]
    %v60 = vld [vmem:[#allocation2 + $0xe8] sm:$0xff]
    %v61 = vld [vmem:[#allocation2 + $0xf0] sm:$0xff]
    %v62 = vld [vmem:[#allocation2 + $0xf8] sm:$0xff]
    %v63 = vld [vmem:[#allocation2 + $0x100] sm:$0xff]
    %v64 = vld [vmem:[#allocation2 + $0x108] sm:$0xff]
    %v65 = vld [vmem:[#allocation2 + $0x110] sm:$0xff]
    %v66 = vld [vmem:[#allocation2 + $0x118] sm:$0xff]
    %v67 = vld [vmem:[#allocation2 + $0x120] sm:$0xff]
    %v68 = vld [vmem:[#allocation2 + $0x128] sm:$0xff]
    %v69 = vld [vmem:[#allocation2 + $0x130] sm:$0xff]
    %v70 = vld [vmem:[#allocation2 + $0x138] sm:$0xff]
    %v71 = vld [vmem:[#allocation2 + $0x140] sm:$0xff]
    %v72 = vld [vmem:[#allocation2 + $0x148] sm:$0xff]
    %v73 = vld [vmem:[#allocation2 + $0x150] sm:$0xff]
    %v74 = vld [vmem:[#allocation2 + $0x158] sm:$0xff]
    %v75 = vld [vmem:[#allocation2 + $0x160] sm:$0xff]
    %v76 = vld [vmem:[#allocation2 + $0x168] sm:$0xff]
    %v77 = vld [vmem:[#allocation2 + $0x170] sm:$0xff]
    %v78 = vld [vmem:[#allocation2 + $0x178] sm:$0xff]
    %v79 = vld [vmem:[#allocation2 + $0x180] sm:$0xff]
    %v80 = vld [vmem:[#allocation2 + $0x188] sm:$0xff]
    %v81 = vld [vmem:[#allocation2 + $0x190] sm:$0xff]
    %v82 = vld [vmem:[#allocation2 + $0x198] sm:$0xff]
    %v83 = vld [vmem:[#allocation2 + $0x1a0] sm:$0xff]
    %v84 = vld [vmem:[#allocation2 + $0x1a8] sm:$0xff]
    %v85 = vld [vmem:[#allocation2 + $0x1b0] sm:$0xff]
    %v86 = vld [vmem:[#allocation2 + $0x1b8] sm:$0xff]
    %v87 = vld [vmem:[#allocation2 + $0x1c0] sm:$0xff]
    %v88 = vld [vmem:[#allocation2 + $0x1c8] sm:$0xff]
    %v89 = vld [vmem:[#allocation2 + $0x1d0] sm:$0xff]
    %v90 = vld [vmem:[#allocation2 + $0x1d8] sm:$0xff]
    %v91 = vld [vmem:[#allocation2 + $0x1e0] sm:$0xff]
    %v92 = vld [vmem:[#allocation2 + $0x1e8] sm:$0xff]
    %v93 = vld [vmem:[#allocation2 + $0x1f0] sm:$0xff]
    %v94 = vld [vmem:[#allocation2 + $0x1f8] sm:$0xff]
    %v95 = vld [vmem:[#allocation2 + $0x200] sm:$0xff]
    %v96 = vld [vmem:[#allocation2 + $0x208] sm:$0xff]
    %v97 = vld [vmem:[#allocation2 + $0x210] sm:$0xff]
    %v98 = vld [vmem:[#allocation2 + $0x218] sm:$0xff]
    %v99 = vld [vmem:[#allocation2 + $0x220] sm:$0xff]
    %v100 = vld [vmem:[#allocation2 + $0x228] sm:$0xff]
    %v101 = vld [vmem:[#allocation2 + $0x230] sm:$0xff]
    %v102 = vld [vmem:[#allocation2 + $0x238] sm:$0xff]
    %v103 = vld [vmem:[#allocation2 + $0x240] sm:$0xff]
    %v104 = vld [vmem:[#allocation2 + $0x248] sm:$0xff]
    %v105 = vld [vmem:[#allocation2 + $0x250] sm:$0xff]
    %v106 = vld [vmem:[#allocation2 + $0x258] sm:$0xff]
    %v107 = vld [vmem:[#allocation2 + $0x260] sm:$0xff]
    %v108 = vld [vmem:[#allocation2 + $0x268] sm:$0xff]
    %v109 = vld [vmem:[#allocation2 + $0x270] sm:$0xff]
    %v110 = vld [vmem:[#allocation2 + $0x278] sm:$0xff]
    %v111 = vld [vmem:[#allocation2 + $0x280] sm:$0xff]
    %v112 = vld [vmem:[#allocation2 + $0x288] sm:$0xff]
    %v113 = vld [vmem:[#allocation2 + $0x290] sm:$0xff]
    %v114 = vld [vmem:[#allocation2 + $0x298] sm:$0xff]
    %v115 = vld [vmem:[#allocation2 + $0x2a0] sm:$0xff]
    %v116 = vld [vmem:[#allocation2 + $0x2a8] sm:$0xff]
    %v117 = vld [vmem:[#allocation2 + $0x2b0] sm:$0xff]
    %v118 = vld [vmem:[#allocation2 + $0x2b8] sm:$0xff]
    %v119 = vld [vmem:[#allocation2 + $0x2c0] sm:$0xff]
    %v120 = vld [vmem:[#allocation2 + $0x2c8] sm:$0xff]
    %v121 = vld [vmem:[#allocation2 + $0x2d0] sm:$0xff]
    %v122 = vld [vmem:[#allocation2 + $0x2d8] sm:$0xff]
    %v123 = vld [vmem:[#allocation2 + $0x2e0] sm:$0xff]
    %v124 = vld [vmem:[#allocation2 + $0x2e8] sm:$0xff]
    %v125 = vld [vmem:[#allocation2 + $0x2f0] sm:$0xff]
    %v126 = vld [vmem:[#allocation2 + $0x2f8] sm:$0xff]
    %v127 = vld [vmem:[#allocation2 + $0x300] sm:$0xff]
    %v128 = vld [vmem:[#allocation2 + $0x308] sm:$0xff]
    %v129 = vld [vmem:[#allocation2 + $0x310] sm:$0xff]
    %v130 = vld [vmem:[#allocation2 + $0x318] sm:$0xff]
    %v131 = vld [vmem:[#allocation2 + $0x320] sm:$0xff]
    %v132 = vld [vmem:[#allocation2 + $0x328] sm:$0xff]
    %v133 = vld [vmem:[#allocation2 + $0x330] sm:$0xff]
    %v134 = vld [vmem:[#allocation2 + $0x338] sm:$0xff]
    %v135 = vld [vmem:[#allocation2 + $0x340] sm:$0xff]
    %v136 = vld [vmem:[#allocation2 + $0x348] sm:$0xff]
    %v137 = vld [vmem:[#allocation2 + $0x350] sm:$0xff]
    %v138 = vld [vmem:[#allocation2 + $0x358] sm:$0xff]
    %v139 = vld [vmem:[#allocation2 + $0x360] sm:$0xff]
    %v140 = vld [vmem:[#allocation2 + $0x368] sm:$0xff]
    %v141 = vld [vmem:[#allocation2 + $0x370] sm:$0xff]
    %v142 = vld [vmem:[#allocation2 + $0x378] sm:$0xff]
    %v143 = vld [vmem:[#allocation2 + $0x380] sm:$0xff]
    %v144 = vld [vmem:[#allocation2 + $0x388] sm:$0xff]
    %v145 = vld [vmem:[#allocation2 + $0x390] sm:$0xff]
    %v146 = vld [vmem:[#allocation2 + $0x398] sm:$0xff]
    %v147 = vld [vmem:[#allocation2 + $0x3a0] sm:$0xff]
    %v148 = vld [vmem:[#allocation2 + $0x3a8] sm:$0xff]
    %v149 = vld [vmem:[#allocation2 + $0x3b0] sm:$0xff]
    %v150 = vld [vmem:[#allocation2 + $0x3b8] sm:$0xff]
    %v151 = vld [vmem:[#allocation2 + $0x3c0] sm:$0xff]
    %v152 = vld [vmem:[#allocation2 + $0x3c8] sm:$0xff]
    %v153 = vld [vmem:[#allocation2 + $0x3d0] sm:$0xff]
    %v154 = vld [vmem:[#allocation2 + $0x3d8] sm:$0xff]
    %v155 = vld [vmem:[#allocation2 + $0x3e0] sm:$0xff]
    %v156 = vld [vmem:[#allocation2 + $0x3e8] sm:$0xff]
    %v157 = vld [vmem:[#allocation2 + $0x3f0] sm:$0xff]
    %v158 = vld [vmem:[#allocation2 + $0x3f8] sm:$0xff]
    %v159 = vld [vmem:[#allocation2 + $0x400] sm:$0xff]
    %v160 = vld [vmem:[#allocation2 + $0x408] sm:$0xff]
    %v161 = vld [vmem:[#allocation2 + $0x410] sm:$0xff]
    %v162 = vld [vmem:[#allocation2 + $0x418] sm:$0xff]
    %v163 = vld [vmem:[#allocation2 + $0x420] sm:$0xff]
    %v164 = vld [vmem:[#allocation2 + $0x428] sm:$0xff]
    %v165 = vld [vmem:[#allocation2 + $0x430] sm:$0xff]
    %v166 = vld [vmem:[#allocation2 + $0x438] sm:$0xff]
    %v167 = vld [vmem:[#allocation2 + $0x440] sm:$0xff]
    %v168 = vld [vmem:[#allocation2 + $0x448] sm:$0xff]
    %v169 = vld [vmem:[#allocation2 + $0x450] sm:$0xff]
    %v170 = vld [vmem:[#allocation2 + $0x458] sm:$0xff]
    %v171 = vld [vmem:[#allocation2 + $0x460] sm:$0xff]
    %v172 = vld [vmem:[#allocation2 + $0x468] sm:$0xff]
    %v173 = vld [vmem:[#allocation2 + $0x470] sm:$0xff]
    %v174 = vld [vmem:[#allocation2 + $0x478] sm:$0xff]
    %v175 = vld [vmem:[#allocation2 + $0x480] sm:$0xff]
    %v176 = vld [vmem:[#allocation2 + $0x488] sm:$0xff]
    %v177 = vld [vmem:[#allocation2 + $0x490] sm:$0xff]
    %v178 = vld [vmem:[#allocation2 + $0x498] sm:$0xff]
    %v179 = vld [vmem:[#allocation2 + $0x4a0] sm:$0xff]
    %v180 = vld [vmem:[#allocation2 + $0x4a8] sm:$0xff]
    %v181 = vld [vmem:[#allocation2 + $0x4b0] sm:$0xff]
    %v182 = vld [vmem:[#allocation2 + $0x4b8] sm:$0xff]
    %v183 = vld [vmem:[#allocation2 + $0x4c0] sm:$0xff]
    %v184 = vld [vmem:[#allocation2 + $0x4c8] sm:$0xff]
    %v185 = vld [vmem:[#allocation2 + $0x4d0] sm:$0xff]
    %v186 = vld [vmem:[#allocation2 + $0x4d8] sm:$0xff]
    %v187 = vld [vmem:[#allocation2 + $0x4e0] sm:$0xff]
    %v188 = vld [vmem:[#allocation2 + $0x4e8] sm:$0xff]
    %v189 = vld [vmem:[#allocation2 + $0x4f0] sm:$0xff]
    %v190 = vld [vmem:[#allocation2 + $0x4f8] sm:$0xff]
    %v191 = vld [vmem:[#allocation2 + $0x500] sm:$0xff]
    %v192 = vld [vmem:[#allocation2 + $0x508] sm:$0xff]
    %v193 = vld [vmem:[#allocation2 + $0x510] sm:$0xff]
    %v194 = vld [vmem:[#allocation2 + $0x518] sm:$0xff]
    %v195 = vld [vmem:[#allocation2 + $0x520] sm:$0xff]
    %v196 = vld [vmem:[#allocation2 + $0x528] sm:$0xff]
    %v197 = vld [vmem:[#allocation2 + $0x530] sm:$0xff]
    %v198 = vld [vmem:[#allocation2 + $0x538] sm:$0xff]
    %v199 = vld [vmem:[#allocation2 + $0x540] sm:$0xff]
    %v200 = vld [vmem:[#allocation2 + $0x548] sm:$0xff]
    %v201 = vld [vmem:[#allocation2 + $0x550] sm:$0xff]
    %v202 = vld [vmem:[#allocation2 + $0x558] sm:$0xff]
    %v203 = vld [vmem:[#allocation2 + $0x560] sm:$0xff]
    %v204 = vld [vmem:[#allocation2 + $0x568] sm:$0xff]
    %v205 = vld [vmem:[#allocation2 + $0x570] sm:$0xff]
    %v206 = vld [vmem:[#allocation2 + $0x578] sm:$0xff]
    %v207 = vld [vmem:[#allocation2 + $0x580] sm:$0xff]
    %v208 = vld [vmem:[#allocation2 + $0x588] sm:$0xff]
    %v209 = vld [vmem:[#allocation2 + $0x590] sm:$0xff]
    %v210 = vld [vmem:[#allocation2 + $0x598] sm:$0xff]
    %v211 = vld [vmem:[#allocation2 + $0x5a0] sm:$0xff]
    %v212 = vld [vmem:[#allocation2 + $0x5a8] sm:$0xff]
    %v213 = vld [vmem:[#allocation2 + $0x5b0] sm:$0xff]
    %v214 = vld [vmem:[#allocation2 + $0x5b8] sm:$0xff]
    %v215 = vld [vmem:[#allocation2 + $0x5c0] sm:$0xff]
    %v216 = vld [vmem:[#allocation2 + $0x5c8] sm:$0xff]
    %v217 = vld [vmem:[#allocation2 + $0x5d0] sm:$0xff]
    %v218 = vld [vmem:[#allocation2 + $0x5d8] sm:$0xff]
    %v219 = vld [vmem:[#allocation2 + $0x5e0] sm:$0xff]
    %v220 = vld [vmem:[#allocation2 + $0x5e8] sm:$0xff]
    %v221 = vld [vmem:[#allocation2 + $0x5f0] sm:$0xff]
    %v222 = vld [vmem:[#allocation2 + $0x5f8] sm:$0xff]
    %v223 = vld [vmem:[#allocation2 + $0x600] sm:$0xff]
    %v224 = vld [vmem:[#allocation2 + $0x608] sm:$0xff]
    %v225 = vld [vmem:[#allocation2 + $0x610] sm:$0xff]
    %v226 = vld [vmem:[#allocation2 + $0x618] sm:$0xff]
    %v227 = vld [vmem:[#allocation2 + $0x620] sm:$0xff]
    %v228 = vld [vmem:[#allocation2 + $0x628] sm:$0xff]
    %v229 = vld [vmem:[#allocation2 + $0x630] sm:$0xff]
    %v230 = vld [vmem:[#allocation2 + $0x638] sm:$0xff]
    %v231 = vld [vmem:[#allocation2 + $0x640] sm:$0xff]
    %v232 = vld [vmem:[#allocation2 + $0x648] sm:$0xff]
    %v233 = vld [vmem:[#allocation2 + $0x650] sm:$0xff]
    %v234 = vld [vmem:[#allocation2 + $0x658] sm:$0xff]
    %v235 = vld [vmem:[#allocation2 + $0x660] sm:$0xff]
    %v236 = vld [vmem:[#allocation2 + $0x668] sm:$0xff]
    %v237 = vld [vmem:[#allocation2 + $0x670] sm:$0xff]
    %v238 = vld [vmem:[#allocation2 + $0x678] sm:$0xff]
    %v239 = vld [vmem:[#allocation2 + $0x680] sm:$0xff]
    %v240 = vld [vmem:[#allocation2 + $0x688] sm:$0xff]
    %v241 = vld [vmem:[#allocation2 + $0x690] sm:$0xff]
    %v242 = vld [vmem:[#allocation2 + $0x698] sm:$0xff]
    %v243 = vld [vmem:[#allocation2 + $0x6a0] sm:$0xff]
    %v244 = vld [vmem:[#allocation2 + $0x6a8] sm:$0xff]
    %v245 = vld [vmem:[#allocation2 + $0x6b0] sm:$0xff]
    %v246 = vld [vmem:[#allocation2 + $0x6b8] sm:$0xff]
    %v247 = vld [vmem:[#allocation2 + $0x6c0] sm:$0xff]
    %v248 = vld [vmem:[#allocation2 + $0x6c8] sm:$0xff]
    %v249 = vld [vmem:[#allocation2 + $0x6d0] sm:$0xff]
    %v250 = vld [vmem:[#allocation2 + $0x6d8] sm:$0xff]
    %v251 = vld [vmem:[#allocation2 + $0x6e0] sm:$0xff]
    %v252 = vld [vmem:[#allocation2 + $0x6e8] sm:$0xff]
    %v253 = vld [vmem:[#allocation2 + $0x6f0] sm:$0xff]
    %v254 = vld [vmem:[#allocation2 + $0x6f8] sm:$0xff]
    %v255 = vld [vmem:[#allocation2 + $0x700] sm:$0xff]
    %v256 = vld [vmem:[#allocation2 + $0x708] sm:$0xff]
    %v257 = vld [vmem:[#allocation2 + $0x710] sm:$0xff]
    %v258 = vld [vmem:[#allocation2 + $0x718] sm:$0xff]
    %v259 = vld [vmem:[#allocation2 + $0x720] sm:$0xff]
    %v260 = vld [vmem:[#allocation2 + $0x728] sm:$0xff]
    %v261 = vld [vmem:[#allocation2 + $0x730] sm:$0xff]
    %v262 = vld [vmem:[#allocation2 + $0x738] sm:$0xff]
    %v263 = vld [vmem:[#allocation2 + $0x740] sm:$0xff]
    %v264 = vld [vmem:[#allocation2 + $0x748] sm:$0xff]
    %v265 = vld [vmem:[#allocation2 + $0x750] sm:$0xff]
    %v266 = vld [vmem:[#allocation2 + $0x758] sm:$0xff]
    %v267 = vld [vmem:[#allocation2 + $0x760] sm:$0xff]
    %v268 = vld [vmem:[#allocation2 + $0x768] sm:$0xff]
    %v269 = vld [vmem:[#allocation2 + $0x770] sm:$0xff]
    %v270 = vld [vmem:[#allocation2 + $0x778] sm:$0xff]
    %v271 = vld [vmem:[#allocation2 + $0x780] sm:$0xff]
    %v272 = vld [vmem:[#allocation2 + $0x788] sm:$0xff]
    %v273 = vld [vmem:[#allocation2 + $0x790] sm:$0xff]
    %v274 = vld [vmem:[#allocation2 + $0x798] sm:$0xff]
    %v275 = vld [vmem:[#allocation2 + $0x7a0] sm:$0xff]
    %v276 = vld [vmem:[#allocation2 + $0x7a8] sm:$0xff]
    %v277 = vld [vmem:[#allocation2 + $0x7b0] sm:$0xff]
    %v278 = vld [vmem:[#allocation2 + $0x7b8] sm:$0xff]
    %v279 = vld [vmem:[#allocation2 + $0x7c0] sm:$0xff]
    %v280 = vld [vmem:[#allocation2 + $0x7c8] sm:$0xff]
    %v281 = vld [vmem:[#allocation2 + $0x7d0] sm:$0xff]
    %v282 = vld [vmem:[#allocation2 + $0x7d8] sm:$0xff]
    %v283 = vld [vmem:[#allocation2 + $0x7e0] sm:$0xff]
    %v284 = vld [vmem:[#allocation2 + $0x7e8] sm:$0xff]
    %v285 = vld [vmem:[#allocation2 + $0x7f0] sm:$0xff]
    %v286 = vld [vmem:[#allocation2 + $0x7f8] sm:$0xff]
    %v287 = vld [vmem:[#allocation2 + $0x800] sm:$0xff]
    %v288 = vld [vmem:[#allocation2 + $0x808] sm:$0xff]
    %v289 = vld [vmem:[#allocation2 + $0x810] sm:$0xff]
    %v290 = vld [vmem:[#allocation2 + $0x818] sm:$0xff]
    %v291 = vld [vmem:[#allocation2 + $0x820] sm:$0xff]
    %v292 = vld [vmem:[#allocation2 + $0x828] sm:$0xff]
    %v293 = vld [vmem:[#allocation2 + $0x830] sm:$0xff]
    %v294 = vld [vmem:[#allocation2 + $0x838] sm:$0xff]
    %v295 = vld [vmem:[#allocation2 + $0x840] sm:$0xff]
    %v296 = vld [vmem:[#allocation2 + $0x848] sm:$0xff]
    %v297 = vld [vmem:[#allocation2 + $0x850] sm:$0xff]
    %v298 = vld [vmem:[#allocation2 + $0x858] sm:$0xff]
    %v299 = vld [vmem:[#allocation2 + $0x860] sm:$0xff]
    %v300 = vld [vmem:[#allocation2 + $0x868] sm:$0xff]
    %v301 = vld [vmem:[#allocation2 + $0x870] sm:$0xff]
    %v302 = vld [vmem:[#allocation2 + $0x878] sm:$0xff]
    %v303 = vld [vmem:[#allocation2 + $0x880] sm:$0xff]
    %v304 = vld [vmem:[#allocation2 + $0x888] sm:$0xff]
    %v305 = vld [vmem:[#allocation2 + $0x890] sm:$0xff]
    %v306 = vld [vmem:[#allocation2 + $0x898] sm:$0xff]
    %v307 = vld [vmem:[#allocation2 + $0x8a0] sm:$0xff]
    %v308 = vld [vmem:[#allocation2 + $0x8a8] sm:$0xff]
    %v309 = vld [vmem:[#allocation2 + $0x8b0] sm:$0xff]
    %v310 = vld [vmem:[#allocation2 + $0x8b8] sm:$0xff]
    %v311 = vld [vmem:[#allocation2 + $0x8c0] sm:$0xff]
    %v312 = vld [vmem:[#allocation2 + $0x8c8] sm:$0xff]
    %v313 = vld [vmem:[#allocation2 + $0x8d0] sm:$0xff]
    %v314 = vld [vmem:[#allocation2 + $0x8d8] sm:$0xff]
    %v315 = vld [vmem:[#allocation2 + $0x8e0] sm:$0xff]
    %v316 = vld [vmem:[#allocation2 + $0x8e8] sm:$0xff]
    %v317 = vld [vmem:[#allocation2 + $0x8f0] sm:$0xff]
    %v318 = vld [vmem:[#allocation2 + $0x8f8] sm:$0xff]
    %v319 = vld [vmem:[#allocation2 + $0x900] sm:$0xff]
    %v320 = vld [vmem:[#allocation2 + $0x908] sm:$0xff]
    %v321 = vld [vmem:[#allocation2 + $0x910] sm:$0xff]
    %v322 = vld [vmem:[#allocation2 + $0x918] sm:$0xff]
    %v323 = vld [vmem:[#allocation2 + $0x920] sm:$0xff]
    %v324 = vld [vmem:[#allocation2 + $0x928] sm:$0xff]
    %v325 = vld [vmem:[#allocation2 + $0x930] sm:$0xff]
    %v326 = vld [vmem:[#allocation2 + $0x938] sm:$0xff]
    %v327 = vld [vmem:[#allocation2 + $0x940] sm:$0xff]
    %v328 = vld [vmem:[#allocation2 + $0x948] sm:$0xff]
    %v329 = vld [vmem:[#allocation2 + $0x950] sm:$0xff]
    %v330 = vld [vmem:[#allocation2 + $0x958] sm:$0xff]
    %v331 = vld [vmem:[#allocation2 + $0x960] sm:$0xff]
    %v332 = vld [vmem:[#allocation2 + $0x968] sm:$0xff]
    %v333 = vld [vmem:[#allocation2 + $0x970] sm:$0xff]
    %v334 = vld [vmem:[#allocation2 + $0x978] sm:$0xff]
    %v335 = vld [vmem:[#allocation2 + $0x980] sm:$0xff]
    %v336 = vld [vmem:[#allocation2 + $0x988] sm:$0xff]
    %v337 = vld [vmem:[#allocation2 + $0x990] sm:$0xff]
    %v338 = vld [vmem:[#allocation2 + $0x998] sm:$0xff]
    %v339 = vld [vmem:[#allocation2 + $0x9a0] sm:$0xff]
    %v340 = vld [vmem:[#allocation2 + $0x9a8] sm:$0xff]
    %v341 = vld [vmem:[#allocation2 + $0x9b0] sm:$0xff]
    %v342 = vld [vmem:[#allocation2 + $0x9b8] sm:$0xff]
    %v343 = vld [vmem:[#allocation2 + $0x9c0] sm:$0xff]
    %v344 = vld [vmem:[#allocation2 + $0x9c8] sm:$0xff]
    %v345 = vld [vmem:[#allocation2 + $0x9d0] sm:$0xff]
    %v346 = vld [vmem:[#allocation2 + $0x9d8] sm:$0xff]
    %v347 = vld [vmem:[#allocation2 + $0x9e0] sm:$0xff]
    %v348 = vld [vmem:[#allocation2 + $0x9e8] sm:$0xff]
    %v349 = vld [vmem:[#allocation2 + $0x9f0] sm:$0xff]
    %v350 = vld [vmem:[#allocation2 + $0x9f8] sm:$0xff]
    %v351 = vld [vmem:[#allocation2 + $0xa00] sm:$0xff]
    %v352 = vld [vmem:[#allocation2 + $0xa08] sm:$0xff]
    %v353 = vld [vmem:[#allocation2 + $0xa10] sm:$0xff]
    %v354 = vld [vmem:[#allocation2 + $0xa18] sm:$0xff]
    %v355 = vld [vmem:[#allocation2 + $0xa20] sm:$0xff]
    %v356 = vld [vmem:[#allocation2 + $0xa28] sm:$0xff]
    %v357 = vld [vmem:[#allocation2 + $0xa30] sm:$0xff]
    %v358 = vld [vmem:[#allocation2 + $0xa38] sm:$0xff]
    %v359 = vld [vmem:[#allocation2 + $0xa40] sm:$0xff]
    %v360 = vld [vmem:[#allocation2 + $0xa48] sm:$0xff]
    %v361 = vld [vmem:[#allocation2 + $0xa50] sm:$0xff]
    %v362 = vld [vmem:[#allocation2 + $0xa58] sm:$0xff]
    %v363 = vld [vmem:[#allocation2 + $0xa60] sm:$0xff]
    %v364 = vld [vmem:[#allocation2 + $0xa68] sm:$0xff]
    %v365 = vld [vmem:[#allocation2 + $0xa70] sm:$0xff]
    %v366 = vld [vmem:[#allocation2 + $0xa78] sm:$0xff]
    %v367 = vld [vmem:[#allocation2 + $0xa80] sm:$0xff]
    %v368 = vld [vmem:[#allocation2 + $0xa88] sm:$0xff]
    %v369 = vld [vmem:[#allocation2 + $0xa90] sm:$0xff]
    %v370 = vld [vmem:[#allocation2 + $0xa98] sm:$0xff]
    %v371 = vld [vmem:[#allocation2 + $0xaa0] sm:$0xff]
    %v372 = vld [vmem:[#allocation2 + $0xaa8] sm:$0xff]
    %v373 = vld [vmem:[#allocation2 + $0xab0] sm:$0xff]
    %v374 = vld [vmem:[#allocation2 + $0xab8] sm:$0xff]
    %v375 = vld [vmem:[#allocation2 + $0xac0] sm:$0xff]
    %v376 = vld [vmem:[#allocation2 + $0xac8] sm:$0xff]
    %v377 = vld [vmem:[#allocation2 + $0xad0] sm:$0xff]
    %v378 = vld [vmem:[#allocation2 + $0xad8] sm:$0xff]
    %v379 = vld [vmem:[#allocation2 + $0xae0] sm:$0xff]
    %v380 = vld [vmem:[#allocation2 + $0xae8] sm:$0xff]
    %v381 = vld [vmem:[#allocation2 + $0xaf0] sm:$0xff]
    %v382 = vld [vmem:[#allocation2 + $0xaf8] sm:$0xff]
    %v383 = vld [vmem:[#allocation2 + $0xb00] sm:$0xff]
    %v384 = vld [vmem:[#allocation2 + $0xb08] sm:$0xff]
    %v385 = vld [vmem:[#allocation2 + $0xb10] sm:$0xff]
    %v386 = vld [vmem:[#allocation2 + $0xb18] sm:$0xff]
    %v387 = vld [vmem:[#allocation2 + $0xb20] sm:$0xff]
    %v388 = vld [vmem:[#allocation2 + $0xb28] sm:$0xff]
    %v389 = vld [vmem:[#allocation2 + $0xb30] sm:$0xff]
    %v390 = vld [vmem:[#allocation2 + $0xb38] sm:$0xff]
    %v391 = vld [vmem:[#allocation2 + $0xb40] sm:$0xff]
    %v392 = vld [vmem:[#allocation2 + $0xb48] sm:$0xff]
    %v393 = vld [vmem:[#allocation2 + $0xb50] sm:$0xff]
    %v394 = vld [vmem:[#allocation2 + $0xb58] sm:$0xff]
    %v395 = vld [vmem:[#allocation2 + $0xb60] sm:$0xff]
    %v396 = vld [vmem:[#allocation2 + $0xb68] sm:$0xff]
    %v397 = vld [vmem:[#allocation2 + $0xb70] sm:$0xff]
    %v398 = vld [vmem:[#allocation2 + $0xb78] sm:$0xff]
    %v399 = vld [vmem:[#allocation2 + $0xb80] sm:$0xff]
    %v400 = vld [vmem:[#allocation2 + $0xb88] sm:$0xff]
    %v401 = vld [vmem:[#allocation2 + $0xb90] sm:$0xff]
    %v402 = vld [vmem:[#allocation2 + $0xb98] sm:$0xff]
    %v403 = vld [vmem:[#allocation2 + $0xba0] sm:$0xff]
    %v404 = vld [vmem:[#allocation2 + $0xba8] sm:$0xff]
    %v405 = vld [vmem:[#allocation2 + $0xbb0] sm:$0xff]
    %v406 = vld [vmem:[#allocation2 + $0xbb8] sm:$0xff]
    %v407 = vld [vmem:[#allocation2 + $0xbc0] sm:$0xff]
    %v408 = vld [vmem:[#allocation2 + $0xbc8] sm:$0xff]
    %v409 = vld [vmem:[#allocation2 + $0xbd0] sm:$0xff]
    %v410 = vld [vmem:[#allocation2 + $0xbd8] sm:$0xff]
    %v411 = vld [vmem:[#allocation2 + $0xbe0] sm:$0xff]
    %v412 = vld [vmem:[#allocation2 + $0xbe8] sm:$0xff]
    %v413 = vld [vmem:[#allocation2 + $0xbf0] sm:$0xff]
    %v414 = vld [vmem:[#allocation2 + $0xbf8] sm:$0xff]
    %v415 = vld [vmem:[#allocation2 + $0xc00] sm:$0xff]
    %v416 = vld [vmem:[#allocation2 + $0xc08] sm:$0xff]
    %v417 = vld [vmem:[#allocation2 + $0xc10] sm:$0xff]
    %v418 = vld [vmem:[#allocation2 + $0xc18] sm:$0xff]
    %v419 = vld [vmem:[#allocation2 + $0xc20] sm:$0xff]
    %v420 = vld [vmem:[#allocation2 + $0xc28] sm:$0xff]
    %v421 = vld [vmem:[#allocation2 + $0xc30] sm:$0xff]
    %v422 = vld [vmem:[#allocation2 + $0xc38] sm:$0xff]
    %v423 = vld [vmem:[#allocation2 + $0xc40] sm:$0xff]
    %v424 = vld [vmem:[#allocation2 + $0xc48] sm:$0xff]
    %v425 = vld [vmem:[#allocation2 + $0xc50] sm:$0xff]
    %v426 = vld [vmem:[#allocation2 + $0xc58] sm:$0xff]
    %v427 = vld [vmem:[#allocation2 + $0xc60] sm:$0xff]
    %v428 = vld [vmem:[#allocation2 + $0xc68] sm:$0xff]
    %v429 = vld [vmem:[#allocation2 + $0xc70] sm:$0xff]
    %v430 = vld [vmem:[#allocation2 + $0xc78] sm:$0xff]
    %v431 = vld [vmem:[#allocation2 + $0xc80] sm:$0xff]
    %v432 = vld [vmem:[#allocation2 + $0xc88] sm:$0xff]
    %v433 = vld [vmem:[#allocation2 + $0xc90] sm:$0xff]
    %v434 = vld [vmem:[#allocation2 + $0xc98] sm:$0xff]
    %v435 = vld [vmem:[#allocation2 + $0xca0] sm:$0xff]
    %v436 = vld [vmem:[#allocation2 + $0xca8] sm:$0xff]
    %v437 = vld [vmem:[#allocation2 + $0xcb0] sm:$0xff]
    %v438 = vld [vmem:[#allocation2 + $0xcb8] sm:$0xff]
    %v439 = vld [vmem:[#allocation2 + $0xcc0] sm:$0xff]
    %v440 = vld [vmem:[#allocation2 + $0xcc8] sm:$0xff]
    %v441 = vld [vmem:[#allocation2 + $0xcd0] sm:$0xff]
    %v442 = vld [vmem:[#allocation2 + $0xcd8] sm:$0xff]
    %v443 = vld [vmem:[#allocation2 + $0xce0] sm:$0xff]
    %v444 = vld [vmem:[#allocation2 + $0xce8] sm:$0xff]
    %v445 = vld [vmem:[#allocation2 + $0xcf0] sm:$0xff]
    %v446 = vld [vmem:[#allocation2 + $0xcf8] sm:$0xff]
    %v447 = vld [vmem:[#allocation2 + $0xd00] sm:$0xff]
    %v448 = vld [vmem:[#allocation2 + $0xd08] sm:$0xff]
    %v449 = vld [vmem:[#allocation2 + $0xd10] sm:$0xff]
    %v450 = vld [vmem:[#allocation2 + $0xd18] sm:$0xff]
    %v451 = vld [vmem:[#allocation2 + $0xd20] sm:$0xff]
    %v452 = vld [vmem:[#allocation2 + $0xd28] sm:$0xff]
    %v453 = vld [vmem:[#allocation2 + $0xd30] sm:$0xff]
    %v454 = vld [vmem:[#allocation2 + $0xd38] sm:$0xff]
    %v455 = vld [vmem:[#allocation2 + $0xd40] sm:$0xff]
    %v456 = vld [vmem:[#allocation2 + $0xd48] sm:$0xff]
    %v457 = vld [vmem:[#allocation2 + $0xd50] sm:$0xff]
    %v458 = vld [vmem:[#allocation2 + $0xd58] sm:$0xff]
    %v459 = vld [vmem:[#allocation2 + $0xd60] sm:$0xff]
    %v460 = vld [vmem:[#allocation2 + $0xd68] sm:$0xff]
    %v461 = vld [vmem:[#allocation2 + $0xd70] sm:$0xff]
    %v462 = vld [vmem:[#allocation2 + $0xd78] sm:$0xff]
    %v463 = vld [vmem:[#allocation2 + $0xd80] sm:$0xff]
    %v464 = vld [vmem:[#allocation2 + $0xd88] sm:$0xff]
    %v465 = vld [vmem:[#allocation2 + $0xd90] sm:$0xff]
    %v466 = vld [vmem:[#allocation2 + $0xd98] sm:$0xff]
    %v467 = vld [vmem:[#allocation2 + $0xda0] sm:$0xff]
    %v468 = vld [vmem:[#allocation2 + $0xda8] sm:$0xff]
    %v469 = vld [vmem:[#allocation2 + $0xdb0] sm:$0xff]
    %v470 = vld [vmem:[#allocation2 + $0xdb8] sm:$0xff]
    %v471 = vld [vmem:[#allocation2 + $0xdc0] sm:$0xff]
    %v472 = vld [vmem:[#allocation2 + $0xdc8] sm:$0xff]
    %v473 = vld [vmem:[#allocation2 + $0xdd0] sm:$0xff]
    %v474 = vld [vmem:[#allocation2 + $0xdd8] sm:$0xff]
    %v475 = vld [vmem:[#allocation2 + $0xde0] sm:$0xff]
    %v476 = vld [vmem:[#allocation2 + $0xde8] sm:$0xff]
    %v477 = vld [vmem:[#allocation2 + $0xdf0] sm:$0xff]
    %v478 = vld [vmem:[#allocation2 + $0xdf8] sm:$0xff]
    %v479 = vld [vmem:[#allocation2 + $0xe00] sm:$0xff]
    %v480 = vld [vmem:[#allocation2 + $0xe08] sm:$0xff]
    %v481 = vld [vmem:[#allocation2 + $0xe10] sm:$0xff]
    %v482 = vld [vmem:[#allocation2 + $0xe18] sm:$0xff]
    %v483 = vld [vmem:[#allocation2 + $0xe20] sm:$0xff]
    %v484 = vld [vmem:[#allocation2 + $0xe28] sm:$0xff]
    %v485 = vld [vmem:[#allocation2 + $0xe30] sm:$0xff]
    %v486 = vld [vmem:[#allocation2 + $0xe38] sm:$0xff]
    %v487 = vld [vmem:[#allocation2 + $0xe40] sm:$0xff]
    %v488 = vld [vmem:[#allocation2 + $0xe48] sm:$0xff]
    %v489 = vld [vmem:[#allocation2 + $0xe50] sm:$0xff]
    %v490 = vld [vmem:[#allocation2 + $0xe58] sm:$0xff]
    %v491 = vld [vmem:[#allocation2 + $0xe60] sm:$0xff]
    %v492 = vld [vmem:[#allocation2 + $0xe68] sm:$0xff]
    %v493 = vld [vmem:[#allocation2 + $0xe70] sm:$0xff]
    %v494 = vld [vmem:[#allocation2 + $0xe78] sm:$0xff]
    %v495 = vld [vmem:[#allocation2 + $0xe80] sm:$0xff]
    %v496 = vld [vmem:[#allocation2 + $0xe88] sm:$0xff]
    %v497 = vld [vmem:[#allocation2 + $0xe90] sm:$0xff]
    %v498 = vld [vmem:[#allocation2 + $0xe98] sm:$0xff]
    %v499 = vld [vmem:[#allocation2 + $0xea0] sm:$0xff]
    %v500 = vld [vmem:[#allocation2 + $0xea8] sm:$0xff]
    %v501 = vld [vmem:[#allocation2 + $0xeb0] sm:$0xff]
    %v502 = vld [vmem:[#allocation2 + $0xeb8] sm:$0xff]
    %v503 = vld [vmem:[#allocation2 + $0xec0] sm:$0xff]
    %v504 = vld [vmem:[#allocation2 + $0xec8] sm:$0xff]
    %v505 = vld [vmem:[#allocation2 + $0xed0] sm:$0xff]
    %v506 = vld [vmem:[#allocation2 + $0xed8] sm:$0xff]
    %v507 = vld [vmem:[#allocation2 + $0xee0] sm:$0xff]
    %v508 = vld [vmem:[#allocation2 + $0xee8] sm:$0xff]
    %v509 = vld [vmem:[#allocation2 + $0xef0] sm:$0xff]
    %v510 = vld [vmem:[#allocation2 + $0xef8] sm:$0xff]
    %v511 = vld [vmem:[#allocation2 + $0xf00] sm:$0xff]
    %v512 = vld [vmem:[#allocation2 + $0xf08] sm:$0xff]
    %v513 = vld [vmem:[#allocation2 + $0xf10] sm:$0xff]
    %v514 = vld [vmem:[#allocation2 + $0xf18] sm:$0xff]
    %v515 = vld [vmem:[#allocation2 + $0xf20] sm:$0xff]
    %v516 = vld [vmem:[#allocation2 + $0xf28] sm:$0xff]
    %v517 = vld [vmem:[#allocation2 + $0xf30] sm:$0xff]
    %v518 = vld [vmem:[#allocation2 + $0xf38] sm:$0xff]
    %v519 = vld [vmem:[#allocation2 + $0xf40] sm:$0xff]
    %v520 = vld [vmem:[#allocation2 + $0xf48] sm:$0xff]
    %v521 = vld [vmem:[#allocation2 + $0xf50] sm:$0xff]
    %v522 = vld [vmem:[#allocation2 + $0xf58] sm:$0xff]
    %v523 = vld [vmem:[#allocation2 + $0xf60] sm:$0xff]
    %v524 = vld [vmem:[#allocation2 + $0xf68] sm:$0xff]
    %v525 = vld [vmem:[#allocation2 + $0xf70] sm:$0xff]
    %v526 = vld [vmem:[#allocation2 + $0xf78] sm:$0xff]
    %v527 = vld [vmem:[#allocation2 + $0xf80] sm:$0xff]
    %v528 = vld [vmem:[#allocation2 + $0xf88] sm:$0xff]
    %v529 = vld [vmem:[#allocation2 + $0xf90] sm:$0xff]
    %v530 = vld [vmem:[#allocation2 + $0xf98] sm:$0xff]
    %v531 = vld [vmem:[#allocation2 + $0xfa0] sm:$0xff]
    %v532 = vld [vmem:[#allocation2 + $0xfa8] sm:$0xff]
    %v533 = vld [vmem:[#allocation2 + $0xfb0] sm:$0xff]
    %v534 = vld [vmem:[#allocation2 + $0xfb8] sm:$0xff]
    %v535 = vld [vmem:[#allocation2 + $0xfc0] sm:$0xff]
    %v536 = vld [vmem:[#allocation2 + $0xfc8] sm:$0xff]
    %v537 = vld [vmem:[#allocation2 + $0xfd0] sm:$0xff]
    %v538 = vld [vmem:[#allocation2 + $0xfd8] sm:$0xff]
    %v539 = vld [vmem:[#allocation2 + $0xfe0] sm:$0xff]
    %v540 = vld [vmem:[#allocation2 + $0xfe8] sm:$0xff]
    %v541 = vld [vmem:[#allocation2 + $0xff0] sm:$0xff]
    %v542 = vld [vmem:[#allocation2 + $0xff8] sm:$0xff]
    %v543 = vld [vmem:[#allocation2 + $0x1000] sm:$0xff]
    %v544 = vld [vmem:[#allocation2 + $0x1008] sm:$0xff]
    %v545 = vld [vmem:[#allocation2 + $0x1010] sm:$0xff]
    %v546 = vld [vmem:[#allocation2 + $0x1018] sm:$0xff]
    %v547 = vld [vmem:[#allocation2 + $0x1020] sm:$0xff]
    %v548 = vld [vmem:[#allocation2 + $0x1028] sm:$0xff]
    %v549 = vld [vmem:[#allocation2 + $0x1030] sm:$0xff]
    %v550 = vld [vmem:[#allocation2 + $0x1038] sm:$0xff]
    %v551 = vld [vmem:[#allocation2 + $0x1040] sm:$0xff]
    %v552 = vld [vmem:[#allocation2 + $0x1048] sm:$0xff]
    %v553 = vld [vmem:[#allocation2 + $0x1050] sm:$0xff]
    %v554 = vld [vmem:[#allocation2 + $0x1058] sm:$0xff]
    %v555 = vld [vmem:[#allocation2 + $0x1060] sm:$0xff]
    %v556 = vld [vmem:[#allocation2 + $0x1068] sm:$0xff]
    %v557 = vld [vmem:[#allocation2 + $0x1070] sm:$0xff]
    %v558 = vld [vmem:[#allocation2 + $0x1078] sm:$0xff]
    %v559 = vld [vmem:[#allocation2 + $0x1080] sm:$0xff]
    %v560 = vld [vmem:[#allocation2 + $0x1088] sm:$0xff]
    %v561 = vld [vmem:[#allocation2 + $0x1090] sm:$0xff]
    %v562 = vld [vmem:[#allocation2 + $0x1098] sm:$0xff]
    %v563 = vld [vmem:[#allocation2 + $0x10a0] sm:$0xff]
    %v564 = vld [vmem:[#allocation2 + $0x10a8] sm:$0xff]
    %v565 = vld [vmem:[#allocation2 + $0x10b0] sm:$0xff]
    %v566 = vld [vmem:[#allocation2 + $0x10b8] sm:$0xff]
    %v567 = vld [vmem:[#allocation2 + $0x10c0] sm:$0xff]
    %v568 = vld [vmem:[#allocation2 + $0x10c8] sm:$0xff]
    %v569 = vld [vmem:[#allocation2 + $0x10d0] sm:$0xff]
    %v570 = vld [vmem:[#allocation2 + $0x10d8] sm:$0xff]
    %v571 = vld [vmem:[#allocation2 + $0x10e0] sm:$0xff]
    %v572 = vld [vmem:[#allocation2 + $0x10e8] sm:$0xff]
    %v573 = vld [vmem:[#allocation2 + $0x10f0] sm:$0xff]
    %v574 = vld [vmem:[#allocation2 + $0x10f8] sm:$0xff]
    %v575 = vld [vmem:[#allocation2 + $0x1100] sm:$0xff]
    %v576 = vld [vmem:[#allocation2 + $0x1108] sm:$0xff]
    %v577 = vld [vmem:[#allocation2 + $0x1110] sm:$0xff]
    %v578 = vld [vmem:[#allocation2 + $0x1118] sm:$0xff]
    %v579 = vld [vmem:[#allocation2 + $0x1120] sm:$0xff]
    %v580 = vld [vmem:[#allocation2 + $0x1128] sm:$0xff]
    %v581 = vld [vmem:[#allocation2 + $0x1130] sm:$0xff]
    %v582 = vld [vmem:[#allocation2 + $0x1138] sm:$0xff]
    %v583 = vld [vmem:[#allocation2 + $0x1140] sm:$0xff]
    %v584 = vld [vmem:[#allocation2 + $0x1148] sm:$0xff]
    %v585 = vld [vmem:[#allocation2 + $0x1150] sm:$0xff]
    %v586 = vld [vmem:[#allocation2 + $0x1158] sm:$0xff]
    %v587 = vld [vmem:[#allocation2 + $0x1160] sm:$0xff]
    %v588 = vld [vmem:[#allocation2 + $0x1168] sm:$0xff]
    %v589 = vld [vmem:[#allocation2 + $0x1170] sm:$0xff]
    %v590 = vld [vmem:[#allocation2 + $0x1178] sm:$0xff]
    %v591 = vld [vmem:[#allocation2 + $0x1180] sm:$0xff]
    %v592 = vld [vmem:[#allocation2 + $0x1188] sm:$0xff]
    %v593 = vld [vmem:[#allocation2 + $0x1190] sm:$0xff]
    %v594 = vld [vmem:[#allocation2 + $0x1198] sm:$0xff]
    %v595 = vld [vmem:[#allocation2 + $0x11a0] sm:$0xff]
    %v596 = vld [vmem:[#allocation2 + $0x11a8] sm:$0xff]
    %v597 = vld [vmem:[#allocation2 + $0x11b0] sm:$0xff]
    %v598 = vld [vmem:[#allocation2 + $0x11b8] sm:$0xff]
    %v599 = vld [vmem:[#allocation2 + $0x11c0] sm:$0xff]
    %v600 = vld [vmem:[#allocation2 + $0x11c8] sm:$0xff]
    %v601 = vld [vmem:[#allocation2 + $0x11d0] sm:$0xff]
    %v602 = vld [vmem:[#allocation2 + $0x11d8] sm:$0xff]
    %v603 = vld [vmem:[#allocation2 + $0x11e0] sm:$0xff]
    %v604 = vld [vmem:[#allocation2 + $0x11e8] sm:$0xff]
    %v605 = vld [vmem:[#allocation2 + $0x11f0] sm:$0xff]
    %v606 = vld [vmem:[#allocation2 + $0x11f8] sm:$0xff]
    %v607 = vld [vmem:[#allocation2 + $0x1200] sm:$0xff]
    %v608 = vld [vmem:[#allocation2 + $0x1208] sm:$0xff]
    %v609 = vld [vmem:[#allocation2 + $0x1210] sm:$0xff]
    %v610 = vld [vmem:[#allocation2 + $0x1218] sm:$0xff]
    %v611 = vld [vmem:[#allocation2 + $0x1220] sm:$0xff]
    %v612 = vld [vmem:[#allocation2 + $0x1228] sm:$0xff]
    %v613 = vld [vmem:[#allocation2 + $0x1230] sm:$0xff]
    %v614 = vld [vmem:[#allocation2 + $0x1238] sm:$0xff]
    %v615 = vld [vmem:[#allocation2 + $0x1240] sm:$0xff]
    %v616 = vld [vmem:[#allocation2 + $0x1248] sm:$0xff]
    %v617 = vld [vmem:[#allocation2 + $0x1250] sm:$0xff]
    %v618 = vld [vmem:[#allocation2 + $0x1258] sm:$0xff]
    %v619 = vld [vmem:[#allocation2 + $0x1260] sm:$0xff]
    %v620 = vld [vmem:[#allocation2 + $0x1268] sm:$0xff]
    %v621 = vld [vmem:[#allocation2 + $0x1270] sm:$0xff]
    %v622 = vld [vmem:[#allocation2 + $0x1278] sm:$0xff]
    %v623 = vld [vmem:[#allocation2 + $0x1280] sm:$0xff]
    %v624 = vld [vmem:[#allocation2 + $0x1288] sm:$0xff]
    %v625 = vld [vmem:[#allocation2 + $0x1290] sm:$0xff]
    %v626 = vld [vmem:[#allocation2 + $0x1298] sm:$0xff]
    %v627 = vld [vmem:[#allocation2 + $0x12a0] sm:$0xff]
    %v628 = vld [vmem:[#allocation2 + $0x12a8] sm:$0xff]
    %v629 = vld [vmem:[#allocation2 + $0x12b0] sm:$0xff]
    %v630 = vld [vmem:[#allocation2 + $0x12b8] sm:$0xff]
    %v631 = vld [vmem:[#allocation2 + $0x12c0] sm:$0xff]
    %v632 = vld [vmem:[#allocation2 + $0x12c8] sm:$0xff]
    %v633 = vld [vmem:[#allocation2 + $0x12d0] sm:$0xff]
    %v634 = vld [vmem:[#allocation2 + $0x12d8] sm:$0xff]
    %v635 = vld [vmem:[#allocation2 + $0x12e0] sm:$0xff]
    %v636 = vld [vmem:[#allocation2 + $0x12e8] sm:$0xff]
    %v637 = vld [vmem:[#allocation2 + $0x12f0] sm:$0xff]
    %v638 = vld [vmem:[#allocation2 + $0x12f8] sm:$0xff]
    %v639 = vld [vmem:[#allocation2 + $0x1300] sm:$0xff]
    %v640 = vld [vmem:[#allocation2 + $0x1308] sm:$0xff]
    %v641 = vld [vmem:[#allocation2 + $0x1310] sm:$0xff]
    %v642 = vld [vmem:[#allocation2 + $0x1318] sm:$0xff]
    %v643 = vld [vmem:[#allocation2 + $0x1320] sm:$0xff]
    %v644 = vld [vmem:[#allocation2 + $0x1328] sm:$0xff]
    %v645 = vld [vmem:[#allocation2 + $0x1330] sm:$0xff]
    %v646 = vld [vmem:[#allocation2 + $0x1338] sm:$0xff]
    %v647 = vld [vmem:[#allocation2 + $0x1340] sm:$0xff]
    %v648 = vld [vmem:[#allocation2 + $0x1348] sm:$0xff]
    %v649 = vld [vmem:[#allocation2 + $0x1350] sm:$0xff]
    %v650 = vld [vmem:[#allocation2 + $0x1358] sm:$0xff]
    %v651 = vld [vmem:[#allocation2 + $0x1360] sm:$0xff]
    %v652 = vld [vmem:[#allocation2 + $0x1368] sm:$0xff]
    %v653 = vld [vmem:[#allocation2 + $0x1370] sm:$0xff]
    %v654 = vld [vmem:[#allocation2 + $0x1378] sm:$0xff]
    %v655 = vld [vmem:[#allocation2 + $0x1380] sm:$0xff]
    %v656 = vld [vmem:[#allocation2 + $0x1388] sm:$0xff]
    %v657 = vld [vmem:[#allocation2 + $0x1390] sm:$0xff]
    %v658 = vld [vmem:[#allocation2 + $0x1398] sm:$0xff]
    %v659 = vld [vmem:[#allocation2 + $0x13a0] sm:$0xff]
    %v660 = vld [vmem:[#allocation2 + $0x13a8] sm:$0xff]
    %v661 = vld [vmem:[#allocation2 + $0x13b0] sm:$0xff]
    %v662 = vld [vmem:[#allocation2 + $0x13b8] sm:$0xff]
    %v663 = vld [vmem:[#allocation2 + $0x13c0] sm:$0xff]
    %v664 = vld [vmem:[#allocation2 + $0x13c8] sm:$0xff]
    %v665 = vld [vmem:[#allocation2 + $0x13d0] sm:$0xff]
    %v666 = vld [vmem:[#allocation2 + $0x13d8] sm:$0xff]
    %v667 = vld [vmem:[#allocation2 + $0x13e0] sm:$0xff]
    %v668 = vld [vmem:[#allocation2 + $0x13e8] sm:$0xff]
    %v669 = vld [vmem:[#allocation2 + $0x13f0] sm:$0xff]
    %v670 = vld [vmem:[#allocation2 + $0x13f8] sm:$0xff]
    %v671 = vld [vmem:[#allocation2 + $0x1400] sm:$0xff]
    %v672 = vld [vmem:[#allocation2 + $0x1408] sm:$0xff]
    %v673 = vld [vmem:[#allocation2 + $0x1410] sm:$0xff]
    %v674 = vld [vmem:[#allocation2 + $0x1418] sm:$0xff]
    %v675 = vld [vmem:[#allocation2 + $0x1420] sm:$0xff]
    %v676 = vld [vmem:[#allocation2 + $0x1428] sm:$0xff]
    %v677 = vld [vmem:[#allocation2 + $0x1430] sm:$0xff]
    %v678 = vld [vmem:[#allocation2 + $0x1438] sm:$0xff]
    %v679 = vld [vmem:[#allocation2 + $0x1440] sm:$0xff]
    %v680 = vld [vmem:[#allocation2 + $0x1448] sm:$0xff]
    %v681 = vld [vmem:[#allocation2 + $0x1450] sm:$0xff]
    %v682 = vld [vmem:[#allocation2 + $0x1458] sm:$0xff]
    %v683 = vld [vmem:[#allocation2 + $0x1460] sm:$0xff]
    %v684 = vld [vmem:[#allocation2 + $0x1468] sm:$0xff]
    %v685 = vld [vmem:[#allocation2 + $0x1470] sm:$0xff]
    %v686 = vld [vmem:[#allocation2 + $0x1478] sm:$0xff]
    %v687 = vld [vmem:[#allocation2 + $0x1480] sm:$0xff]
    %v688 = vld [vmem:[#allocation2 + $0x1488] sm:$0xff]
    %v689 = vld [vmem:[#allocation2 + $0x1490] sm:$0xff]
    %v690 = vld [vmem:[#allocation2 + $0x1498] sm:$0xff]
    %v691 = vld [vmem:[#allocation2 + $0x14a0] sm:$0xff]
    %v692 = vld [vmem:[#allocation2 + $0x14a8] sm:$0xff]
    %v693 = vld [vmem:[#allocation2 + $0x14b0] sm:$0xff]
    %v694 = vld [vmem:[#allocation2 + $0x14b8] sm:$0xff]
    %v695 = vld [vmem:[#allocation2 + $0x14c0] sm:$0xff]
    %v696 = vld [vmem:[#allocation2 + $0x14c8] sm:$0xff]
    %v697 = vld [vmem:[#allocation2 + $0x14d0] sm:$0xff]
    %v698 = vld [vmem:[#allocation2 + $0x14d8] sm:$0xff]
    %v699 = vld [vmem:[#allocation2 + $0x14e0] sm:$0xff]
    %v700 = vld [vmem:[#allocation2 + $0x14e8] sm:$0xff]
    %v701 = vld [vmem:[#allocation2 + $0x14f0] sm:$0xff]
    %v702 = vld [vmem:[#allocation2 + $0x14f8] sm:$0xff]
    %v703 = vld [vmem:[#allocation2 + $0x1500] sm:$0xff]
    %v704 = vld [vmem:[#allocation2 + $0x1508] sm:$0xff]
    %v705 = vld [vmem:[#allocation2 + $0x1510] sm:$0xff]
    %v706 = vld [vmem:[#allocation2 + $0x1518] sm:$0xff]
    %v707 = vld [vmem:[#allocation2 + $0x1520] sm:$0xff]
    %v708 = vld [vmem:[#allocation2 + $0x1528] sm:$0xff]
    %v709 = vld [vmem:[#allocation2 + $0x1530] sm:$0xff]
    %v710 = vld [vmem:[#allocation2 + $0x1538] sm:$0xff]
    %v711 = vld [vmem:[#allocation2 + $0x1540] sm:$0xff]
    %v712 = vld [vmem:[#allocation2 + $0x1548] sm:$0xff]
    %v713 = vld [vmem:[#allocation2 + $0x1550] sm:$0xff]
    %v714 = vld [vmem:[#allocation2 + $0x1558] sm:$0xff]
    %v715 = vld [vmem:[#allocation2 + $0x1560] sm:$0xff]
    %v716 = vld [vmem:[#allocation2 + $0x1568] sm:$0xff]
    %v717 = vld [vmem:[#allocation2 + $0x1570] sm:$0xff]
    %v718 = vld [vmem:[#allocation2 + $0x1578] sm:$0xff]
    %v719 = vld [vmem:[#allocation2 + $0x1580] sm:$0xff]
    %v720 = vld [vmem:[#allocation2 + $0x1588] sm:$0xff]
    %v721 = vld [vmem:[#allocation2 + $0x1590] sm:$0xff]
    %v722 = vld [vmem:[#allocation2 + $0x1598] sm:$0xff]
    %v723 = vld [vmem:[#allocation2 + $0x15a0] sm:$0xff]
    %v724 = vld [vmem:[#allocation2 + $0x15a8] sm:$0xff]
    %v725 = vld [vmem:[#allocation2 + $0x15b0] sm:$0xff]
    %v726 = vld [vmem:[#allocation2 + $0x15b8] sm:$0xff]
    %v727 = vld [vmem:[#allocation2 + $0x15c0] sm:$0xff]
    %v728 = vld [vmem:[#allocation2 + $0x15c8] sm:$0xff]
    %v729 = vld [vmem:[#allocation2 + $0x15d0] sm:$0xff]
    %v730 = vld [vmem:[#allocation2 + $0x15d8] sm:$0xff]
    %v731 = vld [vmem:[#allocation2 + $0x15e0] sm:$0xff]
    %v732 = vld [vmem:[#allocation2 + $0x15e8] sm:$0xff]
    %v733 = vld [vmem:[#allocation2 + $0x15f0] sm:$0xff]
    %v734 = vld [vmem:[#allocation2 + $0x15f8] sm:$0xff]
    %v735 = vld [vmem:[#allocation2 + $0x1600] sm:$0xff]
    %v736 = vld [vmem:[#allocation2 + $0x1608] sm:$0xff]
    %v737 = vld [vmem:[#allocation2 + $0x1610] sm:$0xff]
    %v738 = vld [vmem:[#allocation2 + $0x1618] sm:$0xff]
    %v739 = vld [vmem:[#allocation2 + $0x1620] sm:$0xff]
    %v740 = vld [vmem:[#allocation2 + $0x1628] sm:$0xff]
    %v741 = vld [vmem:[#allocation2 + $0x1630] sm:$0xff]
    %v742 = vld [vmem:[#allocation2 + $0x1638] sm:$0xff]
    %v743 = vld [vmem:[#allocation2 + $0x1640] sm:$0xff]
    %v744 = vld [vmem:[#allocation2 + $0x1648] sm:$0xff]
    %v745 = vld [vmem:[#allocation2 + $0x1650] sm:$0xff]
    %v746 = vld [vmem:[#allocation2 + $0x1658] sm:$0xff]
    %v747 = vld [vmem:[#allocation2 + $0x1660] sm:$0xff]
    %v748 = vld [vmem:[#allocation2 + $0x1668] sm:$0xff]
    %v749 = vld [vmem:[#allocation2 + $0x1670] sm:$0xff]
    %v750 = vld [vmem:[#allocation2 + $0x1678] sm:$0xff]
    %v751 = vld [vmem:[#allocation2 + $0x1680] sm:$0xff]
    %v752 = vld [vmem:[#allocation2 + $0x1688] sm:$0xff]
    %v753 = vld [vmem:[#allocation2 + $0x1690] sm:$0xff]
    %v754 = vld [vmem:[#allocation2 + $0x1698] sm:$0xff]
    %v755 = vld [vmem:[#allocation2 + $0x16a0] sm:$0xff]
    %v756 = vld [vmem:[#allocation2 + $0x16a8] sm:$0xff]
    %v757 = vld [vmem:[#allocation2 + $0x16b0] sm:$0xff]
    %v758 = vld [vmem:[#allocation2 + $0x16b8] sm:$0xff]
    %v759 = vld [vmem:[#allocation2 + $0x16c0] sm:$0xff]
    %v760 = vld [vmem:[#allocation2 + $0x16c8] sm:$0xff]
    %v761 = vld [vmem:[#allocation2 + $0x16d0] sm:$0xff]
    %v762 = vld [vmem:[%s1] sm:$0xff]
    %v763 = vld [vmem:[%s1 + $0x8] sm:$0xff]
    %v764 = vld [vmem:[%s1 + $0x10] sm:$0xff]
    %v765 = vld [vmem:[%s1 + $0x18] sm:$0xff]
    %v766 = vld [vmem:[%s1 + $0x20] sm:$0xff]
    %v767 = vld [vmem:[%s1 + $0x28] sm:$0xff]
    %v768 = vld [vmem:[%s1 + $0x30] sm:$0xff]
    %v769 = vld [vmem:[%s1 + $0x38] sm:$0xff]
    %v770 = vld [vmem:[%s1 + $0x40] sm:$0xff]
    %v771 = vld [vmem:[%s1 + $0x48] sm:$0xff]
    %v772 = vld [vmem:[%s1 + $0x50] sm:$0xff]
    %v773 = vld [vmem:[%s1 + $0x58] sm:$0xff]
    %v774 = vld [vmem:[%s1 + $0x60] sm:$0xff]
    %v775 = vld [vmem:[%s1 + $0x68] sm:$0xff]
    %v776 = vld [vmem:[%s1 + $0x70] sm:$0xff]
    %v777 = vld [vmem:[%s1 + $0x78] sm:$0xff]
    %v778 = vld [vmem:[%s1 + $0x80] sm:$0xff]
    %v779 = vld [vmem:[%s1 + $0x88] sm:$0xff]
    %v780 = vld [vmem:[%s1 + $0x90] sm:$0xff]
    %v781 = vld [vmem:[%s1 + $0x98] sm:$0xff]
    %v782 = vld [vmem:[%s1 + $0xa0] sm:$0xff]
    %v783 = vld [vmem:[%s1 + $0xa8] sm:$0xff]
    %v784 = vld [vmem:[%s1 + $0xb0] sm:$0xff]
    %v785 = vld [vmem:[%s1 + $0xb8] sm:$0xff]
    %v786 = vld [vmem:[%s1 + $0xc0] sm:$0xff]
    %v787 = vld [vmem:[%s1 + $0xc8] sm:$0xff]
    %v788 = vld [vmem:[%s1 + $0xd0] sm:$0xff]
    %v789 = vld [vmem:[%s1 + $0xd8] sm:$0xff]
    %v790 = vld [vmem:[%s1 + $0xe0] sm:$0xff]
    %v791 = vld [vmem:[%s1 + $0xe8] sm:$0xff]
    %v792 = vld [vmem:[%s1 + $0xf0] sm:$0xff]
    %v793 = vld [vmem:[%s1 + $0xf8] sm:$0xff]
    %v794 = vld [vmem:[%s1 + $0x100] sm:$0xff]
    %v795 = vld [vmem:[%s1 + $0x108] sm:$0xff]
    %v796 = vld [vmem:[%s1 + $0x110] sm:$0xff]
    %v797 = vld [vmem:[%s1 + $0x118] sm:$0xff]
    %v798 = vld [vmem:[%s1 + $0x120] sm:$0xff]
    %v799 = vld [vmem:[%s1 + $0x128] sm:$0xff]
    %v800 = vld [vmem:[%s1 + $0x130] sm:$0xff]
    %v801 = vld [vmem:[%s1 + $0x138] sm:$0xff]
    %v802 = vld [vmem:[%s1 + $0x140] sm:$0xff]
    %v803 = vld [vmem:[%s1 + $0x148] sm:$0xff]
    %v804 = vld [vmem:[%s1 + $0x150] sm:$0xff]
    %v805 = vld [vmem:[%s1 + $0x158] sm:$0xff]
    %v806 = vld [vmem:[%s1 + $0x160] sm:$0xff]
    %v807 = vld [vmem:[%s1 + $0x168] sm:$0xff]
    %v808 = vld [vmem:[%s1 + $0x170] sm:$0xff]
    %v809 = vld [vmem:[%s1 + $0x178] sm:$0xff]
    %v810 = vld [vmem:[%s1 + $0x180] sm:$0xff]
    %v811 = vld [vmem:[%s1 + $0x188] sm:$0xff]
    %v812 = vld [vmem:[%s1 + $0x190] sm:$0xff]
    %v813 = vld [vmem:[%s1 + $0x198] sm:$0xff]
    %v814 = vld [vmem:[%s1 + $0x1a0] sm:$0xff]
    %v815 = vld [vmem:[%s1 + $0x1a8] sm:$0xff]
    %v816 = vld [vmem:[%s1 + $0x1b0] sm:$0xff]
    %v817 = vld [vmem:[%s1 + $0x1b8] sm:$0xff]
    %v818 = vld [vmem:[%s1 + $0x1c0] sm:$0xff]
    %v819 = vld [vmem:[%s1 + $0x1c8] sm:$0xff]
    %v820 = vld [vmem:[%s1 + $0x1d0] sm:$0xff]
    %v821 = vld [vmem:[%s1 + $0x1d8] sm:$0xff]
    %v822 = vld [vmem:[%s1 + $0x1e0] sm:$0xff]
    %v823 = vld [vmem:[%s1 + $0x1e8] sm:$0xff]
    %v824 = vld [vmem:[%s1 + $0x1f0] sm:$0xff]
    %v825 = vld [vmem:[%s1 + $0x1f8] sm:$0xff]
    %v826 = vld [vmem:[%s1 + $0x200] sm:$0xff]
    %v827 = vld [vmem:[%s1 + $0x208] sm:$0xff]
    %v828 = vld [vmem:[%s1 + $0x210] sm:$0xff]
    %v829 = vld [vmem:[%s1 + $0x218] sm:$0xff]
    %v830 = vld [vmem:[%s1 + $0x220] sm:$0xff]
    %v831 = vld [vmem:[%s1 + $0x228] sm:$0xff]
    %v832 = vld [vmem:[%s1 + $0x230] sm:$0xff]
    %v833 = vld [vmem:[%s1 + $0x238] sm:$0xff]
    %v834 = vld [vmem:[%s1 + $0x240] sm:$0xff]
    %v835 = vld [vmem:[%s1 + $0x248] sm:$0xff]
    %v836 = vld [vmem:[%s1 + $0x250] sm:$0xff]
    %v837 = vld [vmem:[%s1 + $0x258] sm:$0xff]
    %v838 = vld [vmem:[%s1 + $0x260] sm:$0xff]
    %v839 = vld [vmem:[%s1 + $0x268] sm:$0xff]
    %v840 = vld [vmem:[%s1 + $0x270] sm:$0xff]
    %v841 = vld [vmem:[%s1 + $0x278] sm:$0xff]
    %v842 = vld [vmem:[%s1 + $0x280] sm:$0xff]
    %v843 = vld [vmem:[%s1 + $0x288] sm:$0xff]
    %v844 = vld [vmem:[%s1 + $0x290] sm:$0xff]
    %v845 = vld [vmem:[%s1 + $0x298] sm:$0xff]
    %v846 = vld [vmem:[%s1 + $0x2a0] sm:$0xff]
    %v847 = vld [vmem:[%s1 + $0x2a8] sm:$0xff]
    %v848 = vld [vmem:[%s1 + $0x2b0] sm:$0xff]
    %v849 = vld [vmem:[%s1 + $0x2b8] sm:$0xff]
    %v850 = vld [vmem:[%s1 + $0x2c0] sm:$0xff]
    %v851 = vld [vmem:[%s1 + $0x2c8] sm:$0xff]
    %v852 = vld [vmem:[%s1 + $0x2d0] sm:$0xff]
    %v853 = vld [vmem:[%s1 + $0x2d8] sm:$0xff]
    %v854 = vld [vmem:[%s1 + $0x2e0] sm:$0xff]
    %v855 = vld [vmem:[%s1 + $0x2e8] sm:$0xff]
    %v856 = vld [vmem:[%s1 + $0x2f0] sm:$0xff]
    %v857 = vld [vmem:[%s1 + $0x2f8] sm:$0xff]
    %v858 = vld [vmem:[%s1 + $0x300] sm:$0xff]
    %v859 = vld [vmem:[%s1 + $0x308] sm:$0xff]
    %v860 = vld [vmem:[%s1 + $0x310] sm:$0xff]
    %v861 = vld [vmem:[%s1 + $0x318] sm:$0xff]
    %v862 = vld [vmem:[%s1 + $0x320] sm:$0xff]
    %v863 = vld [vmem:[%s1 + $0x328] sm:$0xff]
    %v864 = vld [vmem:[%s1 + $0x330] sm:$0xff]
    %v865 = vld [vmem:[%s1 + $0x338] sm:$0xff]
    %v866 = vld [vmem:[%s1 + $0x340] sm:$0xff]
    %v867 = vld [vmem:[%s1 + $0x348] sm:$0xff]
    %v868 = vld [vmem:[%s1 + $0x350] sm:$0xff]
    %v869 = vld [vmem:[%s1 + $0x358] sm:$0xff]
    %v870 = vld [vmem:[%s1 + $0x360] sm:$0xff]
    %v871 = vld [vmem:[%s1 + $0x368] sm:$0xff]
    %v872 = vld [vmem:[%s1 + $0x370] sm:$0xff]
    %v873 = vld [vmem:[%s1 + $0x378] sm:$0xff]
    %v874 = vld [vmem:[%s1 + $0x380] sm:$0xff]
    %v875 = vld [vmem:[%s1 + $0x388] sm:$0xff]
    %v876 = vld [vmem:[%s1 + $0x390] sm:$0xff]
    %v877 = vld [vmem:[%s1 + $0x398] sm:$0xff]
    %v878 = vld [vmem:[%s1 + $0x3a0] sm:$0xff]
    %v879 = vld [vmem:[%s1 + $0x3a8] sm:$0xff]
    %v880 = vld [vmem:[%s1 + $0x3b0] sm:$0xff]
    %v881 = vld [vmem:[%s1 + $0x3b8] sm:$0xff]
    %v882 = vld [vmem:[%s1 + $0x3c0] sm:$0xff]
    %v883 = vld [vmem:[%s1 + $0x3c8] sm:$0xff]
    %v884 = vld [vmem:[%s1 + $0x3d0] sm:$0xff]
    %v885 = vld [vmem:[%s1 + $0x3d8] sm:$0xff]
    %v886 = vld [vmem:[%s1 + $0x3e0] sm:$0xff]
    %v887 = vld [vmem:[%s1 + $0x3e8] sm:$0xff]
    %v888 = vld [vmem:[%s1 + $0x3f0] sm:$0xff]
    %v889 = vld [vmem:[%s1 + $0x3f8] sm:$0xff]
    %v890 = vld [vmem:[%s1 + $0x400] sm:$0xff]
    %v891 = vld [vmem:[%s1 + $0x408] sm:$0xff]
    %v892 = vld [vmem:[%s1 + $0x410] sm:$0xff]
    %v893 = vld [vmem:[%s1 + $0x418] sm:$0xff]
    %v894 = vld [vmem:[%s1 + $0x420] sm:$0xff]
    %v895 = vld [vmem:[%s1 + $0x428] sm:$0xff]
    %v896 = vld [vmem:[%s1 + $0x430] sm:$0xff]
    %v897 = vld [vmem:[%s1 + $0x438] sm:$0xff]
    %v898 = vld [vmem:[%s1 + $0x440] sm:$0xff]
    %v899 = vld [vmem:[%s1 + $0x448] sm:$0xff]
    %v900 = vld [vmem:[%s1 + $0x450] sm:$0xff]
    %v901 = vld [vmem:[%s1 + $0x458] sm:$0xff]
    %v902 = vld [vmem:[%s1 + $0x460] sm:$0xff]
    %v903 = vld [vmem:[%s1 + $0x468] sm:$0xff]
    %v904 = vld [vmem:[%s1 + $0x470] sm:$0xff]
    %v905 = vld [vmem:[%s1 + $0x478] sm:$0xff]
    %v906 = vld [vmem:[%s1 + $0x480] sm:$0xff]
    %v907 = vld [vmem:[%s1 + $0x488] sm:$0xff]
    %v908 = vld [vmem:[%s1 + $0x490] sm:$0xff]
    %v909 = vld [vmem:[%s1 + $0x498] sm:$0xff]
    %v910 = vld [vmem:[%s1 + $0x4a0] sm:$0xff]
    %v911 = vld [vmem:[%s1 + $0x4a8] sm:$0xff]
    %v912 = vld [vmem:[%s1 + $0x4b0] sm:$0xff]
    %v913 = vld [vmem:[%s1 + $0x4b8] sm:$0xff]
    %v914 = vld [vmem:[%s1 + $0x4c0] sm:$0xff]
    %v915 = vld [vmem:[%s1 + $0x4c8] sm:$0xff]
    %v916 = vld [vmem:[%s1 + $0x4d0] sm:$0xff]
    %v917 = vld [vmem:[%s1 + $0x4d8] sm:$0xff]
    %v918 = vld [vmem:[%s1 + $0x4e0] sm:$0xff]
    %v919 = vld [vmem:[%s1 + $0x4e8] sm:$0xff]
    %v920 = vld [vmem:[%s1 + $0x4f0] sm:$0xff]
    %v921 = vld [vmem:[%s1 + $0x4f8] sm:$0xff]
    %v922 = vld [vmem:[%s1 + $0x500] sm:$0xff]
    %v923 = vld [vmem:[%s1 + $0x508] sm:$0xff]
    %v924 = vld [vmem:[%s1 + $0x510] sm:$0xff]
    %v925 = vld [vmem:[%s1 + $0x518] sm:$0xff]
    %v926 = vld [vmem:[%s1 + $0x520] sm:$0xff]
    %v927 = vld [vmem:[%s1 + $0x528] sm:$0xff]
    %v928 = vld [vmem:[%s1 + $0x530] sm:$0xff]
    %v929 = vld [vmem:[%s1 + $0x538] sm:$0xff]
    %v930 = vld [vmem:[%s1 + $0x540] sm:$0xff]
    %v931 = vld [vmem:[%s1 + $0x548] sm:$0xff]
    %v932 = vld [vmem:[%s1 + $0x550] sm:$0xff]
    %v933 = vld [vmem:[%s1 + $0x558] sm:$0xff]
    %v934 = vld [vmem:[%s1 + $0x560] sm:$0xff]
    %v935 = vld [vmem:[%s1 + $0x568] sm:$0xff]
    %v936 = vld [vmem:[%s1 + $0x570] sm:$0xff]
    %v937 = vld [vmem:[%s1 + $0x578] sm:$0xff]
    %v938 = vld [vmem:[%s1 + $0x580] sm:$0xff]
    %v939 = vld [vmem:[%s1 + $0x588] sm:$0xff]
    %v940 = vld [vmem:[%s1 + $0x590] sm:$0xff]
    %v941 = vld [vmem:[%s1 + $0x598] sm:$0xff]
    %v942 = vld [vmem:[%s1 + $0x5a0] sm:$0xff]
    %v943 = vld [vmem:[%s1 + $0x5a8] sm:$0xff]
    %v944 = vld [vmem:[%s1 + $0x5b0] sm:$0xff]
    %v945 = vld [vmem:[%s1 + $0x5b8] sm:$0xff]
    %v946 = vld [vmem:[%s1 + $0x5c0] sm:$0xff]
    %v947 = vld [vmem:[%s1 + $0x5c8] sm:$0xff]
    %v948 = vld [vmem:[%s1 + $0x5d0] sm:$0xff]
    %v949 = vld [vmem:[%s1 + $0x5d8] sm:$0xff]
    %v950 = vld [vmem:[%s1 + $0x5e0] sm:$0xff]
    %v951 = vld [vmem:[%s1 + $0x5e8] sm:$0xff]
    %v952 = vld [vmem:[%s1 + $0x5f0] sm:$0xff]
    %v953 = vld [vmem:[%s1 + $0x5f8] sm:$0xff]
    %v954 = vld [vmem:[%s1 + $0x600] sm:$0xff]
    %v955 = vld [vmem:[%s1 + $0x608] sm:$0xff]
    %v956 = vld [vmem:[%s1 + $0x610] sm:$0xff]
    %v957 = vld [vmem:[%s1 + $0x618] sm:$0xff]
    %v958 = vld [vmem:[%s1 + $0x620] sm:$0xff]
    %v959 = vld [vmem:[%s1 + $0x628] sm:$0xff]
    %v960 = vld [vmem:[%s1 + $0x630] sm:$0xff]
    %v961 = vld [vmem:[%s1 + $0x638] sm:$0xff]
    %v962 = vld [vmem:[%s1 + $0x640] sm:$0xff]
    %v963 = vld [vmem:[%s1 + $0x648] sm:$0xff]
    %v964 = vld [vmem:[%s1 + $0x650] sm:$0xff]
    %v965 = vld [vmem:[%s1 + $0x658] sm:$0xff]
    %v966 = vld [vmem:[%s1 + $0x660] sm:$0xff]
    %v967 = vld [vmem:[%s1 + $0x668] sm:$0xff]
    %v968 = vld [vmem:[%s1 + $0x670] sm:$0xff]
    %v969 = vld [vmem:[%s1 + $0x678] sm:$0xff]
    %v970 = vld [vmem:[%s1 + $0x680] sm:$0xff]
    %v971 = vld [vmem:[%s1 + $0x688] sm:$0xff]
    %v972 = vld [vmem:[%s1 + $0x690] sm:$0xff]
    %v973 = vld [vmem:[%s1 + $0x698] sm:$0xff]
    %v974 = vld [vmem:[%s1 + $0x6a0] sm:$0xff]
    %v975 = vld [vmem:[%s1 + $0x6a8] sm:$0xff]
    %v976 = vld [vmem:[%s1 + $0x6b0] sm:$0xff]
    %v977 = vld [vmem:[%s1 + $0x6b8] sm:$0xff]
    %v978 = vld [vmem:[%s1 + $0x6c0] sm:$0xff]
    %v979 = vld [vmem:[%s1 + $0x6c8] sm:$0xff]
    %v980 = vld [vmem:[%s1 + $0x6d0] sm:$0xff]
    %v981 = vld [vmem:[%s1 + $0x6d8] sm:$0xff]
    %v982 = vld [vmem:[%s1 + $0x6e0] sm:$0xff]
    %v983 = vld [vmem:[%s1 + $0x6e8] sm:$0xff]
    %v984 = vld [vmem:[%s1 + $0x6f0] sm:$0xff]
    %v985 = vld [vmem:[%s1 + $0x6f8] sm:$0xff]
    %v986 = vld [vmem:[%s1 + $0x700] sm:$0xff]
    %v987 = vld [vmem:[%s1 + $0x708] sm:$0xff]
    %v988 = vld [vmem:[%s1 + $0x710] sm:$0xff]
    %v989 = vld [vmem:[%s1 + $0x718] sm:$0xff]
    %v990 = vld [vmem:[%s1 + $0x720] sm:$0xff]
    %v991 = vld [vmem:[%s1 + $0x728] sm:$0xff]
    %v992 = vld [vmem:[%s1 + $0x730] sm:$0xff]
    %v993 = vld [vmem:[%s1 + $0x738] sm:$0xff]
    %v994 = vld [vmem:[%s1 + $0x740] sm:$0xff]
    %v995 = vld [vmem:[%s1 + $0x748] sm:$0xff]
    %v996 = vld [vmem:[%s1 + $0x750] sm:$0xff]
    %v997 = vld [vmem:[%s1 + $0x758] sm:$0xff]
    %v998 = vld [vmem:[%s1 + $0x760] sm:$0xff]
    %v999 = vld [vmem:[%s1 + $0x768] sm:$0xff]
    %v1000 = vld [vmem:[%s1 + $0x770] sm:$0xff]
    %v1001 = vld [vmem:[%s1 + $0x778] sm:$0xff]
    %v1002 = vld [vmem:[%s1 + $0x780] sm:$0xff]
    %v1003 = vld [vmem:[%s1 + $0x788] sm:$0xff]
    %v1004 = vld [vmem:[%s1 + $0x790] sm:$0xff]
    %v1005 = vld [vmem:[%s1 + $0x798] sm:$0xff]
    %v1006 = vld [vmem:[%s1 + $0x7a0] sm:$0xff]
    %v1007 = vld [vmem:[%s1 + $0x7a8] sm:$0xff]
    %v1008 = vld [vmem:[%s1 + $0x7b0] sm:$0xff]
    %v1009 = vld [vmem:[%s1 + $0x7b8] sm:$0xff]
    %v1010 = vld [vmem:[%s1 + $0x7c0] sm:$0xff]
    %v1011 = vld [vmem:[%s1 + $0x7c8] sm:$0xff]
    %v1012 = vld [vmem:[%s1 + $0x7d0] sm:$0xff]
    %v1013 = vld [vmem:[%s1 + $0x7d8] sm:$0xff]
    %v1014 = vld [vmem:[%s1 + $0x7e0] sm:$0xff]
    %v1015 = vld [vmem:[%s1 + $0x7e8] sm:$0xff]
    %v1016 = vld [vmem:[%s1 + $0x7f0] sm:$0xff]
    %v1017 = vld [vmem:[%s1 + $0x7f8] sm:$0xff]
    %v1018 = vld [vmem:[%s1 + $0x800] sm:$0xff]
    %v1019 = vld [vmem:[%s1 + $0x808] sm:$0xff]
    %vm1020 = vcmask 130048
    %v1022 = vsel %vm1020, %v47, 0
    %v1025 = vsel %vm1020, %v64, 0
    %v1028 = vsel %vm1020, %v81, 0
    %v1031 = vsel %vm1020, %v98, 0
    %v1034 = vsel %vm1020, %v115, 0
    %v1037 = vsel %vm1020, %v132, 0
    %v1040 = vsel %vm1020, %v149, 0
    %v1043 = vsel %vm1020, %v166, 0
    %v1046 = vsel %vm1020, %v183, 0
    %v1049 = vsel %vm1020, %v200, 0
    %v1052 = vsel %vm1020, %v217, 0
    %v1055 = vsel %vm1020, %v234, 0
    %v1058 = vsel %vm1020, %v251, 0
    %v1061 = vsel %vm1020, %v268, 0
    %v1064 = vsel %vm1020, %v285, 0
    %v1067 = vsel %vm1020, %v302, 0
    %v1070 = vsel %vm1020, %v319, 0
    %v1073 = vsel %vm1020, %v336, 0
    %v1076 = vsel %vm1020, %v353, 0
    %v1079 = vsel %vm1020, %v370, 0
    %v1082 = vsel %vm1020, %v387, 0
    %v1085 = vsel %vm1020, %v404, 0
    %v1088 = vsel %vm1020, %v421, 0
    %v1091 = vsel %vm1020, %v438, 0
    %v1094 = vsel %vm1020, %v455, 0
    %v1097 = vsel %vm1020, %v472, 0
    %v1100 = vsel %vm1020, %v489, 0
    %v1103 = vsel %vm1020, %v506, 0
    %v1106 = vsel %vm1020, %v523, 0
    %v1109 = vsel %vm1020, %v540, 0
    %v1112 = vsel %vm1020, %v557, 0
    %v1115 = vsel %vm1020, %v574, 0
    %v1118 = vsel %vm1020, %v591, 0
    %v1121 = vsel %vm1020, %v608, 0
    %v1124 = vsel %vm1020, %v625, 0
    %v1127 = vsel %vm1020, %v642, 0
    %v1130 = vsel %vm1020, %v659, 0
    %v1133 = vsel %vm1020, %v676, 0
    %v1136 = vsel %vm1020, %v693, 0
    %v1139 = vsel %vm1020, %v710, 0
    %v1142 = vsel %vm1020, %v727, 0
    %v1145 = vsel %vm1020, %v744, 0
    %v1148 = vsel %vm1020, %v761, 0
    %1150 = vmatprep.subr.mxu0 0.0
    %1151 = vmatpush1.msra.mxu0 %v762
    %1152 = vmatprep.subr.mxu0 0.0
    %1153 = vmatpush1.msra.mxu0 %v763
    %1154 = vmatprep.subr.mxu0 0.0
    %1155 = vmatpush1.msra.mxu0 %v764
    %1156 = vmatprep.subr.mxu0 0.0
    %1157 = vmatpush1.msra.mxu0 %v765
    %1158 = vmatprep.subr.mxu0 0.0
    %1159 = vmatpush1.msra.mxu0 %v766
    %1160 = vmatprep.subr.mxu0 0.0
    %1161 = vmatpush1.msra.mxu0 %v767
    %1162 = vmatprep.subr.mxu0 0.0
    %1163 = vmatpush1.msra.mxu0 %v768
    %1164 = vmatprep.subr.mxu0 0.0
    %1165 = vmatpush1.msra.mxu0 %v769
    %1166 = vmatprep.subr.mxu0 0.0
    %1167 = vmatpush1.msra.mxu0 %v770
    %1168 = vmatprep.subr.mxu0 0.0
    %1169 = vmatpush1.msra.mxu0 %v771
    %1170 = vmatprep.subr.mxu0 0.0
    %1171 = vmatpush1.msra.mxu0 %v772
    %1172 = vmatprep.subr.mxu0 0.0
    %1173 = vmatpush1.msra.mxu0 %v773
    %1174 = vmatprep.subr.mxu0 0.0
    %1175 = vmatpush1.msra.mxu0 %v774
    %1176 = vmatprep.subr.mxu0 0.0
    %1177 = vmatpush1.msra.mxu0 %v775
    %1178 = vmatprep.subr.mxu0 0.0
    %1179 = vmatpush1.msra.mxu0 %v776
    %1180 = vmatprep.subr.mxu0 0.0
    %1181 = vmatpush1.msra.mxu0 %v777
    %1182 = vmatprep.subr.mxu0 0.0
    %1183 = vmatpush1.msra.mxu0 %v778
    %1184 = vmatprep.subr.mxu0 0.0
    %1185 = vmatpush1.msra.mxu0 %v779
    %1186 = vmatprep.subr.mxu0 0.0
    %1187 = vmatpush1.msra.mxu0 %v780
    %1188 = vmatprep.subr.mxu0 0.0
    %1189 = vmatpush1.msra.mxu0 %v781
    %1190 = vmatprep.subr.mxu0 0.0
    %1191 = vmatpush1.msra.mxu0 %v782
    %1192 = vmatprep.subr.mxu0 0.0
    %1193 = vmatpush1.msra.mxu0 %v783
    %1194 = vmatprep.subr.mxu0 0.0
    %1195 = vmatpush1.msra.mxu0 %v784
    %1196 = vmatprep.subr.mxu0 0.0
    %1197 = vmatpush1.msra.mxu0 %v785
    %1198 = vmatprep.subr.mxu0 0.0
    %1199 = vmatpush1.msra.mxu0 %v786
    %1200 = vmatprep.subr.mxu0 0.0
    %1201 = vmatpush1.msra.mxu0 %v787
    %1202 = vmatprep.subr.mxu0 0.0
    %1203 = vmatpush1.msra.mxu0 %v788
    %1204 = vmatprep.subr.mxu0 0.0
    %1205 = vmatpush1.msra.mxu0 %v789
    %1206 = vmatprep.subr.mxu0 0.0
    %1207 = vmatpush1.msra.mxu0 %v790
    %1208 = vmatprep.subr.mxu0 0.0
    %1209 = vmatpush1.msra.mxu0 %v791
    %1210 = vmatprep.subr.mxu0 0.0
    %1211 = vmatpush1.msra.mxu0 %v792
    %1212 = vmatprep.subr.mxu0 0.0
    %1213 = vmatpush1.msra.mxu0 %v793
    %1214 = vmatprep.mubr.f32.mxu0 %v32
    %1215 = vmatmul.mubr.f32.gmra.mrb[0].mxu0 %v31
    %v1216 = vpop.f32.mrb[0].mxu0
    %v1217 = vadd.f32 0.0, %v1216
    %v1218 = vpop.f32.mrb[0].mxu0
    %1219 = vmatprep.mubr.f32.mxu0 %v49
    %1220 = vmatmul.mubr.f32.gmra.mrb[0].mxu0 %v48
    %v1221 = vpop.f32.mrb[0].mxu0
    %v1222 = vadd.f32 0.0, %v1221
    %v1223 = vpop.f32.mrb[0].mxu0
    %1224 = vmatprep.mubr.f32.mxu0 %v66
    %1225 = vmatmul.mubr.f32.gmra.mrb[0].mxu0 %v65
    %v1226 = vpop.f32.mrb[0].mxu0
    %v1227 = vadd.f32 0.0, %v1226
    %v1228 = vpop.f32.mrb[0].mxu0
    %1229 = vmatprep.mubr.f32.mxu0 %v83
    %1230 = vmatmul.mubr.f32.gmra.mrb[0].mxu0 %v82
    %v1231 = vpop.f32.mrb[0].mxu0
    %v1232 = vadd.f32 0.0, %v1231
    %v1233 = vpop.f32.mrb[0].mxu0
    %1234 = vmatprep.mubr.f32.mxu0 %v100
    %1235 = vmatmul.mubr.f32.gmra.mrb[0].mxu0 %v99
    %v1236 = vpop.f32.mrb[0].mxu0
    %v1237 = vadd.f32 0.0, %v1236
    %v1238 = vpop.f32.mrb[0].mxu0
    %1239 = vmatprep.mubr.f32.mxu0 %v117
    %1240 = vmatmul.mubr.f32.gmra.mrb[0].mxu0 %v116
    %v1241 = vpop.f32.mrb[0].mxu0
    %v1242 = vadd.f32 0.0, %v1241
    %v1243 = vpop.f32.mrb[0].mxu0
    %1244 = vmatprep.mubr.f32.mxu0 %v134
    %1245 = vmatmul.mubr.f32.gmra.mrb[0].mxu0 %v133
    %v1246 = vpop.f32.mrb[0].mxu0
    %v1247 = vadd.f32 0.0, %v1246
    %v1248 = vpop.f32.mrb[0].mxu0
    %1249 = vmatprep.mubr.f32.mxu0 %v151
    %1250 = vmatmul.mubr.f32.gmra.mrb[0].mxu0 %v150
    %v1251 = vpop.f32.mrb[0].mxu0
    %v1252 = vadd.f32 0.0, %v1251
    %v1253 = vpop.f32.mrb[0].mxu0
    %1254 = vmatprep.mubr.f32.mxu0 %v168
    %1255 = vmatmul.mubr.f32.gmra.mrb[0].mxu0 %v167
    %v1256 = vpop.f32.mrb[0].mxu0
    %v1257 = vadd.f32 0.0, %v1256
    %v1258 = vpop.f32.mrb[0].mxu0
    %1259 = vmatprep.mubr.f32.mxu0 %v185
    %1260 = vmatmul.mubr.f32.gmra.mrb[0].mxu0 %v184
    %v1261 = vpop.f32.mrb[0].mxu0
    %v1262 = vadd.f32 0.0, %v1261
    %v1263 = vpop.f32.mrb[0].mxu0
    %1264 = vmatprep.mubr.f32.mxu0 %v202
    %1265 = vmatmul.mubr.f32.gmra.mrb[0].mxu0 %v201
    %v1266 = vpop.f32.mrb[0].mxu0
    %v1267 = vadd.f32 0.0, %v1266
    %v1268 = vpop.f32.mrb[0].mxu0
    %1269 = vmatprep.mubr.f32.mxu0 %v219
    %1270 = vmatmul.mubr.f32.gmra.mrb[0].mxu0 %v218
    %v1271 = vpop.f32.mrb[0].mxu0
    %v1272 = vadd.f32 0.0, %v1271
    %v1273 = vpop.f32.mrb[0].mxu0
    %1274 = vmatprep.mubr.f32.mxu0 %v236
    %1275 = vmatmul.mubr.f32.gmra.mrb[0].mxu0 %v235
    %v1276 = vpop.f32.mrb[0].mxu0
    %v1277 = vadd.f32 0.0, %v1276
    %v1278 = vpop.f32.mrb[0].mxu0
    %1279 = vmatprep.mubr.f32.mxu0 %v253
    %1280 = vmatmul.mubr.f32.gmra.mrb[0].mxu0 %v252
    %v1281 = vpop.f32.mrb[0].mxu0
    %v1282 = vadd.f32 0.0, %v1281
    %v1283 = vpop.f32.mrb[0].mxu0
    %1284 = vmatprep.mubr.f32.mxu0 %v270
    %1285 = vmatmul.mubr.f32.gmra.mrb[0].mxu0 %v269
    %v1286 = vpop.f32.mrb[0].mxu0
    %v1287 = vadd.f32 0.0, %v1286
    %v1288 = vpop.f32.mrb[0].mxu0
    %1289 = vmatprep.mubr.f32.mxu0 %v287
    %1290 = vmatmul.mubr.f32.gmra.mrb[0].mxu0 %v286
    %v1291 = vpop.f32.mrb[0].mxu0
    %v1292 = vadd.f32 0.0, %v1291
    %v1293 = vpop.f32.mrb[0].mxu0
    %1294 = vmatprep.mubr.f32.mxu0 %v304
    %1295 = vmatmul.mubr.f32.gmra.mrb[0].mxu0 %v303
    %v1296 = vpop.f32.mrb[0].mxu0
    %v1297 = vadd.f32 0.0, %v1296
    %v1298 = vpop.f32.mrb[0].mxu0
    %1299 = vmatprep.mubr.f32.mxu0 %v321
    %1300 = vmatmul.mubr.f32.gmra.mrb[0].mxu0 %v320
    %v1301 = vpop.f32.mrb[0].mxu0
    %v1302 = vadd.f32 0.0, %v1301
    %v1303 = vpop.f32.mrb[0].mxu0
    %1304 = vmatprep.mubr.f32.mxu0 %v338
    %1305 = vmatmul.mubr.f32.gmra.mrb[0].mxu0 %v337
    %v1306 = vpop.f32.mrb[0].mxu0
    %v1307 = vadd.f32 0.0, %v1306
    %v1308 = vpop.f32.mrb[0].mxu0
    %1309 = vmatprep.mubr.f32.mxu0 %v355
    %1310 = vmatmul.mubr.f32.gmra.mrb[0].mxu0 %v354
    %v1311 = vpop.f32.mrb[0].mxu0
    %v1312 = vadd.f32 0.0, %v1311
    %v1313 = vpop.f32.mrb[0].mxu0
    %1314 = vmatprep.mubr.f32.mxu0 %v372
    %1315 = vmatmul.mubr.f32.gmra.mrb[0].mxu0 %v371
    %v1316 = vpop.f32.mrb[0].mxu0
    %v1317 = vadd.f32 0.0, %v1316
    %v1318 = vpop.f32.mrb[0].mxu0
    %1319 = vmatprep.mubr.f32.mxu0 %v389
    %1320 = vmatmul.mubr.f32.gmra.mrb[0].mxu0 %v388
    %v1321 = vpop.f32.mrb[0].mxu0
    %v1322 = vadd.f32 0.0, %v1321
    %v1323 = vpop.f32.mrb[0].mxu0
    %1324 = vmatprep.mubr.f32.mxu0 %v406
    %1325 = vmatmul.mubr.f32.gmra.mrb[0].mxu0 %v405
    %v1326 = vpop.f32.mrb[0].mxu0
    %v1327 = vadd.f32 0.0, %v1326
    %v1328 = vpop.f32.mrb[0].mxu0
    %1329 = vmatprep.mubr.f32.mxu0 %v423
    %1330 = vmatmul.mubr.f32.gmra.mrb[0].mxu0 %v422
    %v1331 = vpop.f32.mrb[0].mxu0
    %v1332 = vadd.f32 0.0, %v1331
    %v1333 = vpop.f32.mrb[0].mxu0
    %1334 = vmatprep.mubr.f32.mxu0 %v440
    %1335 = vmatmul.mubr.f32.gmra.mrb[0].mxu0 %v439
    %v1336 = vpop.f32.mrb[0].mxu0
    %v1337 = vadd.f32 0.0, %v1336
    %v1338 = vpop.f32.mrb[0].mxu0
    %1339 = vmatprep.mubr.f32.mxu0 %v457
    %1340 = vmatmul.mubr.f32.gmra.mrb[0].mxu0 %v456
    %v1341 = vpop.f32.mrb[0].mxu0
    %v1342 = vadd.f32 0.0, %v1341
    %v1343 = vpop.f32.mrb[0].mxu0
    %1344 = vmatprep.mubr.f32.mxu0 %v474
    %1345 = vmatmul.mubr.f32.gmra.mrb[0].mxu0 %v473
    %v1346 = vpop.f32.mrb[0].mxu0
    %v1347 = vadd.f32 0.0, %v1346
    %v1348 = vpop.f32.mrb[0].mxu0
    %1349 = vmatprep.mubr.f32.mxu0 %v491
    %1350 = vmatmul.mubr.f32.gmra.mrb[0].mxu0 %v490
    %v1351 = vpop.f32.mrb[0].mxu0
    %v1352 = vadd.f32 0.0, %v1351
    %v1353 = vpop.f32.mrb[0].mxu0
    %1354 = vmatprep.mubr.f32.mxu0 %v508
    %1355 = vmatmul.mubr.f32.gmra.mrb[0].mxu0 %v507
    %v1356 = vpop.f32.mrb[0].mxu0
    %v1357 = vadd.f32 0.0, %v1356
    %v1358 = vpop.f32.mrb[0].mxu0
    %1359 = vmatprep.mubr.f32.mxu0 %v525
    %1360 = vmatmul.mubr.f32.gmra.mrb[0].mxu0 %v524
    %v1361 = vpop.f32.mrb[0].mxu0
    %v1362 = vadd.f32 0.0, %v1361
    %v1363 = vpop.f32.mrb[0].mxu0
    %1364 = vmatprep.mubr.f32.mxu0 %v542
    %1365 = vmatmul.mubr.f32.gmra.mrb[0].mxu0 %v541
    %v1366 = vpop.f32.mrb[0].mxu0
    %v1367 = vadd.f32 0.0, %v1366
    %v1368 = vpop.f32.mrb[0].mxu0
    %1369 = vmatprep.mubr.f32.mxu0 %v559
    %1370 = vmatmul.mubr.f32.gmra.mrb[0].mxu0 %v558
    %v1371 = vpop.f32.mrb[0].mxu0
    %v1372 = vadd.f32 0.0, %v1371
    %v1373 = vpop.f32.mrb[0].mxu0
    %1374 = vmatprep.mubr.f32.mxu0 %v576
    %1375 = vmatmul.mubr.f32.gmra.mrb[0].mxu0 %v575
    %v1376 = vpop.f32.mrb[0].mxu0
    %v1377 = vadd.f32 0.0, %v1376
    %v1378 = vpop.f32.mrb[0].mxu0
    %1379 = vmatprep.mubr.f32.mxu0 %v593
    %1380 = vmatmul.mubr.f32.gmra.mrb[0].mxu0 %v592
    %v1381 = vpop.f32.mrb[0].mxu0
    %v1382 = vadd.f32 0.0, %v1381
    %v1383 = vpop.f32.mrb[0].mxu0
    %1384 = vmatprep.mubr.f32.mxu0 %v610
    %1385 = vmatmul.mubr.f32.gmra.mrb[0].mxu0 %v609
    %v1386 = vpop.f32.mrb[0].mxu0
    %v1387 = vadd.f32 0.0, %v1386
    %v1388 = vpop.f32.mrb[0].mxu0
    %1389 = vmatprep.mubr.f32.mxu0 %v627
    %1390 = vmatmul.mubr.f32.gmra.mrb[0].mxu0 %v626
    %v1391 = vpop.f32.mrb[0].mxu0
    %v1392 = vadd.f32 0.0, %v1391
    %v1393 = vpop.f32.mrb[0].mxu0
    %1394 = vmatprep.mubr.f32.mxu0 %v644
    %1395 = vmatmul.mubr.f32.gmra.mrb[0].mxu0 %v643
    %v1396 = vpop.f32.mrb[0].mxu0
    %v1397 = vadd.f32 0.0, %v1396
    %v1398 = vpop.f32.mrb[0].mxu0
    %1399 = vmatprep.mubr.f32.mxu0 %v661
    %1400 = vmatmul.mubr.f32.gmra.mrb[0].mxu0 %v660
    %v1401 = vpop.f32.mrb[0].mxu0
    %v1402 = vadd.f32 0.0, %v1401
    %v1403 = vpop.f32.mrb[0].mxu0
    %1404 = vmatprep.mubr.f32.mxu0 %v678
    %1405 = vmatmul.mubr.f32.gmra.mrb[0].mxu0 %v677
    %v1406 = vpop.f32.mrb[0].mxu0
    %v1407 = vadd.f32 0.0, %v1406
    %v1408 = vpop.f32.mrb[0].mxu0
    %1409 = vmatprep.mubr.f32.mxu0 %v695
    %1410 = vmatmul.mubr.f32.gmra.mrb[0].mxu0 %v694
    %v1411 = vpop.f32.mrb[0].mxu0
    %v1412 = vadd.f32 0.0, %v1411
    %v1413 = vpop.f32.mrb[0].mxu0
    %1414 = vmatprep.mubr.f32.mxu0 %v712
    %1415 = vmatmul.mubr.f32.gmra.mrb[0].mxu0 %v711
    %v1416 = vpop.f32.mrb[0].mxu0
    %v1417 = vadd.f32 0.0, %v1416
    %v1418 = vpop.f32.mrb[0].mxu0
    %1419 = vmatprep.mubr.f32.mxu0 %v729
    %1420 = vmatmul.mubr.f32.gmra.mrb[0].mxu0 %v728
    %v1421 = vpop.f32.mrb[0].mxu0
    %v1422 = vadd.f32 0.0, %v1421
    %v1423 = vpop.f32.mrb[0].mxu0
    %1424 = vmatprep.mubr.f32.mxu0 %v746
    %1425 = vmatmul.mubr.f32.gmra.mrb[0].mxu0 %v745
    %v1426 = vpop.f32.mrb[0].mxu0
    %v1427 = vadd.f32 0.0, %v1426
    %v1428 = vpop.f32.mrb[0].mxu0
    %1429 = vdwg.mxu0
    %1430 = vmatprep.subr.mxu0 0.0
    %1431 = vmatpush1.msra.mxu0 %v794
    %1432 = vmatprep.subr.mxu0 0.0
    %1433 = vmatpush1.msra.mxu0 %v795
    %1434 = vmatprep.subr.mxu0 0.0
    %1435 = vmatpush1.msra.mxu0 %v796
    %1436 = vmatprep.subr.mxu0 0.0
    %1437 = vmatpush1.msra.mxu0 %v797
    %1438 = vmatprep.subr.mxu0 0.0
    %1439 = vmatpush1.msra.mxu0 %v798
    %1440 = vmatprep.subr.mxu0 0.0
    %1441 = vmatpush1.msra.mxu0 %v799
    %1442 = vmatprep.subr.mxu0 0.0
    %1443 = vmatpush1.msra.mxu0 %v800
    %1444 = vmatprep.subr.mxu0 0.0
    %1445 = vmatpush1.msra.mxu0 %v801
    %1446 = vmatprep.subr.mxu0 0.0
    %1447 = vmatpush1.msra.mxu0 %v802
    %1448 = vmatprep.subr.mxu0 0.0
    %1449 = vmatpush1.msra.mxu0 %v803
    %1450 = vmatprep.subr.mxu0 0.0
    %1451 = vmatpush1.msra.mxu0 %v804
    %1452 = vmatprep.subr.mxu0 0.0
    %1453 = vmatpush1.msra.mxu0 %v805
    %1454 = vmatprep.subr.mxu0 0.0
    %1455 = vmatpush1.msra.mxu0 %v806
    %1456 = vmatprep.subr.mxu0 0.0
    %1457 = vmatpush1.msra.mxu0 %v807
    %1458 = vmatprep.subr.mxu0 0.0
    %1459 = vmatpush1.msra.mxu0 %v808
    %1460 = vmatprep.subr.mxu0 0.0
    %1461 = vmatpush1.msra.mxu0 %v809
    %1462 = vmatprep.subr.mxu0 0.0
    %1463 = vmatpush1.msra.mxu0 %v810
    %1464 = vmatprep.subr.mxu0 0.0
    %1465 = vmatpush1.msra.mxu0 %v811
    %1466 = vmatprep.subr.mxu0 0.0
    %1467 = vmatpush1.msra.mxu0 %v812
    %1468 = vmatprep.subr.mxu0 0.0
    %1469 = vmatpush1.msra.mxu0 %v813
    %1470 = vmatprep.subr.mxu0 0.0
    %1471 = vmatpush1.msra.mxu0 %v814
    %1472 = vmatprep.subr.mxu0 0.0
    %1473 = vmatpush1.msra.mxu0 %v815
    %1474 = vmatprep.subr.mxu0 0.0
    %1475 = vmatpush1.msra.mxu0 %v816
    %1476 = vmatprep.subr.mxu0 0.0
    %1477 = vmatpush1.msra.mxu0 %v817
    %1478 = vmatprep.subr.mxu0 0.0
    %1479 = vmatpush1.msra.mxu0 %v818
    %1480 = vmatprep.subr.mxu0 0.0
    %1481 = vmatpush1.msra.mxu0 %v819
    %1482 = vmatprep.subr.mxu0 0.0
    %1483 = vmatpush1.msra.mxu0 %v820
    %1484 = vmatprep.subr.mxu0 0.0
    %1485 = vmatpush1.msra.mxu0 %v821
    %1486 = vmatprep.subr.mxu0 0.0
    %1487 = vmatpush1.msra.mxu0 %v822
    %1488 = vmatprep.subr.mxu0 0.0
    %1489 = vmatpush1.msra.mxu0 %v823
    %1490 = vmatprep.subr.mxu0 0.0
    %1491 = vmatpush1.msra.mxu0 %v824
    %1492 = vmatprep.subr.mxu0 0.0
    %1493 = vmatpush1.msra.mxu0 %v825
    %1494 = vmatprep.mubr.f32.mxu0 %v34
    %1495 = vmatmul.mubr.f32.gmra.mrb[0].mxu0 %v33
    %v1496 = vpop.f32.mrb[0].mxu0
    %v1497 = vadd.f32 %v1217, %v1496
    %v1498 = vpop.f32.mrb[0].mxu0
    %1499 = vmatprep.mubr.f32.mxu0 %v51
    %1500 = vmatmul.mubr.f32.gmra.mrb[0].mxu0 %v50
    %v1501 = vpop.f32.mrb[0].mxu0
    %v1502 = vadd.f32 %v1222, %v1501
    %v1503 = vpop.f32.mrb[0].mxu0
    %1504 = vmatprep.mubr.f32.mxu0 %v68
    %1505 = vmatmul.mubr.f32.gmra.mrb[0].mxu0 %v67
    %v1506 = vpop.f32.mrb[0].mxu0
    %v1507 = vadd.f32 %v1227, %v1506
    %v1508 = vpop.f32.mrb[0].mxu0
    %1509 = vmatprep.mubr.f32.mxu0 %v85
    %1510 = vmatmul.mubr.f32.gmra.mrb[0].mxu0 %v84
    %v1511 = vpop.f32.mrb[0].mxu0
    %v1512 = vadd.f32 %v1232, %v1511
    %v1513 = vpop.f32.mrb[0].mxu0
    %1514 = vmatprep.mubr.f32.mxu0 %v102
    %1515 = vmatmul.mubr.f32.gmra.mrb[0].mxu0 %v101
    %v1516 = vpop.f32.mrb[0].mxu0
    %v1517 = vadd.f32 %v1237, %v1516
    %v1518 = vpop.f32.mrb[0].mxu0
    %1519 = vmatprep.mubr.f32.mxu0 %v119
    %1520 = vmatmul.mubr.f32.gmra.mrb[0].mxu0 %v118
    %v1521 = vpop.f32.mrb[0].mxu0
    %v1522 = vadd.f32 %v1242, %v1521
    %v1523 = vpop.f32.mrb[0].mxu0
    %1524 = vmatprep.mubr.f32.mxu0 %v136
    %1525 = vmatmul.mubr.f32.gmra.mrb[0].mxu0 %v135
    %v1526 = vpop.f32.mrb[0].mxu0
    %v1527 = vadd.f32 %v1247, %v1526
    %v1528 = vpop.f32.mrb[0].mxu0
    %1529 = vmatprep.mubr.f32.mxu0 %v153
    %1530 = vmatmul.mubr.f32.gmra.mrb[0].mxu0 %v152
    %v1531 = vpop.f32.mrb[0].mxu0
    %v1532 = vadd.f32 %v1252, %v1531
    %v1533 = vpop.f32.mrb[0].mxu0
    %1534 = vmatprep.mubr.f32.mxu0 %v170
    %1535 = vmatmul.mubr.f32.gmra.mrb[0].mxu0 %v169
    %v1536 = vpop.f32.mrb[0].mxu0
    %v1537 = vadd.f32 %v1257, %v1536
    %v1538 = vpop.f32.mrb[0].mxu0
    %1539 = vmatprep.mubr.f32.mxu0 %v187
    %1540 = vmatmul.mubr.f32.gmra.mrb[0].mxu0 %v186
    %v1541 = vpop.f32.mrb[0].mxu0
    %v1542 = vadd.f32 %v1262, %v1541
    %v1543 = vpop.f32.mrb[0].mxu0
    %1544 = vmatprep.mubr.f32.mxu0 %v204
    %1545 = vmatmul.mubr.f32.gmra.mrb[0].mxu0 %v203
    %v1546 = vpop.f32.mrb[0].mxu0
    %v1547 = vadd.f32 %v1267, %v1546
    %v1548 = vpop.f32.mrb[0].mxu0
    %1549 = vmatprep.mubr.f32.mxu0 %v221
    %1550 = vmatmul.mubr.f32.gmra.mrb[0].mxu0 %v220
    %v1551 = vpop.f32.mrb[0].mxu0
    %v1552 = vadd.f32 %v1272, %v1551
    %v1553 = vpop.f32.mrb[0].mxu0
    %1554 = vmatprep.mubr.f32.mxu0 %v238
    %1555 = vmatmul.mubr.f32.gmra.mrb[0].mxu0 %v237
    %v1556 = vpop.f32.mrb[0].mxu0
    %v1557 = vadd.f32 %v1277, %v1556
    %v1558 = vpop.f32.mrb[0].mxu0
    %1559 = vmatprep.mubr.f32.mxu0 %v255
    %1560 = vmatmul.mubr.f32.gmra.mrb[0].mxu0 %v254
    %v1561 = vpop.f32.mrb[0].mxu0
    %v1562 = vadd.f32 %v1282, %v1561
    %v1563 = vpop.f32.mrb[0].mxu0
    %1564 = vmatprep.mubr.f32.mxu0 %v272
    %1565 = vmatmul.mubr.f32.gmra.mrb[0].mxu0 %v271
    %v1566 = vpop.f32.mrb[0].mxu0
    %v1567 = vadd.f32 %v1287, %v1566
    %v1568 = vpop.f32.mrb[0].mxu0
    %1569 = vmatprep.mubr.f32.mxu0 %v289
    %1570 = vmatmul.mubr.f32.gmra.mrb[0].mxu0 %v288
    %v1571 = vpop.f32.mrb[0].mxu0
    %v1572 = vadd.f32 %v1292, %v1571
    %v1573 = vpop.f32.mrb[0].mxu0
    %1574 = vmatprep.mubr.f32.mxu0 %v306
    %1575 = vmatmul.mubr.f32.gmra.mrb[0].mxu0 %v305
    %v1576 = vpop.f32.mrb[0].mxu0
    %v1577 = vadd.f32 %v1297, %v1576
    %v1578 = vpop.f32.mrb[0].mxu0
    %1579 = vmatprep.mubr.f32.mxu0 %v323
    %1580 = vmatmul.mubr.f32.gmra.mrb[0].mxu0 %v322
    %v1581 = vpop.f32.mrb[0].mxu0
    %v1582 = vadd.f32 %v1302, %v1581
    %v1583 = vpop.f32.mrb[0].mxu0
    %1584 = vmatprep.mubr.f32.mxu0 %v340
    %1585 = vmatmul.mubr.f32.gmra.mrb[0].mxu0 %v339
    %v1586 = vpop.f32.mrb[0].mxu0
    %v1587 = vadd.f32 %v1307, %v1586
    %v1588 = vpop.f32.mrb[0].mxu0
    %1589 = vmatprep.mubr.f32.mxu0 %v357
    %1590 = vmatmul.mubr.f32.gmra.mrb[0].mxu0 %v356
    %v1591 = vpop.f32.mrb[0].mxu0
    %v1592 = vadd.f32 %v1312, %v1591
    %v1593 = vpop.f32.mrb[0].mxu0
    %1594 = vmatprep.mubr.f32.mxu0 %v374
    %1595 = vmatmul.mubr.f32.gmra.mrb[0].mxu0 %v373
    %v1596 = vpop.f32.mrb[0].mxu0
    %v1597 = vadd.f32 %v1317, %v1596
    %v1598 = vpop.f32.mrb[0].mxu0
    %1599 = vmatprep.mubr.f32.mxu0 %v391
    %1600 = vmatmul.mubr.f32.gmra.mrb[0].mxu0 %v390
    %v1601 = vpop.f32.mrb[0].mxu0
    %v1602 = vadd.f32 %v1322, %v1601
    %v1603 = vpop.f32.mrb[0].mxu0
    %1604 = vmatprep.mubr.f32.mxu0 %v408
    %1605 = vmatmul.mubr.f32.gmra.mrb[0].mxu0 %v407
    %v1606 = vpop.f32.mrb[0].mxu0
    %v1607 = vadd.f32 %v1327, %v1606
    %v1608 = vpop.f32.mrb[0].mxu0
    %1609 = vmatprep.mubr.f32.mxu0 %v425
    %1610 = vmatmul.mubr.f32.gmra.mrb[0].mxu0 %v424
    %v1611 = vpop.f32.mrb[0].mxu0
    %v1612 = vadd.f32 %v1332, %v1611
    %v1613 = vpop.f32.mrb[0].mxu0
    %1614 = vmatprep.mubr.f32.mxu0 %v442
    %1615 = vmatmul.mubr.f32.gmra.mrb[0].mxu0 %v441
    %v1616 = vpop.f32.mrb[0].mxu0
    %v1617 = vadd.f32 %v1337, %v1616
    %v1618 = vpop.f32.mrb[0].mxu0
    %1619 = vmatprep.mubr.f32.mxu0 %v459
    %1620 = vmatmul.mubr.f32.gmra.mrb[0].mxu0 %v458
    %v1621 = vpop.f32.mrb[0].mxu0
    %v1622 = vadd.f32 %v1342, %v1621
    %v1623 = vpop.f32.mrb[0].mxu0
    %1624 = vmatprep.mubr.f32.mxu0 %v476
    %1625 = vmatmul.mubr.f32.gmra.mrb[0].mxu0 %v475
    %v1626 = vpop.f32.mrb[0].mxu0
    %v1627 = vadd.f32 %v1347, %v1626
    %v1628 = vpop.f32.mrb[0].mxu0
    %1629 = vmatprep.mubr.f32.mxu0 %v493
    %1630 = vmatmul.mubr.f32.gmra.mrb[0].mxu0 %v492
    %v1631 = vpop.f32.mrb[0].mxu0
    %v1632 = vadd.f32 %v1352, %v1631
    %v1633 = vpop.f32.mrb[0].mxu0
    %1634 = vmatprep.mubr.f32.mxu0 %v510
    %1635 = vmatmul.mubr.f32.gmra.mrb[0].mxu0 %v509
    %v1636 = vpop.f32.mrb[0].mxu0
    %v1637 = vadd.f32 %v1357, %v1636
    %v1638 = vpop.f32.mrb[0].mxu0
    %1639 = vmatprep.mubr.f32.mxu0 %v527
    %1640 = vmatmul.mubr.f32.gmra.mrb[0].mxu0 %v526
    %v1641 = vpop.f32.mrb[0].mxu0
    %v1642 = vadd.f32 %v1362, %v1641
    %v1643 = vpop.f32.mrb[0].mxu0
    %1644 = vmatprep.mubr.f32.mxu0 %v544
    %1645 = vmatmul.mubr.f32.gmra.mrb[0].mxu0 %v543
    %v1646 = vpop.f32.mrb[0].mxu0
    %v1647 = vadd.f32 %v1367, %v1646
    %v1648 = vpop.f32.mrb[0].mxu0
    %1649 = vmatprep.mubr.f32.mxu0 %v561
    %1650 = vmatmul.mubr.f32.gmra.mrb[0].mxu0 %v560
    %v1651 = vpop.f32.mrb[0].mxu0
    %v1652 = vadd.f32 %v1372, %v1651
    %v1653 = vpop.f32.mrb[0].mxu0
    %1654 = vmatprep.mubr.f32.mxu0 %v578
    %1655 = vmatmul.mubr.f32.gmra.mrb[0].mxu0 %v577
    %v1656 = vpop.f32.mrb[0].mxu0
    %v1657 = vadd.f32 %v1377, %v1656
    %v1658 = vpop.f32.mrb[0].mxu0
    %1659 = vmatprep.mubr.f32.mxu0 %v595
    %1660 = vmatmul.mubr.f32.gmra.mrb[0].mxu0 %v594
    %v1661 = vpop.f32.mrb[0].mxu0
    %v1662 = vadd.f32 %v1382, %v1661
    %v1663 = vpop.f32.mrb[0].mxu0
    %1664 = vmatprep.mubr.f32.mxu0 %v612
    %1665 = vmatmul.mubr.f32.gmra.mrb[0].mxu0 %v611
    %v1666 = vpop.f32.mrb[0].mxu0
    %v1667 = vadd.f32 %v1387, %v1666
    %v1668 = vpop.f32.mrb[0].mxu0
    %1669 = vmatprep.mubr.f32.mxu0 %v629
    %1670 = vmatmul.mubr.f32.gmra.mrb[0].mxu0 %v628
    %v1671 = vpop.f32.mrb[0].mxu0
    %v1672 = vadd.f32 %v1392, %v1671
    %v1673 = vpop.f32.mrb[0].mxu0
    %1674 = vmatprep.mubr.f32.mxu0 %v646
    %1675 = vmatmul.mubr.f32.gmra.mrb[0].mxu0 %v645
    %v1676 = vpop.f32.mrb[0].mxu0
    %v1677 = vadd.f32 %v1397, %v1676
    %v1678 = vpop.f32.mrb[0].mxu0
    %1679 = vmatprep.mubr.f32.mxu0 %v663
    %1680 = vmatmul.mubr.f32.gmra.mrb[0].mxu0 %v662
    %v1681 = vpop.f32.mrb[0].mxu0
    %v1682 = vadd.f32 %v1402, %v1681
    %v1683 = vpop.f32.mrb[0].mxu0
    %1684 = vmatprep.mubr.f32.mxu0 %v680
    %1685 = vmatmul.mubr.f32.gmra.mrb[0].mxu0 %v679
    %v1686 = vpop.f32.mrb[0].mxu0
    %v1687 = vadd.f32 %v1407, %v1686
    %v1688 = vpop.f32.mrb[0].mxu0
    %1689 = vmatprep.mubr.f32.mxu0 %v697
    %1690 = vmatmul.mubr.f32.gmra.mrb[0].mxu0 %v696
    %v1691 = vpop.f32.mrb[0].mxu0
    %v1692 = vadd.f32 %v1412, %v1691
    %v1693 = vpop.f32.mrb[0].mxu0
    %1694 = vmatprep.mubr.f32.mxu0 %v714
    %1695 = vmatmul.mubr.f32.gmra.mrb[0].mxu0 %v713
    %v1696 = vpop.f32.mrb[0].mxu0
    %v1697 = vadd.f32 %v1417, %v1696
    %v1698 = vpop.f32.mrb[0].mxu0
    %1699 = vmatprep.mubr.f32.mxu0 %v731
    %1700 = vmatmul.mubr.f32.gmra.mrb[0].mxu0 %v730
    %v1701 = vpop.f32.mrb[0].mxu0
    %v1702 = vadd.f32 %v1422, %v1701
    %v1703 = vpop.f32.mrb[0].mxu0
    %1704 = vmatprep.mubr.f32.mxu0 %v748
    %1705 = vmatmul.mubr.f32.gmra.mrb[0].mxu0 %v747
    %v1706 = vpop.f32.mrb[0].mxu0
    %v1707 = vadd.f32 %v1427, %v1706
    %v1708 = vpop.f32.mrb[0].mxu0
    %1709 = vdwg.mxu0
    %1710 = vmatprep.subr.mxu0 0.0
    %1711 = vmatpush1.msra.mxu0 %v826
    %1712 = vmatprep.subr.mxu0 0.0
    %1713 = vmatpush1.msra.mxu0 %v827
    %1714 = vmatprep.subr.mxu0 0.0
    %1715 = vmatpush1.msra.mxu0 %v828
    %1716 = vmatprep.subr.mxu0 0.0
    %1717 = vmatpush1.msra.mxu0 %v829
    %1718 = vmatprep.subr.mxu0 0.0
    %1719 = vmatpush1.msra.mxu0 %v830
    %1720 = vmatprep.subr.mxu0 0.0
    %1721 = vmatpush1.msra.mxu0 %v831
    %1722 = vmatprep.subr.mxu0 0.0
    %1723 = vmatpush1.msra.mxu0 %v832
    %1724 = vmatprep.subr.mxu0 0.0
    %1725 = vmatpush1.msra.mxu0 %v833
    %1726 = vmatprep.subr.mxu0 0.0
    %1727 = vmatpush1.msra.mxu0 %v834
    %1728 = vmatprep.subr.mxu0 0.0
    %1729 = vmatpush1.msra.mxu0 %v835
    %1730 = vmatprep.subr.mxu0 0.0
    %1731 = vmatpush1.msra.mxu0 %v836
    %1732 = vmatprep.subr.mxu0 0.0
    %1733 = vmatpush1.msra.mxu0 %v837
    %1734 = vmatprep.subr.mxu0 0.0
    %1735 = vmatpush1.msra.mxu0 %v838
    %1736 = vmatprep.subr.mxu0 0.0
    %1737 = vmatpush1.msra.mxu0 %v839
    %1738 = vmatprep.subr.mxu0 0.0
    %1739 = vmatpush1.msra.mxu0 %v840
    %1740 = vmatprep.subr.mxu0 0.0
    %1741 = vmatpush1.msra.mxu0 %v841
    %1742 = vmatprep.subr.mxu0 0.0
    %1743 = vmatpush1.msra.mxu0 %v842
    %1744 = vmatprep.subr.mxu0 0.0
    %1745 = vmatpush1.msra.mxu0 %v843
    %1746 = vmatprep.subr.mxu0 0.0
    %1747 = vmatpush1.msra.mxu0 %v844
    %1748 = vmatprep.subr.mxu0 0.0
    %1749 = vmatpush1.msra.mxu0 %v845
    %1750 = vmatprep.subr.mxu0 0.0
    %1751 = vmatpush1.msra.mxu0 %v846
    %1752 = vmatprep.subr.mxu0 0.0
    %1753 = vmatpush1.msra.mxu0 %v847
    %1754 = vmatprep.subr.mxu0 0.0
    %1755 = vmatpush1.msra.mxu0 %v848
    %1756 = vmatprep.subr.mxu0 0.0
    %1757 = vmatpush1.msra.mxu0 %v849
    %1758 = vmatprep.subr.mxu0 0.0
    %1759 = vmatpush1.msra.mxu0 %v850
    %1760 = vmatprep.subr.mxu0 0.0
    %1761 = vmatpush1.msra.mxu0 %v851
    %1762 = vmatprep.subr.mxu0 0.0
    %1763 = vmatpush1.msra.mxu0 %v852
    %1764 = vmatprep.subr.mxu0 0.0
    %1765 = vmatpush1.msra.mxu0 %v853
    %1766 = vmatprep.subr.mxu0 0.0
    %1767 = vmatpush1.msra.mxu0 %v854
    %1768 = vmatprep.subr.mxu0 0.0
    %1769 = vmatpush1.msra.mxu0 %v855
    %1770 = vmatprep.subr.mxu0 0.0
    %1771 = vmatpush1.msra.mxu0 %v856
    %1772 = vmatprep.subr.mxu0 0.0
    %1773 = vmatpush1.msra.mxu0 %v857
    %1774 = vmatprep.mubr.f32.mxu0 %v36
    %1775 = vmatmul.mubr.f32.gmra.mrb[0].mxu0 %v35
    %v1776 = vpop.f32.mrb[0].mxu0
    %v1777 = vadd.f32 %v1497, %v1776
    %v1778 = vpop.f32.mrb[0].mxu0
    %1779 = vmatprep.mubr.f32.mxu0 %v53
    %1780 = vmatmul.mubr.f32.gmra.mrb[0].mxu0 %v52
    %v1781 = vpop.f32.mrb[0].mxu0
    %v1782 = vadd.f32 %v1502, %v1781
    %v1783 = vpop.f32.mrb[0].mxu0
    %1784 = vmatprep.mubr.f32.mxu0 %v70
    %1785 = vmatmul.mubr.f32.gmra.mrb[0].mxu0 %v69
    %v1786 = vpop.f32.mrb[0].mxu0
    %v1787 = vadd.f32 %v1507, %v1786
    %v1788 = vpop.f32.mrb[0].mxu0
    %1789 = vmatprep.mubr.f32.mxu0 %v87
    %1790 = vmatmul.mubr.f32.gmra.mrb[0].mxu0 %v86
    %v1791 = vpop.f32.mrb[0].mxu0
    %v1792 = vadd.f32 %v1512, %v1791
    %v1793 = vpop.f32.mrb[0].mxu0
    %1794 = vmatprep.mubr.f32.mxu0 %v104
    %1795 = vmatmul.mubr.f32.gmra.mrb[0].mxu0 %v103
    %v1796 = vpop.f32.mrb[0].mxu0
    %v1797 = vadd.f32 %v1517, %v1796
    %v1798 = vpop.f32.mrb[0].mxu0
    %1799 = vmatprep.mubr.f32.mxu0 %v121
    %1800 = vmatmul.mubr.f32.gmra.mrb[0].mxu0 %v120
    %v1801 = vpop.f32.mrb[0].mxu0
    %v1802 = vadd.f32 %v1522, %v1801
    %v1803 = vpop.f32.mrb[0].mxu0
    %1804 = vmatprep.mubr.f32.mxu0 %v138
    %1805 = vmatmul.mubr.f32.gmra.mrb[0].mxu0 %v137
    %v1806 = vpop.f32.mrb[0].mxu0
    %v1807 = vadd.f32 %v1527, %v1806
    %v1808 = vpop.f32.mrb[0].mxu0
    %1809 = vmatprep.mubr.f32.mxu0 %v155
    %1810 = vmatmul.mubr.f32.gmra.mrb[0].mxu0 %v154
    %v1811 = vpop.f32.mrb[0].mxu0
    %v1812 = vadd.f32 %v1532, %v1811
    %v1813 = vpop.f32.mrb[0].mxu0
    %1814 = vmatprep.mubr.f32.mxu0 %v172
    %1815 = vmatmul.mubr.f32.gmra.mrb[0].mxu0 %v171
    %v1816 = vpop.f32.mrb[0].mxu0
    %v1817 = vadd.f32 %v1537, %v1816
    %v1818 = vpop.f32.mrb[0].mxu0
    %1819 = vmatprep.mubr.f32.mxu0 %v189
    %1820 = vmatmul.mubr.f32.gmra.mrb[0].mxu0 %v188
    %v1821 = vpop.f32.mrb[0].mxu0
    %v1822 = vadd.f32 %v1542, %v1821
    %v1823 = vpop.f32.mrb[0].mxu0
    %1824 = vmatprep.mubr.f32.mxu0 %v206
    %1825 = vmatmul.mubr.f32.gmra.mrb[0].mxu0 %v205
    %v1826 = vpop.f32.mrb[0].mxu0
    %v1827 = vadd.f32 %v1547, %v1826
    %v1828 = vpop.f32.mrb[0].mxu0
    %1829 = vmatprep.mubr.f32.mxu0 %v223
    %1830 = vmatmul.mubr.f32.gmra.mrb[0].mxu0 %v222
    %v1831 = vpop.f32.mrb[0].mxu0
    %v1832 = vadd.f32 %v1552, %v1831
    %v1833 = vpop.f32.mrb[0].mxu0
    %1834 = vmatprep.mubr.f32.mxu0 %v240
    %1835 = vmatmul.mubr.f32.gmra.mrb[0].mxu0 %v239
    %v1836 = vpop.f32.mrb[0].mxu0
    %v1837 = vadd.f32 %v1557, %v1836
    %v1838 = vpop.f32.mrb[0].mxu0
    %1839 = vmatprep.mubr.f32.mxu0 %v257
    %1840 = vmatmul.mubr.f32.gmra.mrb[0].mxu0 %v256
    %v1841 = vpop.f32.mrb[0].mxu0
    %v1842 = vadd.f32 %v1562, %v1841
    %v1843 = vpop.f32.mrb[0].mxu0
    %1844 = vmatprep.mubr.f32.mxu0 %v274
    %1845 = vmatmul.mubr.f32.gmra.mrb[0].mxu0 %v273
    %v1846 = vpop.f32.mrb[0].mxu0
    %v1847 = vadd.f32 %v1567, %v1846
    %v1848 = vpop.f32.mrb[0].mxu0
    %1849 = vmatprep.mubr.f32.mxu0 %v291
    %1850 = vmatmul.mubr.f32.gmra.mrb[0].mxu0 %v290
    %v1851 = vpop.f32.mrb[0].mxu0
    %v1852 = vadd.f32 %v1572, %v1851
    %v1853 = vpop.f32.mrb[0].mxu0
    %1854 = vmatprep.mubr.f32.mxu0 %v308
    %1855 = vmatmul.mubr.f32.gmra.mrb[0].mxu0 %v307
    %v1856 = vpop.f32.mrb[0].mxu0
    %v1857 = vadd.f32 %v1577, %v1856
    %v1858 = vpop.f32.mrb[0].mxu0
    %1859 = vmatprep.mubr.f32.mxu0 %v325
    %1860 = vmatmul.mubr.f32.gmra.mrb[0].mxu0 %v324
    %v1861 = vpop.f32.mrb[0].mxu0
    %v1862 = vadd.f32 %v1582, %v1861
    %v1863 = vpop.f32.mrb[0].mxu0
    %1864 = vmatprep.mubr.f32.mxu0 %v342
    %1865 = vmatmul.mubr.f32.gmra.mrb[0].mxu0 %v341
    %v1866 = vpop.f32.mrb[0].mxu0
    %v1867 = vadd.f32 %v1587, %v1866
    %v1868 = vpop.f32.mrb[0].mxu0
    %1869 = vmatprep.mubr.f32.mxu0 %v359
    %1870 = vmatmul.mubr.f32.gmra.mrb[0].mxu0 %v358
    %v1871 = vpop.f32.mrb[0].mxu0
    %v1872 = vadd.f32 %v1592, %v1871
    %v1873 = vpop.f32.mrb[0].mxu0
    %1874 = vmatprep.mubr.f32.mxu0 %v376
    %1875 = vmatmul.mubr.f32.gmra.mrb[0].mxu0 %v375
    %v1876 = vpop.f32.mrb[0].mxu0
    %v1877 = vadd.f32 %v1597, %v1876
    %v1878 = vpop.f32.mrb[0].mxu0
    %1879 = vmatprep.mubr.f32.mxu0 %v393
    %1880 = vmatmul.mubr.f32.gmra.mrb[0].mxu0 %v392
    %v1881 = vpop.f32.mrb[0].mxu0
    %v1882 = vadd.f32 %v1602, %v1881
    %v1883 = vpop.f32.mrb[0].mxu0
    %1884 = vmatprep.mubr.f32.mxu0 %v410
    %1885 = vmatmul.mubr.f32.gmra.mrb[0].mxu0 %v409
    %v1886 = vpop.f32.mrb[0].mxu0
    %v1887 = vadd.f32 %v1607, %v1886
    %v1888 = vpop.f32.mrb[0].mxu0
    %1889 = vmatprep.mubr.f32.mxu0 %v427
    %1890 = vmatmul.mubr.f32.gmra.mrb[0].mxu0 %v426
    %v1891 = vpop.f32.mrb[0].mxu0
    %v1892 = vadd.f32 %v1612, %v1891
    %v1893 = vpop.f32.mrb[0].mxu0
    %1894 = vmatprep.mubr.f32.mxu0 %v444
    %1895 = vmatmul.mubr.f32.gmra.mrb[0].mxu0 %v443
    %v1896 = vpop.f32.mrb[0].mxu0
    %v1897 = vadd.f32 %v1617, %v1896
    %v1898 = vpop.f32.mrb[0].mxu0
    %1899 = vmatprep.mubr.f32.mxu0 %v461
    %1900 = vmatmul.mubr.f32.gmra.mrb[0].mxu0 %v460
    %v1901 = vpop.f32.mrb[0].mxu0
    %v1902 = vadd.f32 %v1622, %v1901
    %v1903 = vpop.f32.mrb[0].mxu0
    %1904 = vmatprep.mubr.f32.mxu0 %v478
    %1905 = vmatmul.mubr.f32.gmra.mrb[0].mxu0 %v477
    %v1906 = vpop.f32.mrb[0].mxu0
    %v1907 = vadd.f32 %v1627, %v1906
    %v1908 = vpop.f32.mrb[0].mxu0
    %1909 = vmatprep.mubr.f32.mxu0 %v495
    %1910 = vmatmul.mubr.f32.gmra.mrb[0].mxu0 %v494
    %v1911 = vpop.f32.mrb[0].mxu0
    %v1912 = vadd.f32 %v1632, %v1911
    %v1913 = vpop.f32.mrb[0].mxu0
    %1914 = vmatprep.mubr.f32.mxu0 %v512
    %1915 = vmatmul.mubr.f32.gmra.mrb[0].mxu0 %v511
    %v1916 = vpop.f32.mrb[0].mxu0
    %v1917 = vadd.f32 %v1637, %v1916
    %v1918 = vpop.f32.mrb[0].mxu0
    %1919 = vmatprep.mubr.f32.mxu0 %v529
    %1920 = vmatmul.mubr.f32.gmra.mrb[0].mxu0 %v528
    %v1921 = vpop.f32.mrb[0].mxu0
    %v1922 = vadd.f32 %v1642, %v1921
    %v1923 = vpop.f32.mrb[0].mxu0
    %1924 = vmatprep.mubr.f32.mxu0 %v546
    %1925 = vmatmul.mubr.f32.gmra.mrb[0].mxu0 %v545
    %v1926 = vpop.f32.mrb[0].mxu0
    %v1927 = vadd.f32 %v1647, %v1926
    %v1928 = vpop.f32.mrb[0].mxu0
    %1929 = vmatprep.mubr.f32.mxu0 %v563
    %1930 = vmatmul.mubr.f32.gmra.mrb[0].mxu0 %v562
    %v1931 = vpop.f32.mrb[0].mxu0
    %v1932 = vadd.f32 %v1652, %v1931
    %v1933 = vpop.f32.mrb[0].mxu0
    %1934 = vmatprep.mubr.f32.mxu0 %v580
    %1935 = vmatmul.mubr.f32.gmra.mrb[0].mxu0 %v579
    %v1936 = vpop.f32.mrb[0].mxu0
    %v1937 = vadd.f32 %v1657, %v1936
    %v1938 = vpop.f32.mrb[0].mxu0
    %1939 = vmatprep.mubr.f32.mxu0 %v597
    %1940 = vmatmul.mubr.f32.gmra.mrb[0].mxu0 %v596
    %v1941 = vpop.f32.mrb[0].mxu0
    %v1942 = vadd.f32 %v1662, %v1941
    %v1943 = vpop.f32.mrb[0].mxu0
    %1944 = vmatprep.mubr.f32.mxu0 %v614
    %1945 = vmatmul.mubr.f32.gmra.mrb[0].mxu0 %v613
    %v1946 = vpop.f32.mrb[0].mxu0
    %v1947 = vadd.f32 %v1667, %v1946
    %v1948 = vpop.f32.mrb[0].mxu0
    %1949 = vmatprep.mubr.f32.mxu0 %v631
    %1950 = vmatmul.mubr.f32.gmra.mrb[0].mxu0 %v630
    %v1951 = vpop.f32.mrb[0].mxu0
    %v1952 = vadd.f32 %v1672, %v1951
    %v1953 = vpop.f32.mrb[0].mxu0
    %1954 = vmatprep.mubr.f32.mxu0 %v648
    %1955 = vmatmul.mubr.f32.gmra.mrb[0].mxu0 %v647
    %v1956 = vpop.f32.mrb[0].mxu0
    %v1957 = vadd.f32 %v1677, %v1956
    %v1958 = vpop.f32.mrb[0].mxu0
    %1959 = vmatprep.mubr.f32.mxu0 %v665
    %1960 = vmatmul.mubr.f32.gmra.mrb[0].mxu0 %v664
    %v1961 = vpop.f32.mrb[0].mxu0
    %v1962 = vadd.f32 %v1682, %v1961
    %v1963 = vpop.f32.mrb[0].mxu0
    %1964 = vmatprep.mubr.f32.mxu0 %v682
    %1965 = vmatmul.mubr.f32.gmra.mrb[0].mxu0 %v681
    %v1966 = vpop.f32.mrb[0].mxu0
    %v1967 = vadd.f32 %v1687, %v1966
    %v1968 = vpop.f32.mrb[0].mxu0
    %1969 = vmatprep.mubr.f32.mxu0 %v699
    %1970 = vmatmul.mubr.f32.gmra.mrb[0].mxu0 %v698
    %v1971 = vpop.f32.mrb[0].mxu0
    %v1972 = vadd.f32 %v1692, %v1971
    %v1973 = vpop.f32.mrb[0].mxu0
    %1974 = vmatprep.mubr.f32.mxu0 %v716
    %1975 = vmatmul.mubr.f32.gmra.mrb[0].mxu0 %v715
    %v1976 = vpop.f32.mrb[0].mxu0
    %v1977 = vadd.f32 %v1697, %v1976
    %v1978 = vpop.f32.mrb[0].mxu0
    %1979 = vmatprep.mubr.f32.mxu0 %v733
    %1980 = vmatmul.mubr.f32.gmra.mrb[0].mxu0 %v732
    %v1981 = vpop.f32.mrb[0].mxu0
    %v1982 = vadd.f32 %v1702, %v1981
    %v1983 = vpop.f32.mrb[0].mxu0
    %1984 = vmatprep.mubr.f32.mxu0 %v750
    %1985 = vmatmul.mubr.f32.gmra.mrb[0].mxu0 %v749
    %v1986 = vpop.f32.mrb[0].mxu0
    %v1987 = vadd.f32 %v1707, %v1986
    %v1988 = vpop.f32.mrb[0].mxu0
    %1989 = vdwg.mxu0
    %1990 = vmatprep.subr.mxu0 0.0
    %1991 = vmatpush1.msra.mxu0 %v858
    %1992 = vmatprep.subr.mxu0 0.0
    %1993 = vmatpush1.msra.mxu0 %v859
    %1994 = vmatprep.subr.mxu0 0.0
    %1995 = vmatpush1.msra.mxu0 %v860
    %1996 = vmatprep.subr.mxu0 0.0
    %1997 = vmatpush1.msra.mxu0 %v861
    %1998 = vmatprep.subr.mxu0 0.0
    %1999 = vmatpush1.msra.mxu0 %v862
    %2000 = vmatprep.subr.mxu0 0.0
    %2001 = vmatpush1.msra.mxu0 %v863
    %2002 = vmatprep.subr.mxu0 0.0
    %2003 = vmatpush1.msra.mxu0 %v864
    %2004 = vmatprep.subr.mxu0 0.0
    %2005 = vmatpush1.msra.mxu0 %v865
    %2006 = vmatprep.subr.mxu0 0.0
    %2007 = vmatpush1.msra.mxu0 %v866
    %2008 = vmatprep.subr.mxu0 0.0
    %2009 = vmatpush1.msra.mxu0 %v867
    %2010 = vmatprep.subr.mxu0 0.0
    %2011 = vmatpush1.msra.mxu0 %v868
    %2012 = vmatprep.subr.mxu0 0.0
    %2013 = vmatpush1.msra.mxu0 %v869
    %2014 = vmatprep.subr.mxu0 0.0
    %2015 = vmatpush1.msra.mxu0 %v870
    %2016 = vmatprep.subr.mxu0 0.0
    %2017 = vmatpush1.msra.mxu0 %v871
    %2018 = vmatprep.subr.mxu0 0.0
    %2019 = vmatpush1.msra.mxu0 %v872
    %2020 = vmatprep.subr.mxu0 0.0
    %2021 = vmatpush1.msra.mxu0 %v873
    %2022 = vmatprep.subr.mxu0 0.0
    %2023 = vmatpush1.msra.mxu0 %v874
    %2024 = vmatprep.subr.mxu0 0.0
    %2025 = vmatpush1.msra.mxu0 %v875
    %2026 = vmatprep.subr.mxu0 0.0
    %2027 = vmatpush1.msra.mxu0 %v876
    %2028 = vmatprep.subr.mxu0 0.0
    %2029 = vmatpush1.msra.mxu0 %v877
    %2030 = vmatprep.subr.mxu0 0.0
    %2031 = vmatpush1.msra.mxu0 %v878
    %2032 = vmatprep.subr.mxu0 0.0
    %2033 = vmatpush1.msra.mxu0 %v879
    %2034 = vmatprep.subr.mxu0 0.0
    %2035 = vmatpush1.msra.mxu0 %v880
    %2036 = vmatprep.subr.mxu0 0.0
    %2037 = vmatpush1.msra.mxu0 %v881
    %2038 = vmatprep.subr.mxu0 0.0
    %2039 = vmatpush1.msra.mxu0 %v882
    %2040 = vmatprep.subr.mxu0 0.0
    %2041 = vmatpush1.msra.mxu0 %v883
    %2042 = vmatprep.subr.mxu0 0.0
    %2043 = vmatpush1.msra.mxu0 %v884
    %2044 = vmatprep.subr.mxu0 0.0
    %2045 = vmatpush1.msra.mxu0 %v885
    %2046 = vmatprep.subr.mxu0 0.0
    %2047 = vmatpush1.msra.mxu0 %v886
    %2048 = vmatprep.subr.mxu0 0.0
    %2049 = vmatpush1.msra.mxu0 %v887
    %2050 = vmatprep.subr.mxu0 0.0
    %2051 = vmatpush1.msra.mxu0 %v888
    %2052 = vmatprep.subr.mxu0 0.0
    %2053 = vmatpush1.msra.mxu0 %v889
    %2054 = vmatprep.mubr.f32.mxu0 %v38
    %2055 = vmatmul.mubr.f32.gmra.mrb[0].mxu0 %v37
    %v2056 = vpop.f32.mrb[0].mxu0
    %v2057 = vadd.f32 %v1777, %v2056
    %v2058 = vpop.f32.mrb[0].mxu0
    %2059 = vmatprep.mubr.f32.mxu0 %v55
    %2060 = vmatmul.mubr.f32.gmra.mrb[0].mxu0 %v54
    %v2061 = vpop.f32.mrb[0].mxu0
    %v2062 = vadd.f32 %v1782, %v2061
    %v2063 = vpop.f32.mrb[0].mxu0
    %2064 = vmatprep.mubr.f32.mxu0 %v72
    %2065 = vmatmul.mubr.f32.gmra.mrb[0].mxu0 %v71
    %v2066 = vpop.f32.mrb[0].mxu0
    %v2067 = vadd.f32 %v1787, %v2066
    %v2068 = vpop.f32.mrb[0].mxu0
    %2069 = vmatprep.mubr.f32.mxu0 %v89
    %2070 = vmatmul.mubr.f32.gmra.mrb[0].mxu0 %v88
    %v2071 = vpop.f32.mrb[0].mxu0
    %v2072 = vadd.f32 %v1792, %v2071
    %v2073 = vpop.f32.mrb[0].mxu0
    %2074 = vmatprep.mubr.f32.mxu0 %v106
    %2075 = vmatmul.mubr.f32.gmra.mrb[0].mxu0 %v105
    %v2076 = vpop.f32.mrb[0].mxu0
    %v2077 = vadd.f32 %v1797, %v2076
    %v2078 = vpop.f32.mrb[0].mxu0
    %2079 = vmatprep.mubr.f32.mxu0 %v123
    %2080 = vmatmul.mubr.f32.gmra.mrb[0].mxu0 %v122
    %v2081 = vpop.f32.mrb[0].mxu0
    %v2082 = vadd.f32 %v1802, %v2081
    %v2083 = vpop.f32.mrb[0].mxu0
    %2084 = vmatprep.mubr.f32.mxu0 %v140
    %2085 = vmatmul.mubr.f32.gmra.mrb[0].mxu0 %v139
    %v2086 = vpop.f32.mrb[0].mxu0
    %v2087 = vadd.f32 %v1807, %v2086
    %v2088 = vpop.f32.mrb[0].mxu0
    %2089 = vmatprep.mubr.f32.mxu0 %v157
    %2090 = vmatmul.mubr.f32.gmra.mrb[0].mxu0 %v156
    %v2091 = vpop.f32.mrb[0].mxu0
    %v2092 = vadd.f32 %v1812, %v2091
    %v2093 = vpop.f32.mrb[0].mxu0
    %2094 = vmatprep.mubr.f32.mxu0 %v174
    %2095 = vmatmul.mubr.f32.gmra.mrb[0].mxu0 %v173
    %v2096 = vpop.f32.mrb[0].mxu0
    %v2097 = vadd.f32 %v1817, %v2096
    %v2098 = vpop.f32.mrb[0].mxu0
    %2099 = vmatprep.mubr.f32.mxu0 %v191
    %2100 = vmatmul.mubr.f32.gmra.mrb[0].mxu0 %v190
    %v2101 = vpop.f32.mrb[0].mxu0
    %v2102 = vadd.f32 %v1822, %v2101
    %v2103 = vpop.f32.mrb[0].mxu0
    %2104 = vmatprep.mubr.f32.mxu0 %v208
    %2105 = vmatmul.mubr.f32.gmra.mrb[0].mxu0 %v207
    %v2106 = vpop.f32.mrb[0].mxu0
    %v2107 = vadd.f32 %v1827, %v2106
    %v2108 = vpop.f32.mrb[0].mxu0
    %2109 = vmatprep.mubr.f32.mxu0 %v225
    %2110 = vmatmul.mubr.f32.gmra.mrb[0].mxu0 %v224
    %v2111 = vpop.f32.mrb[0].mxu0
    %v2112 = vadd.f32 %v1832, %v2111
    %v2113 = vpop.f32.mrb[0].mxu0
    %2114 = vmatprep.mubr.f32.mxu0 %v242
    %2115 = vmatmul.mubr.f32.gmra.mrb[0].mxu0 %v241
    %v2116 = vpop.f32.mrb[0].mxu0
    %v2117 = vadd.f32 %v1837, %v2116
    %v2118 = vpop.f32.mrb[0].mxu0
    %2119 = vmatprep.mubr.f32.mxu0 %v259
    %2120 = vmatmul.mubr.f32.gmra.mrb[0].mxu0 %v258
    %v2121 = vpop.f32.mrb[0].mxu0
    %v2122 = vadd.f32 %v1842, %v2121
    %v2123 = vpop.f32.mrb[0].mxu0
    %2124 = vmatprep.mubr.f32.mxu0 %v276
    %2125 = vmatmul.mubr.f32.gmra.mrb[0].mxu0 %v275
    %v2126 = vpop.f32.mrb[0].mxu0
    %v2127 = vadd.f32 %v1847, %v2126
    %v2128 = vpop.f32.mrb[0].mxu0
    %2129 = vmatprep.mubr.f32.mxu0 %v293
    %2130 = vmatmul.mubr.f32.gmra.mrb[0].mxu0 %v292
    %v2131 = vpop.f32.mrb[0].mxu0
    %v2132 = vadd.f32 %v1852, %v2131
    %v2133 = vpop.f32.mrb[0].mxu0
    %2134 = vmatprep.mubr.f32.mxu0 %v310
    %2135 = vmatmul.mubr.f32.gmra.mrb[0].mxu0 %v309
    %v2136 = vpop.f32.mrb[0].mxu0
    %v2137 = vadd.f32 %v1857, %v2136
    %v2138 = vpop.f32.mrb[0].mxu0
    %2139 = vmatprep.mubr.f32.mxu0 %v327
    %2140 = vmatmul.mubr.f32.gmra.mrb[0].mxu0 %v326
    %v2141 = vpop.f32.mrb[0].mxu0
    %v2142 = vadd.f32 %v1862, %v2141
    %v2143 = vpop.f32.mrb[0].mxu0
    %2144 = vmatprep.mubr.f32.mxu0 %v344
    %2145 = vmatmul.mubr.f32.gmra.mrb[0].mxu0 %v343
    %v2146 = vpop.f32.mrb[0].mxu0
    %v2147 = vadd.f32 %v1867, %v2146
    %v2148 = vpop.f32.mrb[0].mxu0
    %2149 = vmatprep.mubr.f32.mxu0 %v361
    %2150 = vmatmul.mubr.f32.gmra.mrb[0].mxu0 %v360
    %v2151 = vpop.f32.mrb[0].mxu0
    %v2152 = vadd.f32 %v1872, %v2151
    %v2153 = vpop.f32.mrb[0].mxu0
    %2154 = vmatprep.mubr.f32.mxu0 %v378
    %2155 = vmatmul.mubr.f32.gmra.mrb[0].mxu0 %v377
    %v2156 = vpop.f32.mrb[0].mxu0
    %v2157 = vadd.f32 %v1877, %v2156
    %v2158 = vpop.f32.mrb[0].mxu0
    %2159 = vmatprep.mubr.f32.mxu0 %v395
    %2160 = vmatmul.mubr.f32.gmra.mrb[0].mxu0 %v394
    %v2161 = vpop.f32.mrb[0].mxu0
    %v2162 = vadd.f32 %v1882, %v2161
    %v2163 = vpop.f32.mrb[0].mxu0
    %2164 = vmatprep.mubr.f32.mxu0 %v412
    %2165 = vmatmul.mubr.f32.gmra.mrb[0].mxu0 %v411
    %v2166 = vpop.f32.mrb[0].mxu0
    %v2167 = vadd.f32 %v1887, %v2166
    %v2168 = vpop.f32.mrb[0].mxu0
    %2169 = vmatprep.mubr.f32.mxu0 %v429
    %2170 = vmatmul.mubr.f32.gmra.mrb[0].mxu0 %v428
    %v2171 = vpop.f32.mrb[0].mxu0
    %v2172 = vadd.f32 %v1892, %v2171
    %v2173 = vpop.f32.mrb[0].mxu0
    %2174 = vmatprep.mubr.f32.mxu0 %v446
    %2175 = vmatmul.mubr.f32.gmra.mrb[0].mxu0 %v445
    %v2176 = vpop.f32.mrb[0].mxu0
    %v2177 = vadd.f32 %v1897, %v2176
    %v2178 = vpop.f32.mrb[0].mxu0
    %2179 = vmatprep.mubr.f32.mxu0 %v463
    %2180 = vmatmul.mubr.f32.gmra.mrb[0].mxu0 %v462
    %v2181 = vpop.f32.mrb[0].mxu0
    %v2182 = vadd.f32 %v1902, %v2181
    %v2183 = vpop.f32.mrb[0].mxu0
    %2184 = vmatprep.mubr.f32.mxu0 %v480
    %2185 = vmatmul.mubr.f32.gmra.mrb[0].mxu0 %v479
    %v2186 = vpop.f32.mrb[0].mxu0
    %v2187 = vadd.f32 %v1907, %v2186
    %v2188 = vpop.f32.mrb[0].mxu0
    %2189 = vmatprep.mubr.f32.mxu0 %v497
    %2190 = vmatmul.mubr.f32.gmra.mrb[0].mxu0 %v496
    %v2191 = vpop.f32.mrb[0].mxu0
    %v2192 = vadd.f32 %v1912, %v2191
    %v2193 = vpop.f32.mrb[0].mxu0
    %2194 = vmatprep.mubr.f32.mxu0 %v514
    %2195 = vmatmul.mubr.f32.gmra.mrb[0].mxu0 %v513
    %v2196 = vpop.f32.mrb[0].mxu0
    %v2197 = vadd.f32 %v1917, %v2196
    %v2198 = vpop.f32.mrb[0].mxu0
    %2199 = vmatprep.mubr.f32.mxu0 %v531
    %2200 = vmatmul.mubr.f32.gmra.mrb[0].mxu0 %v530
    %v2201 = vpop.f32.mrb[0].mxu0
    %v2202 = vadd.f32 %v1922, %v2201
    %v2203 = vpop.f32.mrb[0].mxu0
    %2204 = vmatprep.mubr.f32.mxu0 %v548
    %2205 = vmatmul.mubr.f32.gmra.mrb[0].mxu0 %v547
    %v2206 = vpop.f32.mrb[0].mxu0
    %v2207 = vadd.f32 %v1927, %v2206
    %v2208 = vpop.f32.mrb[0].mxu0
    %2209 = vmatprep.mubr.f32.mxu0 %v565
    %2210 = vmatmul.mubr.f32.gmra.mrb[0].mxu0 %v564
    %v2211 = vpop.f32.mrb[0].mxu0
    %v2212 = vadd.f32 %v1932, %v2211
    %v2213 = vpop.f32.mrb[0].mxu0
    %2214 = vmatprep.mubr.f32.mxu0 %v582
    %2215 = vmatmul.mubr.f32.gmra.mrb[0].mxu0 %v581
    %v2216 = vpop.f32.mrb[0].mxu0
    %v2217 = vadd.f32 %v1937, %v2216
    %v2218 = vpop.f32.mrb[0].mxu0
    %2219 = vmatprep.mubr.f32.mxu0 %v599
    %2220 = vmatmul.mubr.f32.gmra.mrb[0].mxu0 %v598
    %v2221 = vpop.f32.mrb[0].mxu0
    %v2222 = vadd.f32 %v1942, %v2221
    %v2223 = vpop.f32.mrb[0].mxu0
    %2224 = vmatprep.mubr.f32.mxu0 %v616
    %2225 = vmatmul.mubr.f32.gmra.mrb[0].mxu0 %v615
    %v2226 = vpop.f32.mrb[0].mxu0
    %v2227 = vadd.f32 %v1947, %v2226
    %v2228 = vpop.f32.mrb[0].mxu0
    %2229 = vmatprep.mubr.f32.mxu0 %v633
    %2230 = vmatmul.mubr.f32.gmra.mrb[0].mxu0 %v632
    %v2231 = vpop.f32.mrb[0].mxu0
    %v2232 = vadd.f32 %v1952, %v2231
    %v2233 = vpop.f32.mrb[0].mxu0
    %2234 = vmatprep.mubr.f32.mxu0 %v650
    %2235 = vmatmul.mubr.f32.gmra.mrb[0].mxu0 %v649
    %v2236 = vpop.f32.mrb[0].mxu0
    %v2237 = vadd.f32 %v1957, %v2236
    %v2238 = vpop.f32.mrb[0].mxu0
    %2239 = vmatprep.mubr.f32.mxu0 %v667
    %2240 = vmatmul.mubr.f32.gmra.mrb[0].mxu0 %v666
    %v2241 = vpop.f32.mrb[0].mxu0
    %v2242 = vadd.f32 %v1962, %v2241
    %v2243 = vpop.f32.mrb[0].mxu0
    %2244 = vmatprep.mubr.f32.mxu0 %v684
    %2245 = vmatmul.mubr.f32.gmra.mrb[0].mxu0 %v683
    %v2246 = vpop.f32.mrb[0].mxu0
    %v2247 = vadd.f32 %v1967, %v2246
    %v2248 = vpop.f32.mrb[0].mxu0
    %2249 = vmatprep.mubr.f32.mxu0 %v701
    %2250 = vmatmul.mubr.f32.gmra.mrb[0].mxu0 %v700
    %v2251 = vpop.f32.mrb[0].mxu0
    %v2252 = vadd.f32 %v1972, %v2251
    %v2253 = vpop.f32.mrb[0].mxu0
    %2254 = vmatprep.mubr.f32.mxu0 %v718
    %2255 = vmatmul.mubr.f32.gmra.mrb[0].mxu0 %v717
    %v2256 = vpop.f32.mrb[0].mxu0
    %v2257 = vadd.f32 %v1977, %v2256
    %v2258 = vpop.f32.mrb[0].mxu0
    %2259 = vmatprep.mubr.f32.mxu0 %v735
    %2260 = vmatmul.mubr.f32.gmra.mrb[0].mxu0 %v734
    %v2261 = vpop.f32.mrb[0].mxu0
    %v2262 = vadd.f32 %v1982, %v2261
    %v2263 = vpop.f32.mrb[0].mxu0
    %2264 = vmatprep.mubr.f32.mxu0 %v752
    %2265 = vmatmul.mubr.f32.gmra.mrb[0].mxu0 %v751
    %v2266 = vpop.f32.mrb[0].mxu0
    %v2267 = vadd.f32 %v1987, %v2266
    %v2268 = vpop.f32.mrb[0].mxu0
    %2269 = vdwg.mxu0
    %2270 = vmatprep.subr.mxu0 0.0
    %2271 = vmatpush1.msra.mxu0 %v890
    %2272 = vmatprep.subr.mxu0 0.0
    %2273 = vmatpush1.msra.mxu0 %v891
    %2274 = vmatprep.subr.mxu0 0.0
    %2275 = vmatpush1.msra.mxu0 %v892
    %2276 = vmatprep.subr.mxu0 0.0
    %2277 = vmatpush1.msra.mxu0 %v893
    %2278 = vmatprep.subr.mxu0 0.0
    %2279 = vmatpush1.msra.mxu0 %v894
    %2280 = vmatprep.subr.mxu0 0.0
    %2281 = vmatpush1.msra.mxu0 %v895
    %2282 = vmatprep.subr.mxu0 0.0
    %2283 = vmatpush1.msra.mxu0 %v896
    %2284 = vmatprep.subr.mxu0 0.0
    %2285 = vmatpush1.msra.mxu0 %v897
    %2286 = vmatprep.subr.mxu0 0.0
    %2287 = vmatpush1.msra.mxu0 %v898
    %2288 = vmatprep.subr.mxu0 0.0
    %2289 = vmatpush1.msra.mxu0 %v899
    %2290 = vmatprep.subr.mxu0 0.0
    %2291 = vmatpush1.msra.mxu0 %v900
    %2292 = vmatprep.subr.mxu0 0.0
    %2293 = vmatpush1.msra.mxu0 %v901
    %2294 = vmatprep.subr.mxu0 0.0
    %2295 = vmatpush1.msra.mxu0 %v902
    %2296 = vmatprep.subr.mxu0 0.0
    %2297 = vmatpush1.msra.mxu0 %v903
    %2298 = vmatprep.subr.mxu0 0.0
    %2299 = vmatpush1.msra.mxu0 %v904
    %2300 = vmatprep.subr.mxu0 0.0
    %2301 = vmatpush1.msra.mxu0 %v905
    %2302 = vmatprep.subr.mxu0 0.0
    %2303 = vmatpush1.msra.mxu0 %v906
    %2304 = vmatprep.subr.mxu0 0.0
    %2305 = vmatpush1.msra.mxu0 %v907
    %2306 = vmatprep.subr.mxu0 0.0
    %2307 = vmatpush1.msra.mxu0 %v908
    %2308 = vmatprep.subr.mxu0 0.0
    %2309 = vmatpush1.msra.mxu0 %v909
    %2310 = vmatprep.subr.mxu0 0.0
    %2311 = vmatpush1.msra.mxu0 %v910
    %2312 = vmatprep.subr.mxu0 0.0
    %2313 = vmatpush1.msra.mxu0 %v911
    %2314 = vmatprep.subr.mxu0 0.0
    %2315 = vmatpush1.msra.mxu0 %v912
    %2316 = vmatprep.subr.mxu0 0.0
    %2317 = vmatpush1.msra.mxu0 %v913
    %2318 = vmatprep.subr.mxu0 0.0
    %2319 = vmatpush1.msra.mxu0 %v914
    %2320 = vmatprep.subr.mxu0 0.0
    %2321 = vmatpush1.msra.mxu0 %v915
    %2322 = vmatprep.subr.mxu0 0.0
    %2323 = vmatpush1.msra.mxu0 %v916
    %2324 = vmatprep.subr.mxu0 0.0
    %2325 = vmatpush1.msra.mxu0 %v917
    %2326 = vmatprep.subr.mxu0 0.0
    %2327 = vmatpush1.msra.mxu0 %v918
    %2328 = vmatprep.subr.mxu0 0.0
    %2329 = vmatpush1.msra.mxu0 %v919
    %2330 = vmatprep.subr.mxu0 0.0
    %2331 = vmatpush1.msra.mxu0 %v920
    %2332 = vmatprep.subr.mxu0 0.0
    %2333 = vmatpush1.msra.mxu0 %v921
    %2334 = vmatprep.mubr.f32.mxu0 %v40
    %2335 = vmatmul.mubr.f32.gmra.mrb[0].mxu0 %v39
    %v2336 = vpop.f32.mrb[0].mxu0
    %v2337 = vadd.f32 %v2057, %v2336
    %v2338 = vpop.f32.mrb[0].mxu0
    %2339 = vmatprep.mubr.f32.mxu0 %v57
    %2340 = vmatmul.mubr.f32.gmra.mrb[0].mxu0 %v56
    %v2341 = vpop.f32.mrb[0].mxu0
    %v2342 = vadd.f32 %v2062, %v2341
    %v2343 = vpop.f32.mrb[0].mxu0
    %2344 = vmatprep.mubr.f32.mxu0 %v74
    %2345 = vmatmul.mubr.f32.gmra.mrb[0].mxu0 %v73
    %v2346 = vpop.f32.mrb[0].mxu0
    %v2347 = vadd.f32 %v2067, %v2346
    %v2348 = vpop.f32.mrb[0].mxu0
    %2349 = vmatprep.mubr.f32.mxu0 %v91
    %2350 = vmatmul.mubr.f32.gmra.mrb[0].mxu0 %v90
    %v2351 = vpop.f32.mrb[0].mxu0
    %v2352 = vadd.f32 %v2072, %v2351
    %v2353 = vpop.f32.mrb[0].mxu0
    %2354 = vmatprep.mubr.f32.mxu0 %v108
    %2355 = vmatmul.mubr.f32.gmra.mrb[0].mxu0 %v107
    %v2356 = vpop.f32.mrb[0].mxu0
    %v2357 = vadd.f32 %v2077, %v2356
    %v2358 = vpop.f32.mrb[0].mxu0
    %2359 = vmatprep.mubr.f32.mxu0 %v125
    %2360 = vmatmul.mubr.f32.gmra.mrb[0].mxu0 %v124
    %v2361 = vpop.f32.mrb[0].mxu0
    %v2362 = vadd.f32 %v2082, %v2361
    %v2363 = vpop.f32.mrb[0].mxu0
    %2364 = vmatprep.mubr.f32.mxu0 %v142
    %2365 = vmatmul.mubr.f32.gmra.mrb[0].mxu0 %v141
    %v2366 = vpop.f32.mrb[0].mxu0
    %v2367 = vadd.f32 %v2087, %v2366
    %v2368 = vpop.f32.mrb[0].mxu0
    %2369 = vmatprep.mubr.f32.mxu0 %v159
    %2370 = vmatmul.mubr.f32.gmra.mrb[0].mxu0 %v158
    %v2371 = vpop.f32.mrb[0].mxu0
    %v2372 = vadd.f32 %v2092, %v2371
    %v2373 = vpop.f32.mrb[0].mxu0
    %2374 = vmatprep.mubr.f32.mxu0 %v176
    %2375 = vmatmul.mubr.f32.gmra.mrb[0].mxu0 %v175
    %v2376 = vpop.f32.mrb[0].mxu0
    %v2377 = vadd.f32 %v2097, %v2376
    %v2378 = vpop.f32.mrb[0].mxu0
    %2379 = vmatprep.mubr.f32.mxu0 %v193
    %2380 = vmatmul.mubr.f32.gmra.mrb[0].mxu0 %v192
    %v2381 = vpop.f32.mrb[0].mxu0
    %v2382 = vadd.f32 %v2102, %v2381
    %v2383 = vpop.f32.mrb[0].mxu0
    %2384 = vmatprep.mubr.f32.mxu0 %v210
    %2385 = vmatmul.mubr.f32.gmra.mrb[0].mxu0 %v209
    %v2386 = vpop.f32.mrb[0].mxu0
    %v2387 = vadd.f32 %v2107, %v2386
    %v2388 = vpop.f32.mrb[0].mxu0
    %2389 = vmatprep.mubr.f32.mxu0 %v227
    %2390 = vmatmul.mubr.f32.gmra.mrb[0].mxu0 %v226
    %v2391 = vpop.f32.mrb[0].mxu0
    %v2392 = vadd.f32 %v2112, %v2391
    %v2393 = vpop.f32.mrb[0].mxu0
    %2394 = vmatprep.mubr.f32.mxu0 %v244
    %2395 = vmatmul.mubr.f32.gmra.mrb[0].mxu0 %v243
    %v2396 = vpop.f32.mrb[0].mxu0
    %v2397 = vadd.f32 %v2117, %v2396
    %v2398 = vpop.f32.mrb[0].mxu0
    %2399 = vmatprep.mubr.f32.mxu0 %v261
    %2400 = vmatmul.mubr.f32.gmra.mrb[0].mxu0 %v260
    %v2401 = vpop.f32.mrb[0].mxu0
    %v2402 = vadd.f32 %v2122, %v2401
    %v2403 = vpop.f32.mrb[0].mxu0
    %2404 = vmatprep.mubr.f32.mxu0 %v278
    %2405 = vmatmul.mubr.f32.gmra.mrb[0].mxu0 %v277
    %v2406 = vpop.f32.mrb[0].mxu0
    %v2407 = vadd.f32 %v2127, %v2406
    %v2408 = vpop.f32.mrb[0].mxu0
    %2409 = vmatprep.mubr.f32.mxu0 %v295
    %2410 = vmatmul.mubr.f32.gmra.mrb[0].mxu0 %v294
    %v2411 = vpop.f32.mrb[0].mxu0
    %v2412 = vadd.f32 %v2132, %v2411
    %v2413 = vpop.f32.mrb[0].mxu0
    %2414 = vmatprep.mubr.f32.mxu0 %v312
    %2415 = vmatmul.mubr.f32.gmra.mrb[0].mxu0 %v311
    %v2416 = vpop.f32.mrb[0].mxu0
    %v2417 = vadd.f32 %v2137, %v2416
    %v2418 = vpop.f32.mrb[0].mxu0
    %2419 = vmatprep.mubr.f32.mxu0 %v329
    %2420 = vmatmul.mubr.f32.gmra.mrb[0].mxu0 %v328
    %v2421 = vpop.f32.mrb[0].mxu0
    %v2422 = vadd.f32 %v2142, %v2421
    %v2423 = vpop.f32.mrb[0].mxu0
    %2424 = vmatprep.mubr.f32.mxu0 %v346
    %2425 = vmatmul.mubr.f32.gmra.mrb[0].mxu0 %v345
    %v2426 = vpop.f32.mrb[0].mxu0
    %v2427 = vadd.f32 %v2147, %v2426
    %v2428 = vpop.f32.mrb[0].mxu0
    %2429 = vmatprep.mubr.f32.mxu0 %v363
    %2430 = vmatmul.mubr.f32.gmra.mrb[0].mxu0 %v362
    %v2431 = vpop.f32.mrb[0].mxu0
    %v2432 = vadd.f32 %v2152, %v2431
    %v2433 = vpop.f32.mrb[0].mxu0
    %2434 = vmatprep.mubr.f32.mxu0 %v380
    %2435 = vmatmul.mubr.f32.gmra.mrb[0].mxu0 %v379
    %v2436 = vpop.f32.mrb[0].mxu0
    %v2437 = vadd.f32 %v2157, %v2436
    %v2438 = vpop.f32.mrb[0].mxu0
    %2439 = vmatprep.mubr.f32.mxu0 %v397
    %2440 = vmatmul.mubr.f32.gmra.mrb[0].mxu0 %v396
    %v2441 = vpop.f32.mrb[0].mxu0
    %v2442 = vadd.f32 %v2162, %v2441
    %v2443 = vpop.f32.mrb[0].mxu0
    %2444 = vmatprep.mubr.f32.mxu0 %v414
    %2445 = vmatmul.mubr.f32.gmra.mrb[0].mxu0 %v413
    %v2446 = vpop.f32.mrb[0].mxu0
    %v2447 = vadd.f32 %v2167, %v2446
    %v2448 = vpop.f32.mrb[0].mxu0
    %2449 = vmatprep.mubr.f32.mxu0 %v431
    %2450 = vmatmul.mubr.f32.gmra.mrb[0].mxu0 %v430
    %v2451 = vpop.f32.mrb[0].mxu0
    %v2452 = vadd.f32 %v2172, %v2451
    %v2453 = vpop.f32.mrb[0].mxu0
    %2454 = vmatprep.mubr.f32.mxu0 %v448
    %2455 = vmatmul.mubr.f32.gmra.mrb[0].mxu0 %v447
    %v2456 = vpop.f32.mrb[0].mxu0
    %v2457 = vadd.f32 %v2177, %v2456
    %v2458 = vpop.f32.mrb[0].mxu0
    %2459 = vmatprep.mubr.f32.mxu0 %v465
    %2460 = vmatmul.mubr.f32.gmra.mrb[0].mxu0 %v464
    %v2461 = vpop.f32.mrb[0].mxu0
    %v2462 = vadd.f32 %v2182, %v2461
    %v2463 = vpop.f32.mrb[0].mxu0
    %2464 = vmatprep.mubr.f32.mxu0 %v482
    %2465 = vmatmul.mubr.f32.gmra.mrb[0].mxu0 %v481
    %v2466 = vpop.f32.mrb[0].mxu0
    %v2467 = vadd.f32 %v2187, %v2466
    %v2468 = vpop.f32.mrb[0].mxu0
    %2469 = vmatprep.mubr.f32.mxu0 %v499
    %2470 = vmatmul.mubr.f32.gmra.mrb[0].mxu0 %v498
    %v2471 = vpop.f32.mrb[0].mxu0
    %v2472 = vadd.f32 %v2192, %v2471
    %v2473 = vpop.f32.mrb[0].mxu0
    %2474 = vmatprep.mubr.f32.mxu0 %v516
    %2475 = vmatmul.mubr.f32.gmra.mrb[0].mxu0 %v515
    %v2476 = vpop.f32.mrb[0].mxu0
    %v2477 = vadd.f32 %v2197, %v2476
    %v2478 = vpop.f32.mrb[0].mxu0
    %2479 = vmatprep.mubr.f32.mxu0 %v533
    %2480 = vmatmul.mubr.f32.gmra.mrb[0].mxu0 %v532
    %v2481 = vpop.f32.mrb[0].mxu0
    %v2482 = vadd.f32 %v2202, %v2481
    %v2483 = vpop.f32.mrb[0].mxu0
    %2484 = vmatprep.mubr.f32.mxu0 %v550
    %2485 = vmatmul.mubr.f32.gmra.mrb[0].mxu0 %v549
    %v2486 = vpop.f32.mrb[0].mxu0
    %v2487 = vadd.f32 %v2207, %v2486
    %v2488 = vpop.f32.mrb[0].mxu0
    %2489 = vmatprep.mubr.f32.mxu0 %v567
    %2490 = vmatmul.mubr.f32.gmra.mrb[0].mxu0 %v566
    %v2491 = vpop.f32.mrb[0].mxu0
    %v2492 = vadd.f32 %v2212, %v2491
    %v2493 = vpop.f32.mrb[0].mxu0
    %2494 = vmatprep.mubr.f32.mxu0 %v584
    %2495 = vmatmul.mubr.f32.gmra.mrb[0].mxu0 %v583
    %v2496 = vpop.f32.mrb[0].mxu0
    %v2497 = vadd.f32 %v2217, %v2496
    %v2498 = vpop.f32.mrb[0].mxu0
    %2499 = vmatprep.mubr.f32.mxu0 %v601
    %2500 = vmatmul.mubr.f32.gmra.mrb[0].mxu0 %v600
    %v2501 = vpop.f32.mrb[0].mxu0
    %v2502 = vadd.f32 %v2222, %v2501
    %v2503 = vpop.f32.mrb[0].mxu0
    %2504 = vmatprep.mubr.f32.mxu0 %v618
    %2505 = vmatmul.mubr.f32.gmra.mrb[0].mxu0 %v617
    %v2506 = vpop.f32.mrb[0].mxu0
    %v2507 = vadd.f32 %v2227, %v2506
    %v2508 = vpop.f32.mrb[0].mxu0
    %2509 = vmatprep.mubr.f32.mxu0 %v635
    %2510 = vmatmul.mubr.f32.gmra.mrb[0].mxu0 %v634
    %v2511 = vpop.f32.mrb[0].mxu0
    %v2512 = vadd.f32 %v2232, %v2511
    %v2513 = vpop.f32.mrb[0].mxu0
    %2514 = vmatprep.mubr.f32.mxu0 %v652
    %2515 = vmatmul.mubr.f32.gmra.mrb[0].mxu0 %v651
    %v2516 = vpop.f32.mrb[0].mxu0
    %v2517 = vadd.f32 %v2237, %v2516
    %v2518 = vpop.f32.mrb[0].mxu0
    %2519 = vmatprep.mubr.f32.mxu0 %v669
    %2520 = vmatmul.mubr.f32.gmra.mrb[0].mxu0 %v668
    %v2521 = vpop.f32.mrb[0].mxu0
    %v2522 = vadd.f32 %v2242, %v2521
    %v2523 = vpop.f32.mrb[0].mxu0
    %2524 = vmatprep.mubr.f32.mxu0 %v686
    %2525 = vmatmul.mubr.f32.gmra.mrb[0].mxu0 %v685
    %v2526 = vpop.f32.mrb[0].mxu0
    %v2527 = vadd.f32 %v2247, %v2526
    %v2528 = vpop.f32.mrb[0].mxu0
    %2529 = vmatprep.mubr.f32.mxu0 %v703
    %2530 = vmatmul.mubr.f32.gmra.mrb[0].mxu0 %v702
    %v2531 = vpop.f32.mrb[0].mxu0
    %v2532 = vadd.f32 %v2252, %v2531
    %v2533 = vpop.f32.mrb[0].mxu0
    %2534 = vmatprep.mubr.f32.mxu0 %v720
    %2535 = vmatmul.mubr.f32.gmra.mrb[0].mxu0 %v719
    %v2536 = vpop.f32.mrb[0].mxu0
    %v2537 = vadd.f32 %v2257, %v2536
    %v2538 = vpop.f32.mrb[0].mxu0
    %2539 = vmatprep.mubr.f32.mxu0 %v737
    %2540 = vmatmul.mubr.f32.gmra.mrb[0].mxu0 %v736
    %v2541 = vpop.f32.mrb[0].mxu0
    %v2542 = vadd.f32 %v2262, %v2541
    %v2543 = vpop.f32.mrb[0].mxu0
    %2544 = vmatprep.mubr.f32.mxu0 %v754
    %2545 = vmatmul.mubr.f32.gmra.mrb[0].mxu0 %v753
    %v2546 = vpop.f32.mrb[0].mxu0
    %v2547 = vadd.f32 %v2267, %v2546
    %v2548 = vpop.f32.mrb[0].mxu0
    %2549 = vdwg.mxu0
    %2550 = vmatprep.subr.mxu0 0.0
    %2551 = vmatpush1.msra.mxu0 %v922
    %2552 = vmatprep.subr.mxu0 0.0
    %2553 = vmatpush1.msra.mxu0 %v923
    %2554 = vmatprep.subr.mxu0 0.0
    %2555 = vmatpush1.msra.mxu0 %v924
    %2556 = vmatprep.subr.mxu0 0.0
    %2557 = vmatpush1.msra.mxu0 %v925
    %2558 = vmatprep.subr.mxu0 0.0
    %2559 = vmatpush1.msra.mxu0 %v926
    %2560 = vmatprep.subr.mxu0 0.0
    %2561 = vmatpush1.msra.mxu0 %v927
    %2562 = vmatprep.subr.mxu0 0.0
    %2563 = vmatpush1.msra.mxu0 %v928
    %2564 = vmatprep.subr.mxu0 0.0
    %2565 = vmatpush1.msra.mxu0 %v929
    %2566 = vmatprep.subr.mxu0 0.0
    %2567 = vmatpush1.msra.mxu0 %v930
    %2568 = vmatprep.subr.mxu0 0.0
    %2569 = vmatpush1.msra.mxu0 %v931
    %2570 = vmatprep.subr.mxu0 0.0
    %2571 = vmatpush1.msra.mxu0 %v932
    %2572 = vmatprep.subr.mxu0 0.0
    %2573 = vmatpush1.msra.mxu0 %v933
    %2574 = vmatprep.subr.mxu0 0.0
    %2575 = vmatpush1.msra.mxu0 %v934
    %2576 = vmatprep.subr.mxu0 0.0
    %2577 = vmatpush1.msra.mxu0 %v935
    %2578 = vmatprep.subr.mxu0 0.0
    %2579 = vmatpush1.msra.mxu0 %v936
    %2580 = vmatprep.subr.mxu0 0.0
    %2581 = vmatpush1.msra.mxu0 %v937
    %2582 = vmatprep.subr.mxu0 0.0
    %2583 = vmatpush1.msra.mxu0 %v938
    %2584 = vmatprep.subr.mxu0 0.0
    %2585 = vmatpush1.msra.mxu0 %v939
    %2586 = vmatprep.subr.mxu0 0.0
    %2587 = vmatpush1.msra.mxu0 %v940
    %2588 = vmatprep.subr.mxu0 0.0
    %2589 = vmatpush1.msra.mxu0 %v941
    %2590 = vmatprep.subr.mxu0 0.0
    %2591 = vmatpush1.msra.mxu0 %v942
    %2592 = vmatprep.subr.mxu0 0.0
    %2593 = vmatpush1.msra.mxu0 %v943
    %2594 = vmatprep.subr.mxu0 0.0
    %2595 = vmatpush1.msra.mxu0 %v944
    %2596 = vmatprep.subr.mxu0 0.0
    %2597 = vmatpush1.msra.mxu0 %v945
    %2598 = vmatprep.subr.mxu0 0.0
    %2599 = vmatpush1.msra.mxu0 %v946
    %2600 = vmatprep.subr.mxu0 0.0
    %2601 = vmatpush1.msra.mxu0 %v947
    %2602 = vmatprep.subr.mxu0 0.0
    %2603 = vmatpush1.msra.mxu0 %v948
    %2604 = vmatprep.subr.mxu0 0.0
    %2605 = vmatpush1.msra.mxu0 %v949
    %2606 = vmatprep.subr.mxu0 0.0
    %2607 = vmatpush1.msra.mxu0 %v950
    %2608 = vmatprep.subr.mxu0 0.0
    %2609 = vmatpush1.msra.mxu0 %v951
    %2610 = vmatprep.subr.mxu0 0.0
    %2611 = vmatpush1.msra.mxu0 %v952
    %2612 = vmatprep.subr.mxu0 0.0
    %2613 = vmatpush1.msra.mxu0 %v953
    %2614 = vmatprep.mubr.f32.mxu0 %v42
    %2615 = vmatmul.mubr.f32.gmra.mrb[0].mxu0 %v41
    %v2616 = vpop.f32.mrb[0].mxu0
    %v2617 = vadd.f32 %v2337, %v2616
    %v2618 = vpop.f32.mrb[0].mxu0
    %2619 = vmatprep.mubr.f32.mxu0 %v59
    %2620 = vmatmul.mubr.f32.gmra.mrb[0].mxu0 %v58
    %v2621 = vpop.f32.mrb[0].mxu0
    %v2622 = vadd.f32 %v2342, %v2621
    %v2623 = vpop.f32.mrb[0].mxu0
    %2624 = vmatprep.mubr.f32.mxu0 %v76
    %2625 = vmatmul.mubr.f32.gmra.mrb[0].mxu0 %v75
    %v2626 = vpop.f32.mrb[0].mxu0
    %v2627 = vadd.f32 %v2347, %v2626
    %v2628 = vpop.f32.mrb[0].mxu0
    %2629 = vmatprep.mubr.f32.mxu0 %v93
    %2630 = vmatmul.mubr.f32.gmra.mrb[0].mxu0 %v92
    %v2631 = vpop.f32.mrb[0].mxu0
    %v2632 = vadd.f32 %v2352, %v2631
    %v2633 = vpop.f32.mrb[0].mxu0
    %2634 = vmatprep.mubr.f32.mxu0 %v110
    %2635 = vmatmul.mubr.f32.gmra.mrb[0].mxu0 %v109
    %v2636 = vpop.f32.mrb[0].mxu0
    %v2637 = vadd.f32 %v2357, %v2636
    %v2638 = vpop.f32.mrb[0].mxu0
    %2639 = vmatprep.mubr.f32.mxu0 %v127
    %2640 = vmatmul.mubr.f32.gmra.mrb[0].mxu0 %v126
    %v2641 = vpop.f32.mrb[0].mxu0
    %v2642 = vadd.f32 %v2362, %v2641
    %v2643 = vpop.f32.mrb[0].mxu0
    %2644 = vmatprep.mubr.f32.mxu0 %v144
    %2645 = vmatmul.mubr.f32.gmra.mrb[0].mxu0 %v143
    %v2646 = vpop.f32.mrb[0].mxu0
    %v2647 = vadd.f32 %v2367, %v2646
    %v2648 = vpop.f32.mrb[0].mxu0
    %2649 = vmatprep.mubr.f32.mxu0 %v161
    %2650 = vmatmul.mubr.f32.gmra.mrb[0].mxu0 %v160
    %v2651 = vpop.f32.mrb[0].mxu0
    %v2652 = vadd.f32 %v2372, %v2651
    %v2653 = vpop.f32.mrb[0].mxu0
    %2654 = vmatprep.mubr.f32.mxu0 %v178
    %2655 = vmatmul.mubr.f32.gmra.mrb[0].mxu0 %v177
    %v2656 = vpop.f32.mrb[0].mxu0
    %v2657 = vadd.f32 %v2377, %v2656
    %v2658 = vpop.f32.mrb[0].mxu0
    %2659 = vmatprep.mubr.f32.mxu0 %v195
    %2660 = vmatmul.mubr.f32.gmra.mrb[0].mxu0 %v194
    %v2661 = vpop.f32.mrb[0].mxu0
    %v2662 = vadd.f32 %v2382, %v2661
    %v2663 = vpop.f32.mrb[0].mxu0
    %2664 = vmatprep.mubr.f32.mxu0 %v212
    %2665 = vmatmul.mubr.f32.gmra.mrb[0].mxu0 %v211
    %v2666 = vpop.f32.mrb[0].mxu0
    %v2667 = vadd.f32 %v2387, %v2666
    %v2668 = vpop.f32.mrb[0].mxu0
    %2669 = vmatprep.mubr.f32.mxu0 %v229
    %2670 = vmatmul.mubr.f32.gmra.mrb[0].mxu0 %v228
    %v2671 = vpop.f32.mrb[0].mxu0
    %v2672 = vadd.f32 %v2392, %v2671
    %v2673 = vpop.f32.mrb[0].mxu0
    %2674 = vmatprep.mubr.f32.mxu0 %v246
    %2675 = vmatmul.mubr.f32.gmra.mrb[0].mxu0 %v245
    %v2676 = vpop.f32.mrb[0].mxu0
    %v2677 = vadd.f32 %v2397, %v2676
    %v2678 = vpop.f32.mrb[0].mxu0
    %2679 = vmatprep.mubr.f32.mxu0 %v263
    %2680 = vmatmul.mubr.f32.gmra.mrb[0].mxu0 %v262
    %v2681 = vpop.f32.mrb[0].mxu0
    %v2682 = vadd.f32 %v2402, %v2681
    %v2683 = vpop.f32.mrb[0].mxu0
    %2684 = vmatprep.mubr.f32.mxu0 %v280
    %2685 = vmatmul.mubr.f32.gmra.mrb[0].mxu0 %v279
    %v2686 = vpop.f32.mrb[0].mxu0
    %v2687 = vadd.f32 %v2407, %v2686
    %v2688 = vpop.f32.mrb[0].mxu0
    %2689 = vmatprep.mubr.f32.mxu0 %v297
    %2690 = vmatmul.mubr.f32.gmra.mrb[0].mxu0 %v296
    %v2691 = vpop.f32.mrb[0].mxu0
    %v2692 = vadd.f32 %v2412, %v2691
    %v2693 = vpop.f32.mrb[0].mxu0
    %2694 = vmatprep.mubr.f32.mxu0 %v314
    %2695 = vmatmul.mubr.f32.gmra.mrb[0].mxu0 %v313
    %v2696 = vpop.f32.mrb[0].mxu0
    %v2697 = vadd.f32 %v2417, %v2696
    %v2698 = vpop.f32.mrb[0].mxu0
    %2699 = vmatprep.mubr.f32.mxu0 %v331
    %2700 = vmatmul.mubr.f32.gmra.mrb[0].mxu0 %v330
    %v2701 = vpop.f32.mrb[0].mxu0
    %v2702 = vadd.f32 %v2422, %v2701
    %v2703 = vpop.f32.mrb[0].mxu0
    %2704 = vmatprep.mubr.f32.mxu0 %v348
    %2705 = vmatmul.mubr.f32.gmra.mrb[0].mxu0 %v347
    %v2706 = vpop.f32.mrb[0].mxu0
    %v2707 = vadd.f32 %v2427, %v2706
    %v2708 = vpop.f32.mrb[0].mxu0
    %2709 = vmatprep.mubr.f32.mxu0 %v365
    %2710 = vmatmul.mubr.f32.gmra.mrb[0].mxu0 %v364
    %v2711 = vpop.f32.mrb[0].mxu0
    %v2712 = vadd.f32 %v2432, %v2711
    %v2713 = vpop.f32.mrb[0].mxu0
    %2714 = vmatprep.mubr.f32.mxu0 %v382
    %2715 = vmatmul.mubr.f32.gmra.mrb[0].mxu0 %v381
    %v2716 = vpop.f32.mrb[0].mxu0
    %v2717 = vadd.f32 %v2437, %v2716
    %v2718 = vpop.f32.mrb[0].mxu0
    %2719 = vmatprep.mubr.f32.mxu0 %v399
    %2720 = vmatmul.mubr.f32.gmra.mrb[0].mxu0 %v398
    %v2721 = vpop.f32.mrb[0].mxu0
    %v2722 = vadd.f32 %v2442, %v2721
    %v2723 = vpop.f32.mrb[0].mxu0
    %2724 = vmatprep.mubr.f32.mxu0 %v416
    %2725 = vmatmul.mubr.f32.gmra.mrb[0].mxu0 %v415
    %v2726 = vpop.f32.mrb[0].mxu0
    %v2727 = vadd.f32 %v2447, %v2726
    %v2728 = vpop.f32.mrb[0].mxu0
    %2729 = vmatprep.mubr.f32.mxu0 %v433
    %2730 = vmatmul.mubr.f32.gmra.mrb[0].mxu0 %v432
    %v2731 = vpop.f32.mrb[0].mxu0
    %v2732 = vadd.f32 %v2452, %v2731
    %v2733 = vpop.f32.mrb[0].mxu0
    %2734 = vmatprep.mubr.f32.mxu0 %v450
    %2735 = vmatmul.mubr.f32.gmra.mrb[0].mxu0 %v449
    %v2736 = vpop.f32.mrb[0].mxu0
    %v2737 = vadd.f32 %v2457, %v2736
    %v2738 = vpop.f32.mrb[0].mxu0
    %2739 = vmatprep.mubr.f32.mxu0 %v467
    %2740 = vmatmul.mubr.f32.gmra.mrb[0].mxu0 %v466
    %v2741 = vpop.f32.mrb[0].mxu0
    %v2742 = vadd.f32 %v2462, %v2741
    %v2743 = vpop.f32.mrb[0].mxu0
    %2744 = vmatprep.mubr.f32.mxu0 %v484
    %2745 = vmatmul.mubr.f32.gmra.mrb[0].mxu0 %v483
    %v2746 = vpop.f32.mrb[0].mxu0
    %v2747 = vadd.f32 %v2467, %v2746
    %v2748 = vpop.f32.mrb[0].mxu0
    %2749 = vmatprep.mubr.f32.mxu0 %v501
    %2750 = vmatmul.mubr.f32.gmra.mrb[0].mxu0 %v500
    %v2751 = vpop.f32.mrb[0].mxu0
    %v2752 = vadd.f32 %v2472, %v2751
    %v2753 = vpop.f32.mrb[0].mxu0
    %2754 = vmatprep.mubr.f32.mxu0 %v518
    %2755 = vmatmul.mubr.f32.gmra.mrb[0].mxu0 %v517
    %v2756 = vpop.f32.mrb[0].mxu0
    %v2757 = vadd.f32 %v2477, %v2756
    %v2758 = vpop.f32.mrb[0].mxu0
    %2759 = vmatprep.mubr.f32.mxu0 %v535
    %2760 = vmatmul.mubr.f32.gmra.mrb[0].mxu0 %v534
    %v2761 = vpop.f32.mrb[0].mxu0
    %v2762 = vadd.f32 %v2482, %v2761
    %v2763 = vpop.f32.mrb[0].mxu0
    %2764 = vmatprep.mubr.f32.mxu0 %v552
    %2765 = vmatmul.mubr.f32.gmra.mrb[0].mxu0 %v551
    %v2766 = vpop.f32.mrb[0].mxu0
    %v2767 = vadd.f32 %v2487, %v2766
    %v2768 = vpop.f32.mrb[0].mxu0
    %2769 = vmatprep.mubr.f32.mxu0 %v569
    %2770 = vmatmul.mubr.f32.gmra.mrb[0].mxu0 %v568
    %v2771 = vpop.f32.mrb[0].mxu0
    %v2772 = vadd.f32 %v2492, %v2771
    %v2773 = vpop.f32.mrb[0].mxu0
    %2774 = vmatprep.mubr.f32.mxu0 %v586
    %2775 = vmatmul.mubr.f32.gmra.mrb[0].mxu0 %v585
    %v2776 = vpop.f32.mrb[0].mxu0
    %v2777 = vadd.f32 %v2497, %v2776
    %v2778 = vpop.f32.mrb[0].mxu0
    %2779 = vmatprep.mubr.f32.mxu0 %v603
    %2780 = vmatmul.mubr.f32.gmra.mrb[0].mxu0 %v602
    %v2781 = vpop.f32.mrb[0].mxu0
    %v2782 = vadd.f32 %v2502, %v2781
    %v2783 = vpop.f32.mrb[0].mxu0
    %2784 = vmatprep.mubr.f32.mxu0 %v620
    %2785 = vmatmul.mubr.f32.gmra.mrb[0].mxu0 %v619
    %v2786 = vpop.f32.mrb[0].mxu0
    %v2787 = vadd.f32 %v2507, %v2786
    %v2788 = vpop.f32.mrb[0].mxu0
    %2789 = vmatprep.mubr.f32.mxu0 %v637
    %2790 = vmatmul.mubr.f32.gmra.mrb[0].mxu0 %v636
    %v2791 = vpop.f32.mrb[0].mxu0
    %v2792 = vadd.f32 %v2512, %v2791
    %v2793 = vpop.f32.mrb[0].mxu0
    %2794 = vmatprep.mubr.f32.mxu0 %v654
    %2795 = vmatmul.mubr.f32.gmra.mrb[0].mxu0 %v653
    %v2796 = vpop.f32.mrb[0].mxu0
    %v2797 = vadd.f32 %v2517, %v2796
    %v2798 = vpop.f32.mrb[0].mxu0
    %2799 = vmatprep.mubr.f32.mxu0 %v671
    %2800 = vmatmul.mubr.f32.gmra.mrb[0].mxu0 %v670
    %v2801 = vpop.f32.mrb[0].mxu0
    %v2802 = vadd.f32 %v2522, %v2801
    %v2803 = vpop.f32.mrb[0].mxu0
    %2804 = vmatprep.mubr.f32.mxu0 %v688
    %2805 = vmatmul.mubr.f32.gmra.mrb[0].mxu0 %v687
    %v2806 = vpop.f32.mrb[0].mxu0
    %v2807 = vadd.f32 %v2527, %v2806
    %v2808 = vpop.f32.mrb[0].mxu0
    %2809 = vmatprep.mubr.f32.mxu0 %v705
    %2810 = vmatmul.mubr.f32.gmra.mrb[0].mxu0 %v704
    %v2811 = vpop.f32.mrb[0].mxu0
    %v2812 = vadd.f32 %v2532, %v2811
    %v2813 = vpop.f32.mrb[0].mxu0
    %2814 = vmatprep.mubr.f32.mxu0 %v722
    %2815 = vmatmul.mubr.f32.gmra.mrb[0].mxu0 %v721
    %v2816 = vpop.f32.mrb[0].mxu0
    %v2817 = vadd.f32 %v2537, %v2816
    %v2818 = vpop.f32.mrb[0].mxu0
    %2819 = vmatprep.mubr.f32.mxu0 %v739
    %2820 = vmatmul.mubr.f32.gmra.mrb[0].mxu0 %v738
    %v2821 = vpop.f32.mrb[0].mxu0
    %v2822 = vadd.f32 %v2542, %v2821
    %v2823 = vpop.f32.mrb[0].mxu0
    %2824 = vmatprep.mubr.f32.mxu0 %v756
    %2825 = vmatmul.mubr.f32.gmra.mrb[0].mxu0 %v755
    %v2826 = vpop.f32.mrb[0].mxu0
    %v2827 = vadd.f32 %v2547, %v2826
    %v2828 = vpop.f32.mrb[0].mxu0
    %2829 = vdwg.mxu0
    %2830 = vmatprep.subr.mxu0 0.0
    %2831 = vmatpush1.msra.mxu0 %v954
    %2832 = vmatprep.subr.mxu0 0.0
    %2833 = vmatpush1.msra.mxu0 %v955
    %2834 = vmatprep.subr.mxu0 0.0
    %2835 = vmatpush1.msra.mxu0 %v956
    %2836 = vmatprep.subr.mxu0 0.0
    %2837 = vmatpush1.msra.mxu0 %v957
    %2838 = vmatprep.subr.mxu0 0.0
    %2839 = vmatpush1.msra.mxu0 %v958
    %2840 = vmatprep.subr.mxu0 0.0
    %2841 = vmatpush1.msra.mxu0 %v959
    %2842 = vmatprep.subr.mxu0 0.0
    %2843 = vmatpush1.msra.mxu0 %v960
    %2844 = vmatprep.subr.mxu0 0.0
    %2845 = vmatpush1.msra.mxu0 %v961
    %2846 = vmatprep.subr.mxu0 0.0
    %2847 = vmatpush1.msra.mxu0 %v962
    %2848 = vmatprep.subr.mxu0 0.0
    %2849 = vmatpush1.msra.mxu0 %v963
    %2850 = vmatprep.subr.mxu0 0.0
    %2851 = vmatpush1.msra.mxu0 %v964
    %2852 = vmatprep.subr.mxu0 0.0
    %2853 = vmatpush1.msra.mxu0 %v965
    %2854 = vmatprep.subr.mxu0 0.0
    %2855 = vmatpush1.msra.mxu0 %v966
    %2856 = vmatprep.subr.mxu0 0.0
    %2857 = vmatpush1.msra.mxu0 %v967
    %2858 = vmatprep.subr.mxu0 0.0
    %2859 = vmatpush1.msra.mxu0 %v968
    %2860 = vmatprep.subr.mxu0 0.0
    %2861 = vmatpush1.msra.mxu0 %v969
    %2862 = vmatprep.subr.mxu0 0.0
    %2863 = vmatpush1.msra.mxu0 %v970
    %2864 = vmatprep.subr.mxu0 0.0
    %2865 = vmatpush1.msra.mxu0 %v971
    %2866 = vmatprep.subr.mxu0 0.0
    %2867 = vmatpush1.msra.mxu0 %v972
    %2868 = vmatprep.subr.mxu0 0.0
    %2869 = vmatpush1.msra.mxu0 %v973
    %2870 = vmatprep.subr.mxu0 0.0
    %2871 = vmatpush1.msra.mxu0 %v974
    %2872 = vmatprep.subr.mxu0 0.0
    %2873 = vmatpush1.msra.mxu0 %v975
    %2874 = vmatprep.subr.mxu0 0.0
    %2875 = vmatpush1.msra.mxu0 %v976
    %2876 = vmatprep.subr.mxu0 0.0
    %2877 = vmatpush1.msra.mxu0 %v977
    %2878 = vmatprep.subr.mxu0 0.0
    %2879 = vmatpush1.msra.mxu0 %v978
    %2880 = vmatprep.subr.mxu0 0.0
    %2881 = vmatpush1.msra.mxu0 %v979
    %2882 = vmatprep.subr.mxu0 0.0
    %2883 = vmatpush1.msra.mxu0 %v980
    %2884 = vmatprep.subr.mxu0 0.0
    %2885 = vmatpush1.msra.mxu0 %v981
    %2886 = vmatprep.subr.mxu0 0.0
    %2887 = vmatpush1.msra.mxu0 %v982
    %2888 = vmatprep.subr.mxu0 0.0
    %2889 = vmatpush1.msra.mxu0 %v983
    %2890 = vmatprep.subr.mxu0 0.0
    %2891 = vmatpush1.msra.mxu0 %v984
    %2892 = vmatprep.subr.mxu0 0.0
    %2893 = vmatpush1.msra.mxu0 %v985
    %2894 = vmatprep.mubr.f32.mxu0 %v44
    %2895 = vmatmul.mubr.f32.gmra.mrb[0].mxu0 %v43
    %v2896 = vpop.f32.mrb[0].mxu0
    %v2897 = vadd.f32 %v2617, %v2896
    %v2898 = vpop.f32.mrb[0].mxu0
    %2899 = vmatprep.mubr.f32.mxu0 %v61
    %2900 = vmatmul.mubr.f32.gmra.mrb[0].mxu0 %v60
    %v2901 = vpop.f32.mrb[0].mxu0
    %v2902 = vadd.f32 %v2622, %v2901
    %v2903 = vpop.f32.mrb[0].mxu0
    %2904 = vmatprep.mubr.f32.mxu0 %v78
    %2905 = vmatmul.mubr.f32.gmra.mrb[0].mxu0 %v77
    %v2906 = vpop.f32.mrb[0].mxu0
    %v2907 = vadd.f32 %v2627, %v2906
    %v2908 = vpop.f32.mrb[0].mxu0
    %2909 = vmatprep.mubr.f32.mxu0 %v95
    %2910 = vmatmul.mubr.f32.gmra.mrb[0].mxu0 %v94
    %v2911 = vpop.f32.mrb[0].mxu0
    %v2912 = vadd.f32 %v2632, %v2911
    %v2913 = vpop.f32.mrb[0].mxu0
    %2914 = vmatprep.mubr.f32.mxu0 %v112
    %2915 = vmatmul.mubr.f32.gmra.mrb[0].mxu0 %v111
    %v2916 = vpop.f32.mrb[0].mxu0
    %v2917 = vadd.f32 %v2637, %v2916
    %v2918 = vpop.f32.mrb[0].mxu0
    %2919 = vmatprep.mubr.f32.mxu0 %v129
    %2920 = vmatmul.mubr.f32.gmra.mrb[0].mxu0 %v128
    %v2921 = vpop.f32.mrb[0].mxu0
    %v2922 = vadd.f32 %v2642, %v2921
    %v2923 = vpop.f32.mrb[0].mxu0
    %2924 = vmatprep.mubr.f32.mxu0 %v146
    %2925 = vmatmul.mubr.f32.gmra.mrb[0].mxu0 %v145
    %v2926 = vpop.f32.mrb[0].mxu0
    %v2927 = vadd.f32 %v2647, %v2926
    %v2928 = vpop.f32.mrb[0].mxu0
    %2929 = vmatprep.mubr.f32.mxu0 %v163
    %2930 = vmatmul.mubr.f32.gmra.mrb[0].mxu0 %v162
    %v2931 = vpop.f32.mrb[0].mxu0
    %v2932 = vadd.f32 %v2652, %v2931
    %v2933 = vpop.f32.mrb[0].mxu0
    %2934 = vmatprep.mubr.f32.mxu0 %v180
    %2935 = vmatmul.mubr.f32.gmra.mrb[0].mxu0 %v179
    %v2936 = vpop.f32.mrb[0].mxu0
    %v2937 = vadd.f32 %v2657, %v2936
    %v2938 = vpop.f32.mrb[0].mxu0
    %2939 = vmatprep.mubr.f32.mxu0 %v197
    %2940 = vmatmul.mubr.f32.gmra.mrb[0].mxu0 %v196
    %v2941 = vpop.f32.mrb[0].mxu0
    %v2942 = vadd.f32 %v2662, %v2941
    %v2943 = vpop.f32.mrb[0].mxu0
    %2944 = vmatprep.mubr.f32.mxu0 %v214
    %2945 = vmatmul.mubr.f32.gmra.mrb[0].mxu0 %v213
    %v2946 = vpop.f32.mrb[0].mxu0
    %v2947 = vadd.f32 %v2667, %v2946
    %v2948 = vpop.f32.mrb[0].mxu0
    %2949 = vmatprep.mubr.f32.mxu0 %v231
    %2950 = vmatmul.mubr.f32.gmra.mrb[0].mxu0 %v230
    %v2951 = vpop.f32.mrb[0].mxu0
    %v2952 = vadd.f32 %v2672, %v2951
    %v2953 = vpop.f32.mrb[0].mxu0
    %2954 = vmatprep.mubr.f32.mxu0 %v248
    %2955 = vmatmul.mubr.f32.gmra.mrb[0].mxu0 %v247
    %v2956 = vpop.f32.mrb[0].mxu0
    %v2957 = vadd.f32 %v2677, %v2956
    %v2958 = vpop.f32.mrb[0].mxu0
    %2959 = vmatprep.mubr.f32.mxu0 %v265
    %2960 = vmatmul.mubr.f32.gmra.mrb[0].mxu0 %v264
    %v2961 = vpop.f32.mrb[0].mxu0
    %v2962 = vadd.f32 %v2682, %v2961
    %v2963 = vpop.f32.mrb[0].mxu0
    %2964 = vmatprep.mubr.f32.mxu0 %v282
    %2965 = vmatmul.mubr.f32.gmra.mrb[0].mxu0 %v281
    %v2966 = vpop.f32.mrb[0].mxu0
    %v2967 = vadd.f32 %v2687, %v2966
    %v2968 = vpop.f32.mrb[0].mxu0
    %2969 = vmatprep.mubr.f32.mxu0 %v299
    %2970 = vmatmul.mubr.f32.gmra.mrb[0].mxu0 %v298
    %v2971 = vpop.f32.mrb[0].mxu0
    %v2972 = vadd.f32 %v2692, %v2971
    %v2973 = vpop.f32.mrb[0].mxu0
    %2974 = vmatprep.mubr.f32.mxu0 %v316
    %2975 = vmatmul.mubr.f32.gmra.mrb[0].mxu0 %v315
    %v2976 = vpop.f32.mrb[0].mxu0
    %v2977 = vadd.f32 %v2697, %v2976
    %v2978 = vpop.f32.mrb[0].mxu0
    %2979 = vmatprep.mubr.f32.mxu0 %v333
    %2980 = vmatmul.mubr.f32.gmra.mrb[0].mxu0 %v332
    %v2981 = vpop.f32.mrb[0].mxu0
    %v2982 = vadd.f32 %v2702, %v2981
    %v2983 = vpop.f32.mrb[0].mxu0
    %2984 = vmatprep.mubr.f32.mxu0 %v350
    %2985 = vmatmul.mubr.f32.gmra.mrb[0].mxu0 %v349
    %v2986 = vpop.f32.mrb[0].mxu0
    %v2987 = vadd.f32 %v2707, %v2986
    %v2988 = vpop.f32.mrb[0].mxu0
    %2989 = vmatprep.mubr.f32.mxu0 %v367
    %2990 = vmatmul.mubr.f32.gmra.mrb[0].mxu0 %v366
    %v2991 = vpop.f32.mrb[0].mxu0
    %v2992 = vadd.f32 %v2712, %v2991
    %v2993 = vpop.f32.mrb[0].mxu0
    %2994 = vmatprep.mubr.f32.mxu0 %v384
    %2995 = vmatmul.mubr.f32.gmra.mrb[0].mxu0 %v383
    %v2996 = vpop.f32.mrb[0].mxu0
    %v2997 = vadd.f32 %v2717, %v2996
    %v2998 = vpop.f32.mrb[0].mxu0
    %2999 = vmatprep.mubr.f32.mxu0 %v401
    %3000 = vmatmul.mubr.f32.gmra.mrb[0].mxu0 %v400
    %v3001 = vpop.f32.mrb[0].mxu0
    %v3002 = vadd.f32 %v2722, %v3001
    %v3003 = vpop.f32.mrb[0].mxu0
    %3004 = vmatprep.mubr.f32.mxu0 %v418
    %3005 = vmatmul.mubr.f32.gmra.mrb[0].mxu0 %v417
    %v3006 = vpop.f32.mrb[0].mxu0
    %v3007 = vadd.f32 %v2727, %v3006
    %v3008 = vpop.f32.mrb[0].mxu0
    %3009 = vmatprep.mubr.f32.mxu0 %v435
    %3010 = vmatmul.mubr.f32.gmra.mrb[0].mxu0 %v434
    %v3011 = vpop.f32.mrb[0].mxu0
    %v3012 = vadd.f32 %v2732, %v3011
    %v3013 = vpop.f32.mrb[0].mxu0
    %3014 = vmatprep.mubr.f32.mxu0 %v452
    %3015 = vmatmul.mubr.f32.gmra.mrb[0].mxu0 %v451
    %v3016 = vpop.f32.mrb[0].mxu0
    %v3017 = vadd.f32 %v2737, %v3016
    %v3018 = vpop.f32.mrb[0].mxu0
    %3019 = vmatprep.mubr.f32.mxu0 %v469
    %3020 = vmatmul.mubr.f32.gmra.mrb[0].mxu0 %v468
    %v3021 = vpop.f32.mrb[0].mxu0
    %v3022 = vadd.f32 %v2742, %v3021
    %v3023 = vpop.f32.mrb[0].mxu0
    %3024 = vmatprep.mubr.f32.mxu0 %v486
    %3025 = vmatmul.mubr.f32.gmra.mrb[0].mxu0 %v485
    %v3026 = vpop.f32.mrb[0].mxu0
    %v3027 = vadd.f32 %v2747, %v3026
    %v3028 = vpop.f32.mrb[0].mxu0
    %3029 = vmatprep.mubr.f32.mxu0 %v503
    %3030 = vmatmul.mubr.f32.gmra.mrb[0].mxu0 %v502
    %v3031 = vpop.f32.mrb[0].mxu0
    %v3032 = vadd.f32 %v2752, %v3031
    %v3033 = vpop.f32.mrb[0].mxu0
    %3034 = vmatprep.mubr.f32.mxu0 %v520
    %3035 = vmatmul.mubr.f32.gmra.mrb[0].mxu0 %v519
    %v3036 = vpop.f32.mrb[0].mxu0
    %v3037 = vadd.f32 %v2757, %v3036
    %v3038 = vpop.f32.mrb[0].mxu0
    %3039 = vmatprep.mubr.f32.mxu0 %v537
    %3040 = vmatmul.mubr.f32.gmra.mrb[0].mxu0 %v536
    %v3041 = vpop.f32.mrb[0].mxu0
    %v3042 = vadd.f32 %v2762, %v3041
    %v3043 = vpop.f32.mrb[0].mxu0
    %3044 = vmatprep.mubr.f32.mxu0 %v554
    %3045 = vmatmul.mubr.f32.gmra.mrb[0].mxu0 %v553
    %v3046 = vpop.f32.mrb[0].mxu0
    %v3047 = vadd.f32 %v2767, %v3046
    %v3048 = vpop.f32.mrb[0].mxu0
    %3049 = vmatprep.mubr.f32.mxu0 %v571
    %3050 = vmatmul.mubr.f32.gmra.mrb[0].mxu0 %v570
    %v3051 = vpop.f32.mrb[0].mxu0
    %v3052 = vadd.f32 %v2772, %v3051
    %v3053 = vpop.f32.mrb[0].mxu0
    %3054 = vmatprep.mubr.f32.mxu0 %v588
    %3055 = vmatmul.mubr.f32.gmra.mrb[0].mxu0 %v587
    %v3056 = vpop.f32.mrb[0].mxu0
    %v3057 = vadd.f32 %v2777, %v3056
    %v3058 = vpop.f32.mrb[0].mxu0
    %3059 = vmatprep.mubr.f32.mxu0 %v605
    %3060 = vmatmul.mubr.f32.gmra.mrb[0].mxu0 %v604
    %v3061 = vpop.f32.mrb[0].mxu0
    %v3062 = vadd.f32 %v2782, %v3061
    %v3063 = vpop.f32.mrb[0].mxu0
    %3064 = vmatprep.mubr.f32.mxu0 %v622
    %3065 = vmatmul.mubr.f32.gmra.mrb[0].mxu0 %v621
    %v3066 = vpop.f32.mrb[0].mxu0
    %v3067 = vadd.f32 %v2787, %v3066
    %v3068 = vpop.f32.mrb[0].mxu0
    %3069 = vmatprep.mubr.f32.mxu0 %v639
    %3070 = vmatmul.mubr.f32.gmra.mrb[0].mxu0 %v638
    %v3071 = vpop.f32.mrb[0].mxu0
    %v3072 = vadd.f32 %v2792, %v3071
    %v3073 = vpop.f32.mrb[0].mxu0
    %3074 = vmatprep.mubr.f32.mxu0 %v656
    %3075 = vmatmul.mubr.f32.gmra.mrb[0].mxu0 %v655
    %v3076 = vpop.f32.mrb[0].mxu0
    %v3077 = vadd.f32 %v2797, %v3076
    %v3078 = vpop.f32.mrb[0].mxu0
    %3079 = vmatprep.mubr.f32.mxu0 %v673
    %3080 = vmatmul.mubr.f32.gmra.mrb[0].mxu0 %v672
    %v3081 = vpop.f32.mrb[0].mxu0
    %v3082 = vadd.f32 %v2802, %v3081
    %v3083 = vpop.f32.mrb[0].mxu0
    %3084 = vmatprep.mubr.f32.mxu0 %v690
    %3085 = vmatmul.mubr.f32.gmra.mrb[0].mxu0 %v689
    %v3086 = vpop.f32.mrb[0].mxu0
    %v3087 = vadd.f32 %v2807, %v3086
    %v3088 = vpop.f32.mrb[0].mxu0
    %3089 = vmatprep.mubr.f32.mxu0 %v707
    %3090 = vmatmul.mubr.f32.gmra.mrb[0].mxu0 %v706
    %v3091 = vpop.f32.mrb[0].mxu0
    %v3092 = vadd.f32 %v2812, %v3091
    %v3093 = vpop.f32.mrb[0].mxu0
    %3094 = vmatprep.mubr.f32.mxu0 %v724
    %3095 = vmatmul.mubr.f32.gmra.mrb[0].mxu0 %v723
    %v3096 = vpop.f32.mrb[0].mxu0
    %v3097 = vadd.f32 %v2817, %v3096
    %v3098 = vpop.f32.mrb[0].mxu0
    %3099 = vmatprep.mubr.f32.mxu0 %v741
    %3100 = vmatmul.mubr.f32.gmra.mrb[0].mxu0 %v740
    %v3101 = vpop.f32.mrb[0].mxu0
    %v3102 = vadd.f32 %v2822, %v3101
    %v3103 = vpop.f32.mrb[0].mxu0
    %3104 = vmatprep.mubr.f32.mxu0 %v758
    %3105 = vmatmul.mubr.f32.gmra.mrb[0].mxu0 %v757
    %v3106 = vpop.f32.mrb[0].mxu0
    %v3107 = vadd.f32 %v2827, %v3106
    %v3108 = vpop.f32.mrb[0].mxu0
    %3109 = vdwg.mxu0
    %3110 = vmatprep.subr.mxu0 0.0
    %3111 = vmatpush1.msra.mxu0 %v986
    %3112 = vmatprep.subr.mxu0 0.0
    %3113 = vmatpush1.msra.mxu0 %v987
    %3114 = vmatprep.subr.mxu0 0.0
    %3115 = vmatpush1.msra.mxu0 %v988
    %3116 = vmatprep.subr.mxu0 0.0
    %3117 = vmatpush1.msra.mxu0 %v989
    %3118 = vmatprep.subr.mxu0 0.0
    %3119 = vmatpush1.msra.mxu0 %v990
    %3120 = vmatprep.subr.mxu0 0.0
    %3121 = vmatpush1.msra.mxu0 %v991
    %3122 = vmatprep.subr.mxu0 0.0
    %3123 = vmatpush1.msra.mxu0 %v992
    %3124 = vmatprep.subr.mxu0 0.0
    %3125 = vmatpush1.msra.mxu0 %v993
    %3126 = vmatprep.subr.mxu0 0.0
    %3127 = vmatpush1.msra.mxu0 %v994
    %3128 = vmatprep.subr.mxu0 0.0
    %3129 = vmatpush1.msra.mxu0 %v995
    %3130 = vmatprep.subr.mxu0 0.0
    %3131 = vmatpush1.msra.mxu0 %v996
    %3132 = vmatprep.subr.mxu0 0.0
    %3133 = vmatpush1.msra.mxu0 %v997
    %3134 = vmatprep.subr.mxu0 0.0
    %3135 = vmatpush1.msra.mxu0 %v998
    %3136 = vmatprep.subr.mxu0 0.0
    %3137 = vmatpush1.msra.mxu0 %v999
    %3138 = vmatprep.subr.mxu0 0.0
    %3139 = vmatpush1.msra.mxu0 %v1000
    %3140 = vmatprep.subr.mxu0 0.0
    %3141 = vmatpush1.msra.mxu0 %v1001
    %3142 = vmatprep.subr.mxu0 0.0
    %3143 = vmatpush1.msra.mxu0 %v1002
    %3144 = vmatprep.subr.mxu0 0.0
    %3145 = vmatpush1.msra.mxu0 %v1003
    %3146 = vmatprep.subr.mxu0 0.0
    %3147 = vmatpush1.msra.mxu0 %v1004
    %3148 = vmatprep.subr.mxu0 0.0
    %3149 = vmatpush1.msra.mxu0 %v1005
    %3150 = vmatprep.subr.mxu0 0.0
    %3151 = vmatpush1.msra.mxu0 %v1006
    %3152 = vmatprep.subr.mxu0 0.0
    %3153 = vmatpush1.msra.mxu0 %v1007
    %3154 = vmatprep.subr.mxu0 0.0
    %3155 = vmatpush1.msra.mxu0 %v1008
    %3156 = vmatprep.subr.mxu0 0.0
    %3157 = vmatpush1.msra.mxu0 %v1009
    %3158 = vmatprep.subr.mxu0 0.0
    %3159 = vmatpush1.msra.mxu0 %v1010
    %3160 = vmatprep.subr.mxu0 0.0
    %3161 = vmatpush1.msra.mxu0 %v1011
    %3162 = vmatprep.subr.mxu0 0.0
    %3163 = vmatpush1.msra.mxu0 %v1012
    %3164 = vmatprep.subr.mxu0 0.0
    %3165 = vmatpush1.msra.mxu0 %v1013
    %3166 = vmatprep.subr.mxu0 0.0
    %3167 = vmatpush1.msra.mxu0 %v1014
    %3168 = vmatprep.subr.mxu0 0.0
    %3169 = vmatpush1.msra.mxu0 %v1015
    %3170 = vmatprep.subr.mxu0 0.0
    %3171 = vmatpush1.msra.mxu0 %v1016
    %3172 = vmatprep.subr.mxu0 0.0
    %3173 = vmatpush1.msra.mxu0 %v1017
    %3174 = vmatprep.mubr.f32.mxu0 %v46
    %3175 = vmatmul.mubr.f32.gmra.mrb[0].mxu0 %v45
    %v3176 = vpop.f32.mrb[0].mxu0
    %v3177 = vadd.f32 %v2897, %v3176
    %v3178 = vpop.f32.mrb[0].mxu0
    %3179 = vmatprep.mubr.f32.mxu0 %v63
    %3180 = vmatmul.mubr.f32.gmra.mrb[0].mxu0 %v62
    %v3181 = vpop.f32.mrb[0].mxu0
    %v3182 = vadd.f32 %v2902, %v3181
    %v3183 = vpop.f32.mrb[0].mxu0
    %3184 = vmatprep.mubr.f32.mxu0 %v80
    %3185 = vmatmul.mubr.f32.gmra.mrb[0].mxu0 %v79
    %v3186 = vpop.f32.mrb[0].mxu0
    %v3187 = vadd.f32 %v2907, %v3186
    %v3188 = vpop.f32.mrb[0].mxu0
    %3189 = vmatprep.mubr.f32.mxu0 %v97
    %3190 = vmatmul.mubr.f32.gmra.mrb[0].mxu0 %v96
    %v3191 = vpop.f32.mrb[0].mxu0
    %v3192 = vadd.f32 %v2912, %v3191
    %v3193 = vpop.f32.mrb[0].mxu0
    %3194 = vmatprep.mubr.f32.mxu0 %v114
    %3195 = vmatmul.mubr.f32.gmra.mrb[0].mxu0 %v113
    %v3196 = vpop.f32.mrb[0].mxu0
    %v3197 = vadd.f32 %v2917, %v3196
    %v3198 = vpop.f32.mrb[0].mxu0
    %3199 = vmatprep.mubr.f32.mxu0 %v131
    %3200 = vmatmul.mubr.f32.gmra.mrb[0].mxu0 %v130
    %v3201 = vpop.f32.mrb[0].mxu0
    %v3202 = vadd.f32 %v2922, %v3201
    %v3203 = vpop.f32.mrb[0].mxu0
    %3204 = vmatprep.mubr.f32.mxu0 %v148
    %3205 = vmatmul.mubr.f32.gmra.mrb[0].mxu0 %v147
    %v3206 = vpop.f32.mrb[0].mxu0
    %v3207 = vadd.f32 %v2927, %v3206
    %v3208 = vpop.f32.mrb[0].mxu0
    %3209 = vmatprep.mubr.f32.mxu0 %v165
    %3210 = vmatmul.mubr.f32.gmra.mrb[0].mxu0 %v164
    %v3211 = vpop.f32.mrb[0].mxu0
    %v3212 = vadd.f32 %v2932, %v3211
    %v3213 = vpop.f32.mrb[0].mxu0
    %3214 = vmatprep.mubr.f32.mxu0 %v182
    %3215 = vmatmul.mubr.f32.gmra.mrb[0].mxu0 %v181
    %v3216 = vpop.f32.mrb[0].mxu0
    %v3217 = vadd.f32 %v2937, %v3216
    %v3218 = vpop.f32.mrb[0].mxu0
    %3219 = vmatprep.mubr.f32.mxu0 %v199
    %3220 = vmatmul.mubr.f32.gmra.mrb[0].mxu0 %v198
    %v3221 = vpop.f32.mrb[0].mxu0
    %v3222 = vadd.f32 %v2942, %v3221
    %v3223 = vpop.f32.mrb[0].mxu0
    %3224 = vmatprep.mubr.f32.mxu0 %v216
    %3225 = vmatmul.mubr.f32.gmra.mrb[0].mxu0 %v215
    %v3226 = vpop.f32.mrb[0].mxu0
    %v3227 = vadd.f32 %v2947, %v3226
    %v3228 = vpop.f32.mrb[0].mxu0
    %3229 = vmatprep.mubr.f32.mxu0 %v233
    %3230 = vmatmul.mubr.f32.gmra.mrb[0].mxu0 %v232
    %v3231 = vpop.f32.mrb[0].mxu0
    %v3232 = vadd.f32 %v2952, %v3231
    %v3233 = vpop.f32.mrb[0].mxu0
    %3234 = vmatprep.mubr.f32.mxu0 %v250
    %3235 = vmatmul.mubr.f32.gmra.mrb[0].mxu0 %v249
    %v3236 = vpop.f32.mrb[0].mxu0
    %v3237 = vadd.f32 %v2957, %v3236
    %v3238 = vpop.f32.mrb[0].mxu0
    %3239 = vmatprep.mubr.f32.mxu0 %v267
    %3240 = vmatmul.mubr.f32.gmra.mrb[0].mxu0 %v266
    %v3241 = vpop.f32.mrb[0].mxu0
    %v3242 = vadd.f32 %v2962, %v3241
    %v3243 = vpop.f32.mrb[0].mxu0
    %3244 = vmatprep.mubr.f32.mxu0 %v284
    %3245 = vmatmul.mubr.f32.gmra.mrb[0].mxu0 %v283
    %v3246 = vpop.f32.mrb[0].mxu0
    %v3247 = vadd.f32 %v2967, %v3246
    %v3248 = vpop.f32.mrb[0].mxu0
    %3249 = vmatprep.mubr.f32.mxu0 %v301
    %3250 = vmatmul.mubr.f32.gmra.mrb[0].mxu0 %v300
    %v3251 = vpop.f32.mrb[0].mxu0
    %v3252 = vadd.f32 %v2972, %v3251
    %v3253 = vpop.f32.mrb[0].mxu0
    %3254 = vmatprep.mubr.f32.mxu0 %v318
    %3255 = vmatmul.mubr.f32.gmra.mrb[0].mxu0 %v317
    %v3256 = vpop.f32.mrb[0].mxu0
    %v3257 = vadd.f32 %v2977, %v3256
    %v3258 = vpop.f32.mrb[0].mxu0
    %3259 = vmatprep.mubr.f32.mxu0 %v335
    %3260 = vmatmul.mubr.f32.gmra.mrb[0].mxu0 %v334
    %v3261 = vpop.f32.mrb[0].mxu0
    %v3262 = vadd.f32 %v2982, %v3261
    %v3263 = vpop.f32.mrb[0].mxu0
    %3264 = vmatprep.mubr.f32.mxu0 %v352
    %3265 = vmatmul.mubr.f32.gmra.mrb[0].mxu0 %v351
    %v3266 = vpop.f32.mrb[0].mxu0
    %v3267 = vadd.f32 %v2987, %v3266
    %v3268 = vpop.f32.mrb[0].mxu0
    %3269 = vmatprep.mubr.f32.mxu0 %v369
    %3270 = vmatmul.mubr.f32.gmra.mrb[0].mxu0 %v368
    %v3271 = vpop.f32.mrb[0].mxu0
    %v3272 = vadd.f32 %v2992, %v3271
    %v3273 = vpop.f32.mrb[0].mxu0
    %3274 = vmatprep.mubr.f32.mxu0 %v386
    %3275 = vmatmul.mubr.f32.gmra.mrb[0].mxu0 %v385
    %v3276 = vpop.f32.mrb[0].mxu0
    %v3277 = vadd.f32 %v2997, %v3276
    %v3278 = vpop.f32.mrb[0].mxu0
    %3279 = vmatprep.mubr.f32.mxu0 %v403
    %3280 = vmatmul.mubr.f32.gmra.mrb[0].mxu0 %v402
    %v3281 = vpop.f32.mrb[0].mxu0
    %v3282 = vadd.f32 %v3002, %v3281
    %v3283 = vpop.f32.mrb[0].mxu0
    %3284 = vmatprep.mubr.f32.mxu0 %v420
    %3285 = vmatmul.mubr.f32.gmra.mrb[0].mxu0 %v419
    %v3286 = vpop.f32.mrb[0].mxu0
    %v3287 = vadd.f32 %v3007, %v3286
    %v3288 = vpop.f32.mrb[0].mxu0
    %3289 = vmatprep.mubr.f32.mxu0 %v437
    %3290 = vmatmul.mubr.f32.gmra.mrb[0].mxu0 %v436
    %v3291 = vpop.f32.mrb[0].mxu0
    %v3292 = vadd.f32 %v3012, %v3291
    %v3293 = vpop.f32.mrb[0].mxu0
    %3294 = vmatprep.mubr.f32.mxu0 %v454
    %3295 = vmatmul.mubr.f32.gmra.mrb[0].mxu0 %v453
    %v3296 = vpop.f32.mrb[0].mxu0
    %v3297 = vadd.f32 %v3017, %v3296
    %v3298 = vpop.f32.mrb[0].mxu0
    %3299 = vmatprep.mubr.f32.mxu0 %v471
    %3300 = vmatmul.mubr.f32.gmra.mrb[0].mxu0 %v470
    %v3301 = vpop.f32.mrb[0].mxu0
    %v3302 = vadd.f32 %v3022, %v3301
    %v3303 = vpop.f32.mrb[0].mxu0
    %3304 = vmatprep.mubr.f32.mxu0 %v488
    %3305 = vmatmul.mubr.f32.gmra.mrb[0].mxu0 %v487
    %v3306 = vpop.f32.mrb[0].mxu0
    %v3307 = vadd.f32 %v3027, %v3306
    %v3308 = vpop.f32.mrb[0].mxu0
    %3309 = vmatprep.mubr.f32.mxu0 %v505
    %3310 = vmatmul.mubr.f32.gmra.mrb[0].mxu0 %v504
    %v3311 = vpop.f32.mrb[0].mxu0
    %v3312 = vadd.f32 %v3032, %v3311
    %v3313 = vpop.f32.mrb[0].mxu0
    %3314 = vmatprep.mubr.f32.mxu0 %v522
    %3315 = vmatmul.mubr.f32.gmra.mrb[0].mxu0 %v521
    %v3316 = vpop.f32.mrb[0].mxu0
    %v3317 = vadd.f32 %v3037, %v3316
    %v3318 = vpop.f32.mrb[0].mxu0
    %3319 = vmatprep.mubr.f32.mxu0 %v539
    %3320 = vmatmul.mubr.f32.gmra.mrb[0].mxu0 %v538
    %v3321 = vpop.f32.mrb[0].mxu0
    %v3322 = vadd.f32 %v3042, %v3321
    %v3323 = vpop.f32.mrb[0].mxu0
    %3324 = vmatprep.mubr.f32.mxu0 %v556
    %3325 = vmatmul.mubr.f32.gmra.mrb[0].mxu0 %v555
    %v3326 = vpop.f32.mrb[0].mxu0
    %v3327 = vadd.f32 %v3047, %v3326
    %v3328 = vpop.f32.mrb[0].mxu0
    %3329 = vmatprep.mubr.f32.mxu0 %v573
    %3330 = vmatmul.mubr.f32.gmra.mrb[0].mxu0 %v572
    %v3331 = vpop.f32.mrb[0].mxu0
    %v3332 = vadd.f32 %v3052, %v3331
    %v3333 = vpop.f32.mrb[0].mxu0
    %3334 = vmatprep.mubr.f32.mxu0 %v590
    %3335 = vmatmul.mubr.f32.gmra.mrb[0].mxu0 %v589
    %v3336 = vpop.f32.mrb[0].mxu0
    %v3337 = vadd.f32 %v3057, %v3336
    %v3338 = vpop.f32.mrb[0].mxu0
    %3339 = vmatprep.mubr.f32.mxu0 %v607
    %3340 = vmatmul.mubr.f32.gmra.mrb[0].mxu0 %v606
    %v3341 = vpop.f32.mrb[0].mxu0
    %v3342 = vadd.f32 %v3062, %v3341
    %v3343 = vpop.f32.mrb[0].mxu0
    %3344 = vmatprep.mubr.f32.mxu0 %v624
    %3345 = vmatmul.mubr.f32.gmra.mrb[0].mxu0 %v623
    %v3346 = vpop.f32.mrb[0].mxu0
    %v3347 = vadd.f32 %v3067, %v3346
    %v3348 = vpop.f32.mrb[0].mxu0
    %3349 = vmatprep.mubr.f32.mxu0 %v641
    %3350 = vmatmul.mubr.f32.gmra.mrb[0].mxu0 %v640
    %v3351 = vpop.f32.mrb[0].mxu0
    %v3352 = vadd.f32 %v3072, %v3351
    %v3353 = vpop.f32.mrb[0].mxu0
    %3354 = vmatprep.mubr.f32.mxu0 %v658
    %3355 = vmatmul.mubr.f32.gmra.mrb[0].mxu0 %v657
    %v3356 = vpop.f32.mrb[0].mxu0
    %v3357 = vadd.f32 %v3077, %v3356
    %v3358 = vpop.f32.mrb[0].mxu0
    %3359 = vmatprep.mubr.f32.mxu0 %v675
    %3360 = vmatmul.mubr.f32.gmra.mrb[0].mxu0 %v674
    %v3361 = vpop.f32.mrb[0].mxu0
    %v3362 = vadd.f32 %v3082, %v3361
    %v3363 = vpop.f32.mrb[0].mxu0
    %3364 = vmatprep.mubr.f32.mxu0 %v692
    %3365 = vmatmul.mubr.f32.gmra.mrb[0].mxu0 %v691
    %v3366 = vpop.f32.mrb[0].mxu0
    %v3367 = vadd.f32 %v3087, %v3366
    %v3368 = vpop.f32.mrb[0].mxu0
    %3369 = vmatprep.mubr.f32.mxu0 %v709
    %3370 = vmatmul.mubr.f32.gmra.mrb[0].mxu0 %v708
    %v3371 = vpop.f32.mrb[0].mxu0
    %v3372 = vadd.f32 %v3092, %v3371
    %v3373 = vpop.f32.mrb[0].mxu0
    %3374 = vmatprep.mubr.f32.mxu0 %v726
    %3375 = vmatmul.mubr.f32.gmra.mrb[0].mxu0 %v725
    %v3376 = vpop.f32.mrb[0].mxu0
    %v3377 = vadd.f32 %v3097, %v3376
    %v3378 = vpop.f32.mrb[0].mxu0
    %3379 = vmatprep.mubr.f32.mxu0 %v743
    %3380 = vmatmul.mubr.f32.gmra.mrb[0].mxu0 %v742
    %v3381 = vpop.f32.mrb[0].mxu0
    %v3382 = vadd.f32 %v3102, %v3381
    %v3383 = vpop.f32.mrb[0].mxu0
    %3384 = vmatprep.mubr.f32.mxu0 %v760
    %3385 = vmatmul.mubr.f32.gmra.mrb[0].mxu0 %v759
    %v3386 = vpop.f32.mrb[0].mxu0
    %v3387 = vadd.f32 %v3107, %v3386
    %v3388 = vpop.f32.mrb[0].mxu0
    %3389 = vdwg.mxu0
    %3390 = vmatprep.subr.mxu0 0.0
    %3391 = vmatpush1.msra.mxu0 %v1018
    %3392 = vmatprep.subr.mxu0 0.0
    %3393 = vmatpush1.msra.mxu0 %v1019
    %3394 = vmatprep.subr.mxu0 0.0
    %3395 = vmatpush1.msra.mxu0 0.0
    %3396 = vmatprep.subr.mxu0 0.0
    %3397 = vmatpush1.msra.mxu0 0.0
    %3398 = vmatprep.subr.mxu0 0.0
    %3399 = vmatpush1.msra.mxu0 0.0
    %3400 = vmatprep.subr.mxu0 0.0
    %3401 = vmatpush1.msra.mxu0 0.0
    %3402 = vmatprep.subr.mxu0 0.0
    %3403 = vmatpush1.msra.mxu0 0.0
    %3404 = vmatprep.subr.mxu0 0.0
    %3405 = vmatpush1.msra.mxu0 0.0
    %3406 = vmatprep.subr.mxu0 0.0
    %3407 = vmatpush1.msra.mxu0 0.0
    %3408 = vmatprep.subr.mxu0 0.0
    %3409 = vmatpush1.msra.mxu0 0.0
    %3410 = vmatprep.subr.mxu0 0.0
    %3411 = vmatpush1.msra.mxu0 0.0
    %3412 = vmatprep.subr.mxu0 0.0
    %3413 = vmatpush1.msra.mxu0 0.0
    %3414 = vmatprep.subr.mxu0 0.0
    %3415 = vmatpush1.msra.mxu0 0.0
    %3416 = vmatprep.subr.mxu0 0.0
    %3417 = vmatpush1.msra.mxu0 0.0
    %3418 = vmatprep.subr.mxu0 0.0
    %3419 = vmatpush1.msra.mxu0 0.0
    %3420 = vmatprep.subr.mxu0 0.0
    %3421 = vmatpush1.msra.mxu0 0.0
    %3422 = vmatprep.subr.mxu0 0.0
    %3423 = vmatpush1.msra.mxu0 0.0
    %3424 = vmatprep.subr.mxu0 0.0
    %3425 = vmatpush1.msra.mxu0 0.0
    %3426 = vmatprep.subr.mxu0 0.0
    %3427 = vmatpush1.msra.mxu0 0.0
    %3428 = vmatprep.subr.mxu0 0.0
    %3429 = vmatpush1.msra.mxu0 0.0
    %3430 = vmatprep.subr.mxu0 0.0
    %3431 = vmatpush1.msra.mxu0 0.0
    %3432 = vmatprep.subr.mxu0 0.0
    %3433 = vmatpush1.msra.mxu0 0.0
    %3434 = vmatprep.subr.mxu0 0.0
    %3435 = vmatpush1.msra.mxu0 0.0
    %3436 = vmatprep.subr.mxu0 0.0
    %3437 = vmatpush1.msra.mxu0 0.0
    %3438 = vmatprep.subr.mxu0 0.0
    %3439 = vmatpush1.msra.mxu0 0.0
    %3440 = vmatprep.subr.mxu0 0.0
    %3441 = vmatpush1.msra.mxu0 0.0
    %3442 = vmatprep.subr.mxu0 0.0
    %3443 = vmatpush1.msra.mxu0 0.0
    %3444 = vmatprep.subr.mxu0 0.0
    %3445 = vmatpush1.msra.mxu0 0.0
    %3446 = vmatprep.subr.mxu0 0.0
    %3447 = vmatpush1.msra.mxu0 0.0
    %3448 = vmatprep.subr.mxu0 0.0
    %3449 = vmatpush1.msra.mxu0 0.0
    %3450 = vmatprep.subr.mxu0 0.0
    %3451 = vmatpush1.msra.mxu0 0.0
    %3452 = vmatprep.subr.mxu0 0.0
    %3453 = vmatpush1.msra.mxu0 0.0
    %3454 = vmatprep.mubr.f32.mxu0 0.0
    %3455 = vmatmul.mubr.f32.gmra.mrb[0].mxu0 %v1022
    %v3456 = vpop.f32.mrb[0].mxu0
    %v3457 = vadd.f32 %v3177, %v3456
    %v3458 = vpop.f32.mrb[0].mxu0
    %3459 = vmatprep.mubr.f32.mxu0 0.0
    %3460 = vmatmul.mubr.f32.gmra.mrb[0].mxu0 %v1025
    %v3461 = vpop.f32.mrb[0].mxu0
    %v3462 = vadd.f32 %v3182, %v3461
    %v3463 = vpop.f32.mrb[0].mxu0
    %3464 = vmatprep.mubr.f32.mxu0 0.0
    %3465 = vmatmul.mubr.f32.gmra.mrb[0].mxu0 %v1028
    %v3466 = vpop.f32.mrb[0].mxu0
    %v3467 = vadd.f32 %v3187, %v3466
    %v3468 = vpop.f32.mrb[0].mxu0
    %3469 = vmatprep.mubr.f32.mxu0 0.0
    %3470 = vmatmul.mubr.f32.gmra.mrb[0].mxu0 %v1031
    %v3471 = vpop.f32.mrb[0].mxu0
    %v3472 = vadd.f32 %v3192, %v3471
    %v3473 = vpop.f32.mrb[0].mxu0
    %3474 = vmatprep.mubr.f32.mxu0 0.0
    %3475 = vmatmul.mubr.f32.gmra.mrb[0].mxu0 %v1034
    %v3476 = vpop.f32.mrb[0].mxu0
    %v3477 = vadd.f32 %v3197, %v3476
    %v3478 = vpop.f32.mrb[0].mxu0
    %3479 = vmatprep.mubr.f32.mxu0 0.0
    %3480 = vmatmul.mubr.f32.gmra.mrb[0].mxu0 %v1037
    %v3481 = vpop.f32.mrb[0].mxu0
    %v3482 = vadd.f32 %v3202, %v3481
    %v3483 = vpop.f32.mrb[0].mxu0
    %3484 = vmatprep.mubr.f32.mxu0 0.0
    %3485 = vmatmul.mubr.f32.gmra.mrb[0].mxu0 %v1040
    %v3486 = vpop.f32.mrb[0].mxu0
    %v3487 = vadd.f32 %v3207, %v3486
    %v3488 = vpop.f32.mrb[0].mxu0
    %3489 = vmatprep.mubr.f32.mxu0 0.0
    %3490 = vmatmul.mubr.f32.gmra.mrb[0].mxu0 %v1043
    %v3491 = vpop.f32.mrb[0].mxu0
    %v3492 = vadd.f32 %v3212, %v3491
    %v3493 = vpop.f32.mrb[0].mxu0
    %3494 = vmatprep.mubr.f32.mxu0 0.0
    %3495 = vmatmul.mubr.f32.gmra.mrb[0].mxu0 %v1046
    %v3496 = vpop.f32.mrb[0].mxu0
    %v3497 = vadd.f32 %v3217, %v3496
    %v3498 = vpop.f32.mrb[0].mxu0
    %3499 = vmatprep.mubr.f32.mxu0 0.0
    %3500 = vmatmul.mubr.f32.gmra.mrb[0].mxu0 %v1049
    %v3501 = vpop.f32.mrb[0].mxu0
    %v3502 = vadd.f32 %v3222, %v3501
    %v3503 = vpop.f32.mrb[0].mxu0
    %3504 = vmatprep.mubr.f32.mxu0 0.0
    %3505 = vmatmul.mubr.f32.gmra.mrb[0].mxu0 %v1052
    %v3506 = vpop.f32.mrb[0].mxu0
    %v3507 = vadd.f32 %v3227, %v3506
    %v3508 = vpop.f32.mrb[0].mxu0
    %3509 = vmatprep.mubr.f32.mxu0 0.0
    %3510 = vmatmul.mubr.f32.gmra.mrb[0].mxu0 %v1055
    %v3511 = vpop.f32.mrb[0].mxu0
    %v3512 = vadd.f32 %v3232, %v3511
    %v3513 = vpop.f32.mrb[0].mxu0
    %3514 = vmatprep.mubr.f32.mxu0 0.0
    %3515 = vmatmul.mubr.f32.gmra.mrb[0].mxu0 %v1058
    %v3516 = vpop.f32.mrb[0].mxu0
    %v3517 = vadd.f32 %v3237, %v3516
    %v3518 = vpop.f32.mrb[0].mxu0
    %3519 = vmatprep.mubr.f32.mxu0 0.0
    %3520 = vmatmul.mubr.f32.gmra.mrb[0].mxu0 %v1061
    %v3521 = vpop.f32.mrb[0].mxu0
    %v3522 = vadd.f32 %v3242, %v3521
    %v3523 = vpop.f32.mrb[0].mxu0
    %3524 = vmatprep.mubr.f32.mxu0 0.0
    %3525 = vmatmul.mubr.f32.gmra.mrb[0].mxu0 %v1064
    %v3526 = vpop.f32.mrb[0].mxu0
    %v3527 = vadd.f32 %v3247, %v3526
    %v3528 = vpop.f32.mrb[0].mxu0
    %3529 = vmatprep.mubr.f32.mxu0 0.0
    %3530 = vmatmul.mubr.f32.gmra.mrb[0].mxu0 %v1067
    %v3531 = vpop.f32.mrb[0].mxu0
    %v3532 = vadd.f32 %v3252, %v3531
    %v3533 = vpop.f32.mrb[0].mxu0
    %3534 = vmatprep.mubr.f32.mxu0 0.0
    %3535 = vmatmul.mubr.f32.gmra.mrb[0].mxu0 %v1070
    %v3536 = vpop.f32.mrb[0].mxu0
    %v3537 = vadd.f32 %v3257, %v3536
    %v3538 = vpop.f32.mrb[0].mxu0
    %3539 = vmatprep.mubr.f32.mxu0 0.0
    %3540 = vmatmul.mubr.f32.gmra.mrb[0].mxu0 %v1073
    %v3541 = vpop.f32.mrb[0].mxu0
    %v3542 = vadd.f32 %v3262, %v3541
    %v3543 = vpop.f32.mrb[0].mxu0
    %3544 = vmatprep.mubr.f32.mxu0 0.0
    %3545 = vmatmul.mubr.f32.gmra.mrb[0].mxu0 %v1076
    %v3546 = vpop.f32.mrb[0].mxu0
    %v3547 = vadd.f32 %v3267, %v3546
    %v3548 = vpop.f32.mrb[0].mxu0
    %3549 = vmatprep.mubr.f32.mxu0 0.0
    %3550 = vmatmul.mubr.f32.gmra.mrb[0].mxu0 %v1079
    %v3551 = vpop.f32.mrb[0].mxu0
    %v3552 = vadd.f32 %v3272, %v3551
    %v3553 = vpop.f32.mrb[0].mxu0
    %3554 = vmatprep.mubr.f32.mxu0 0.0
    %3555 = vmatmul.mubr.f32.gmra.mrb[0].mxu0 %v1082
    %v3556 = vpop.f32.mrb[0].mxu0
    %v3557 = vadd.f32 %v3277, %v3556
    %v3558 = vpop.f32.mrb[0].mxu0
    %3559 = vmatprep.mubr.f32.mxu0 0.0
    %3560 = vmatmul.mubr.f32.gmra.mrb[0].mxu0 %v1085
    %v3561 = vpop.f32.mrb[0].mxu0
    %v3562 = vadd.f32 %v3282, %v3561
    %v3563 = vpop.f32.mrb[0].mxu0
    %3564 = vmatprep.mubr.f32.mxu0 0.0
    %3565 = vmatmul.mubr.f32.gmra.mrb[0].mxu0 %v1088
    %v3566 = vpop.f32.mrb[0].mxu0
    %v3567 = vadd.f32 %v3287, %v3566
    %v3568 = vpop.f32.mrb[0].mxu0
    %3569 = vmatprep.mubr.f32.mxu0 0.0
    %3570 = vmatmul.mubr.f32.gmra.mrb[0].mxu0 %v1091
    %v3571 = vpop.f32.mrb[0].mxu0
    %v3572 = vadd.f32 %v3292, %v3571
    %v3573 = vpop.f32.mrb[0].mxu0
    %3574 = vmatprep.mubr.f32.mxu0 0.0
    %3575 = vmatmul.mubr.f32.gmra.mrb[0].mxu0 %v1094
    %v3576 = vpop.f32.mrb[0].mxu0
    %v3577 = vadd.f32 %v3297, %v3576
    %v3578 = vpop.f32.mrb[0].mxu0
    %3579 = vmatprep.mubr.f32.mxu0 0.0
    %3580 = vmatmul.mubr.f32.gmra.mrb[0].mxu0 %v1097
    %v3581 = vpop.f32.mrb[0].mxu0
    %v3582 = vadd.f32 %v3302, %v3581
    %v3583 = vpop.f32.mrb[0].mxu0
    %3584 = vmatprep.mubr.f32.mxu0 0.0
    %3585 = vmatmul.mubr.f32.gmra.mrb[0].mxu0 %v1100
    %v3586 = vpop.f32.mrb[0].mxu0
    %v3587 = vadd.f32 %v3307, %v3586
    %v3588 = vpop.f32.mrb[0].mxu0
    %3589 = vmatprep.mubr.f32.mxu0 0.0
    %3590 = vmatmul.mubr.f32.gmra.mrb[0].mxu0 %v1103
    %v3591 = vpop.f32.mrb[0].mxu0
    %v3592 = vadd.f32 %v3312, %v3591
    %v3593 = vpop.f32.mrb[0].mxu0
    %3594 = vmatprep.mubr.f32.mxu0 0.0
    %3595 = vmatmul.mubr.f32.gmra.mrb[0].mxu0 %v1106
    %v3596 = vpop.f32.mrb[0].mxu0
    %v3597 = vadd.f32 %v3317, %v3596
    %v3598 = vpop.f32.mrb[0].mxu0
    %3599 = vmatprep.mubr.f32.mxu0 0.0
    %3600 = vmatmul.mubr.f32.gmra.mrb[0].mxu0 %v1109
    %v3601 = vpop.f32.mrb[0].mxu0
    %v3602 = vadd.f32 %v3322, %v3601
    %v3603 = vpop.f32.mrb[0].mxu0
    %3604 = vmatprep.mubr.f32.mxu0 0.0
    %3605 = vmatmul.mubr.f32.gmra.mrb[0].mxu0 %v1112
    %v3606 = vpop.f32.mrb[0].mxu0
    %v3607 = vadd.f32 %v3327, %v3606
    %v3608 = vpop.f32.mrb[0].mxu0
    %3609 = vmatprep.mubr.f32.mxu0 0.0
    %3610 = vmatmul.mubr.f32.gmra.mrb[0].mxu0 %v1115
    %v3611 = vpop.f32.mrb[0].mxu0
    %v3612 = vadd.f32 %v3332, %v3611
    %v3613 = vpop.f32.mrb[0].mxu0
    %3614 = vmatprep.mubr.f32.mxu0 0.0
    %3615 = vmatmul.mubr.f32.gmra.mrb[0].mxu0 %v1118
    %v3616 = vpop.f32.mrb[0].mxu0
    %v3617 = vadd.f32 %v3337, %v3616
    %v3618 = vpop.f32.mrb[0].mxu0
    %3619 = vmatprep.mubr.f32.mxu0 0.0
    %3620 = vmatmul.mubr.f32.gmra.mrb[0].mxu0 %v1121
    %v3621 = vpop.f32.mrb[0].mxu0
    %v3622 = vadd.f32 %v3342, %v3621
    %v3623 = vpop.f32.mrb[0].mxu0
    %3624 = vmatprep.mubr.f32.mxu0 0.0
    %3625 = vmatmul.mubr.f32.gmra.mrb[0].mxu0 %v1124
    %v3626 = vpop.f32.mrb[0].mxu0
    %v3627 = vadd.f32 %v3347, %v3626
    %v3628 = vpop.f32.mrb[0].mxu0
    %3629 = vmatprep.mubr.f32.mxu0 0.0
    %3630 = vmatmul.mubr.f32.gmra.mrb[0].mxu0 %v1127
    %v3631 = vpop.f32.mrb[0].mxu0
    %v3632 = vadd.f32 %v3352, %v3631
    %v3633 = vpop.f32.mrb[0].mxu0
    %3634 = vmatprep.mubr.f32.mxu0 0.0
    %3635 = vmatmul.mubr.f32.gmra.mrb[0].mxu0 %v1130
    %v3636 = vpop.f32.mrb[0].mxu0
    %v3637 = vadd.f32 %v3357, %v3636
    %v3638 = vpop.f32.mrb[0].mxu0
    %3639 = vmatprep.mubr.f32.mxu0 0.0
    %3640 = vmatmul.mubr.f32.gmra.mrb[0].mxu0 %v1133
    %v3641 = vpop.f32.mrb[0].mxu0
    %v3642 = vadd.f32 %v3362, %v3641
    %v3643 = vpop.f32.mrb[0].mxu0
    %3644 = vmatprep.mubr.f32.mxu0 0.0
    %3645 = vmatmul.mubr.f32.gmra.mrb[0].mxu0 %v1136
    %v3646 = vpop.f32.mrb[0].mxu0
    %v3647 = vadd.f32 %v3367, %v3646
    %v3648 = vpop.f32.mrb[0].mxu0
    %3649 = vmatprep.mubr.f32.mxu0 0.0
    %3650 = vmatmul.mubr.f32.gmra.mrb[0].mxu0 %v1139
    %v3651 = vpop.f32.mrb[0].mxu0
    %v3652 = vadd.f32 %v3372, %v3651
    %v3653 = vpop.f32.mrb[0].mxu0
    %3654 = vmatprep.mubr.f32.mxu0 0.0
    %3655 = vmatmul.mubr.f32.gmra.mrb[0].mxu0 %v1142
    %v3656 = vpop.f32.mrb[0].mxu0
    %v3657 = vadd.f32 %v3377, %v3656
    %v3658 = vpop.f32.mrb[0].mxu0
    %3659 = vmatprep.mubr.f32.mxu0 0.0
    %3660 = vmatmul.mubr.f32.gmra.mrb[0].mxu0 %v1145
    %v3661 = vpop.f32.mrb[0].mxu0
    %v3662 = vadd.f32 %v3382, %v3661
    %v3663 = vpop.f32.mrb[0].mxu0
    %3664 = vmatprep.mubr.f32.mxu0 0.0
    %3665 = vmatmul.mubr.f32.gmra.mrb[0].mxu0 %v1148
    %v3666 = vpop.f32.mrb[0].mxu0
    %v3667 = vadd.f32 %v3387, %v3666
    %v3668 = vpop.f32.mrb[0].mxu0
    %3669 = vdwg.mxu0
    %vm3670 = vcmask 400384
    %v3671 = vsel %vm3670, %v3457, 0.0
    %3672 = vadd.xlane.f32.xlu0 %v3671
    %v3673 = vpop.xlane.xlu0 %3672
    %v3674 = vsel %vm3670, %v3462, 0.0
    %3675 = vadd.xlane.f32.xlu0 %v3674
    %v3676 = vpop.xlane.xlu0 %3675
    %v3677 = vsel %vm3670, %v3467, 0.0
    %3678 = vadd.xlane.f32.xlu0 %v3677
    %v3679 = vpop.xlane.xlu0 %3678
    %v3680 = vsel %vm3670, %v3472, 0.0
    %3681 = vadd.xlane.f32.xlu0 %v3680
    %v3682 = vpop.xlane.xlu0 %3681
    %v3683 = vsel %vm3670, %v3477, 0.0
    %3684 = vadd.xlane.f32.xlu0 %v3683
    %v3685 = vpop.xlane.xlu0 %3684
    %v3686 = vsel %vm3670, %v3482, 0.0
    %3687 = vadd.xlane.f32.xlu0 %v3686
    %v3688 = vpop.xlane.xlu0 %3687
    %v3689 = vsel %vm3670, %v3487, 0.0
    %3690 = vadd.xlane.f32.xlu0 %v3689
    %v3691 = vpop.xlane.xlu0 %3690
    %v3692 = vsel %vm3670, %v3492, 0.0
    %3693 = vadd.xlane.f32.xlu0 %v3692
    %v3694 = vpop.xlane.xlu0 %3693
    %v3695 = vsel %vm3670, %v3497, 0.0
    %3696 = vadd.xlane.f32.xlu0 %v3695
    %v3697 = vpop.xlane.xlu0 %3696
    %v3698 = vsel %vm3670, %v3502, 0.0
    %3699 = vadd.xlane.f32.xlu0 %v3698
    %v3700 = vpop.xlane.xlu0 %3699
    %v3701 = vsel %vm3670, %v3507, 0.0
    %3702 = vadd.xlane.f32.xlu0 %v3701
    %v3703 = vpop.xlane.xlu0 %3702
    %v3704 = vsel %vm3670, %v3512, 0.0
    %3705 = vadd.xlane.f32.xlu0 %v3704
    %v3706 = vpop.xlane.xlu0 %3705
    %v3707 = vsel %vm3670, %v3517, 0.0
    %3708 = vadd.xlane.f32.xlu0 %v3707
    %v3709 = vpop.xlane.xlu0 %3708
    %v3710 = vsel %vm3670, %v3522, 0.0
    %3711 = vadd.xlane.f32.xlu0 %v3710
    %v3712 = vpop.xlane.xlu0 %3711
    %v3713 = vsel %vm3670, %v3527, 0.0
    %3714 = vadd.xlane.f32.xlu0 %v3713
    %v3715 = vpop.xlane.xlu0 %3714
    %v3716 = vsel %vm3670, %v3532, 0.0
    %3717 = vadd.xlane.f32.xlu0 %v3716
    %v3718 = vpop.xlane.xlu0 %3717
    %v3719 = vsel %vm3670, %v3537, 0.0
    %3720 = vadd.xlane.f32.xlu0 %v3719
    %v3721 = vpop.xlane.xlu0 %3720
    %v3722 = vsel %vm3670, %v3542, 0.0
    %3723 = vadd.xlane.f32.xlu0 %v3722
    %v3724 = vpop.xlane.xlu0 %3723
    %v3725 = vsel %vm3670, %v3547, 0.0
    %3726 = vadd.xlane.f32.xlu0 %v3725
    %v3727 = vpop.xlane.xlu0 %3726
    %v3728 = vsel %vm3670, %v3552, 0.0
    %3729 = vadd.xlane.f32.xlu0 %v3728
    %v3730 = vpop.xlane.xlu0 %3729
    %v3731 = vsel %vm3670, %v3557, 0.0
    %3732 = vadd.xlane.f32.xlu0 %v3731
    %v3733 = vpop.xlane.xlu0 %3732
    %v3734 = vsel %vm3670, %v3562, 0.0
    %3735 = vadd.xlane.f32.xlu0 %v3734
    %v3736 = vpop.xlane.xlu0 %3735
    %v3737 = vsel %vm3670, %v3567, 0.0
    %3738 = vadd.xlane.f32.xlu0 %v3737
    %v3739 = vpop.xlane.xlu0 %3738
    %v3740 = vsel %vm3670, %v3572, 0.0
    %3741 = vadd.xlane.f32.xlu0 %v3740
    %v3742 = vpop.xlane.xlu0 %3741
    %v3743 = vsel %vm3670, %v3577, 0.0
    %3744 = vadd.xlane.f32.xlu0 %v3743
    %v3745 = vpop.xlane.xlu0 %3744
    %v3746 = vsel %vm3670, %v3582, 0.0
    %3747 = vadd.xlane.f32.xlu0 %v3746
    %v3748 = vpop.xlane.xlu0 %3747
    %v3749 = vsel %vm3670, %v3587, 0.0
    %3750 = vadd.xlane.f32.xlu0 %v3749
    %v3751 = vpop.xlane.xlu0 %3750
    %v3752 = vsel %vm3670, %v3592, 0.0
    %3753 = vadd.xlane.f32.xlu0 %v3752
    %v3754 = vpop.xlane.xlu0 %3753
    %v3755 = vsel %vm3670, %v3597, 0.0
    %3756 = vadd.xlane.f32.xlu0 %v3755
    %v3757 = vpop.xlane.xlu0 %3756
    %v3758 = vsel %vm3670, %v3602, 0.0
    %3759 = vadd.xlane.f32.xlu0 %v3758
    %v3760 = vpop.xlane.xlu0 %3759
    %v3761 = vsel %vm3670, %v3607, 0.0
    %3762 = vadd.xlane.f32.xlu0 %v3761
    %v3763 = vpop.xlane.xlu0 %3762
    %v3764 = vsel %vm3670, %v3612, 0.0
    %3765 = vadd.xlane.f32.xlu0 %v3764
    %v3766 = vpop.xlane.xlu0 %3765
    %v3767 = vsel %vm3670, %v3617, 0.0
    %3768 = vadd.xlane.f32.xlu0 %v3767
    %v3769 = vpop.xlane.xlu0 %3768
    %v3770 = vsel %vm3670, %v3622, 0.0
    %3771 = vadd.xlane.f32.xlu0 %v3770
    %v3772 = vpop.xlane.xlu0 %3771
    %v3773 = vsel %vm3670, %v3627, 0.0
    %3774 = vadd.xlane.f32.xlu0 %v3773
    %v3775 = vpop.xlane.xlu0 %3774
    %v3776 = vsel %vm3670, %v3632, 0.0
    %3777 = vadd.xlane.f32.xlu0 %v3776
    %v3778 = vpop.xlane.xlu0 %3777
    %v3779 = vsel %vm3670, %v3637, 0.0
    %3780 = vadd.xlane.f32.xlu0 %v3779
    %v3781 = vpop.xlane.xlu0 %3780
    %v3782 = vsel %vm3670, %v3642, 0.0
    %3783 = vadd.xlane.f32.xlu0 %v3782
    %v3784 = vpop.xlane.xlu0 %3783
    %v3785 = vsel %vm3670, %v3647, 0.0
    %3786 = vadd.xlane.f32.xlu0 %v3785
    %v3787 = vpop.xlane.xlu0 %3786
    %v3788 = vsel %vm3670, %v3652, 0.0
    %3789 = vadd.xlane.f32.xlu0 %v3788
    %v3790 = vpop.xlane.xlu0 %3789
    %v3791 = vsel %vm3670, %v3657, 0.0
    %3792 = vadd.xlane.f32.xlu0 %v3791
    %v3793 = vpop.xlane.xlu0 %3792
    %v3794 = vsel %vm3670, %v3662, 0.0
    %3795 = vadd.xlane.f32.xlu0 %v3794
    %v3796 = vpop.xlane.xlu0 %3795
    %v3797 = vsel %vm3670, %v3667, 0.0
    %3798 = vadd.xlane.f32.xlu0 %v3797
    %v3799 = vpop.xlane.xlu0 %3798
    %v3800 = vmul.f32 %v3673, 0.020408163
    %v3801 = vmul.f32 %v3676, 0.020408163
    %v3802 = vmul.f32 %v3679, 0.020408163
    %v3803 = vmul.f32 %v3682, 0.020408163
    %v3804 = vmul.f32 %v3685, 0.020408163
    %v3805 = vmul.f32 %v3688, 0.020408163
    %v3806 = vmul.f32 %v3691, 0.020408163
    %v3807 = vmul.f32 %v3694, 0.020408163
    %v3808 = vmul.f32 %v3697, 0.020408163
    %v3809 = vmul.f32 %v3700, 0.020408163
    %v3810 = vmul.f32 %v3703, 0.020408163
    %v3811 = vmul.f32 %v3706, 0.020408163
    %v3812 = vmul.f32 %v3709, 0.020408163
    %v3813 = vmul.f32 %v3712, 0.020408163
    %v3814 = vmul.f32 %v3715, 0.020408163
    %v3815 = vmul.f32 %v3718, 0.020408163
    %v3816 = vmul.f32 %v3721, 0.020408163
    %v3817 = vmul.f32 %v3724, 0.020408163
    %v3818 = vmul.f32 %v3727, 0.020408163
    %v3819 = vmul.f32 %v3730, 0.020408163
    %v3820 = vmul.f32 %v3733, 0.020408163
    %v3821 = vmul.f32 %v3736, 0.020408163
    %v3822 = vmul.f32 %v3739, 0.020408163
    %v3823 = vmul.f32 %v3742, 0.020408163
    %v3824 = vmul.f32 %v3745, 0.020408163
    %v3825 = vmul.f32 %v3748, 0.020408163
    %v3826 = vmul.f32 %v3751, 0.020408163
    %v3827 = vmul.f32 %v3754, 0.020408163
    %v3828 = vmul.f32 %v3757, 0.020408163
    %v3829 = vmul.f32 %v3760, 0.020408163
    %v3830 = vmul.f32 %v3763, 0.020408163
    %v3831 = vmul.f32 %v3766, 0.020408163
    %v3832 = vmul.f32 %v3769, 0.020408163
    %v3833 = vmul.f32 %v3772, 0.020408163
    %v3834 = vmul.f32 %v3775, 0.020408163
    %v3835 = vmul.f32 %v3778, 0.020408163
    %v3836 = vmul.f32 %v3781, 0.020408163
    %v3837 = vmul.f32 %v3784, 0.020408163
    %v3838 = vmul.f32 %v3787, 0.020408163
    %v3839 = vmul.f32 %v3790, 0.020408163
    %v3840 = vmul.f32 %v3793, 0.020408163
    %v3841 = vmul.f32 %v3796, 0.020408163
    %v3842 = vmul.f32 %v3799, 0.020408163
    %v3843 = vsub.f32 %v3457, %v3800
    %v3844 = vsub.f32 %v3462, %v3801
    %v3845 = vsub.f32 %v3467, %v3802
    %v3846 = vsub.f32 %v3472, %v3803
    %v3847 = vsub.f32 %v3477, %v3804
    %v3848 = vsub.f32 %v3482, %v3805
    %v3849 = vsub.f32 %v3487, %v3806
    %v3850 = vsub.f32 %v3492, %v3807
    %v3851 = vsub.f32 %v3497, %v3808
    %v3852 = vsub.f32 %v3502, %v3809
    %v3853 = vsub.f32 %v3507, %v3810
    %v3854 = vsub.f32 %v3512, %v3811
    %v3855 = vsub.f32 %v3517, %v3812
    %v3856 = vsub.f32 %v3522, %v3813
    %v3857 = vsub.f32 %v3527, %v3814
    %v3858 = vsub.f32 %v3532, %v3815
    %v3859 = vsub.f32 %v3537, %v3816
    %v3860 = vsub.f32 %v3542, %v3817
    %v3861 = vsub.f32 %v3547, %v3818
    %v3862 = vsub.f32 %v3552, %v3819
    %v3863 = vsub.f32 %v3557, %v3820
    %v3864 = vsub.f32 %v3562, %v3821
    %v3865 = vsub.f32 %v3567, %v3822
    %v3866 = vsub.f32 %v3572, %v3823
    %v3867 = vsub.f32 %v3577, %v3824
    %v3868 = vsub.f32 %v3582, %v3825
    %v3869 = vsub.f32 %v3587, %v3826
    %v3870 = vsub.f32 %v3592, %v3827
    %v3871 = vsub.f32 %v3597, %v3828
    %v3872 = vsub.f32 %v3602, %v3829
    %v3873 = vsub.f32 %v3607, %v3830
    %v3874 = vsub.f32 %v3612, %v3831
    %v3875 = vsub.f32 %v3617, %v3832
    %v3876 = vsub.f32 %v3622, %v3833
    %v3877 = vsub.f32 %v3627, %v3834
    %v3878 = vsub.f32 %v3632, %v3835
    %v3879 = vsub.f32 %v3637, %v3836
    %v3880 = vsub.f32 %v3642, %v3837
    %v3881 = vsub.f32 %v3647, %v3838
    %v3882 = vsub.f32 %v3652, %v3839
    %v3883 = vsub.f32 %v3657, %v3840
    %v3884 = vsub.f32 %v3662, %v3841
    %v3885 = vsub.f32 %v3667, %v3842
    %v3886 = vmul.f32 %v3843, %v3843
    %v3887 = vmul.f32 %v3844, %v3844
    %v3888 = vmul.f32 %v3845, %v3845
    %v3889 = vmul.f32 %v3846, %v3846
    %v3890 = vmul.f32 %v3847, %v3847
    %v3891 = vmul.f32 %v3848, %v3848
    %v3892 = vmul.f32 %v3849, %v3849
    %v3893 = vmul.f32 %v3850, %v3850
    %v3894 = vmul.f32 %v3851, %v3851
    %v3895 = vmul.f32 %v3852, %v3852
    %v3896 = vmul.f32 %v3853, %v3853
    %v3897 = vmul.f32 %v3854, %v3854
    %v3898 = vmul.f32 %v3855, %v3855
    %v3899 = vmul.f32 %v3856, %v3856
    %v3900 = vmul.f32 %v3857, %v3857
    %v3901 = vmul.f32 %v3858, %v3858
    %v3902 = vmul.f32 %v3859, %v3859
    %v3903 = vmul.f32 %v3860, %v3860
    %v3904 = vmul.f32 %v3861, %v3861
    %v3905 = vmul.f32 %v3862, %v3862
    %v3906 = vmul.f32 %v3863, %v3863
    %v3907 = vmul.f32 %v3864, %v3864
    %v3908 = vmul.f32 %v3865, %v3865
    %v3909 = vmul.f32 %v3866, %v3866
    %v3910 = vmul.f32 %v3867, %v3867
    %v3911 = vmul.f32 %v3868, %v3868
    %v3912 = vmul.f32 %v3869, %v3869
    %v3913 = vmul.f32 %v3870, %v3870
    %v3914 = vmul.f32 %v3871, %v3871
    %v3915 = vmul.f32 %v3872, %v3872
    %v3916 = vmul.f32 %v3873, %v3873
    %v3917 = vmul.f32 %v3874, %v3874
    %v3918 = vmul.f32 %v3875, %v3875
    %v3919 = vmul.f32 %v3876, %v3876
    %v3920 = vmul.f32 %v3877, %v3877
    %v3921 = vmul.f32 %v3878, %v3878
    %v3922 = vmul.f32 %v3879, %v3879
    %v3923 = vmul.f32 %v3880, %v3880
    %v3924 = vmul.f32 %v3881, %v3881
    %v3925 = vmul.f32 %v3882, %v3882
    %v3926 = vmul.f32 %v3883, %v3883
    %v3927 = vmul.f32 %v3884, %v3884
    %v3928 = vmul.f32 %v3885, %v3885
    %v3929 = vsel %vm3670, %v3886, 0.0
    %3930 = vadd.xlane.f32.xlu0 %v3929
    %v3931 = vpop.xlane.xlu0 %3930
    %v3932 = vsel %vm3670, %v3887, 0.0
    %3933 = vadd.xlane.f32.xlu0 %v3932
    %v3934 = vpop.xlane.xlu0 %3933
    %v3935 = vsel %vm3670, %v3888, 0.0
    %3936 = vadd.xlane.f32.xlu0 %v3935
    %v3937 = vpop.xlane.xlu0 %3936
    %v3938 = vsel %vm3670, %v3889, 0.0
    %3939 = vadd.xlane.f32.xlu0 %v3938
    %v3940 = vpop.xlane.xlu0 %3939
    %v3941 = vsel %vm3670, %v3890, 0.0
    %3942 = vadd.xlane.f32.xlu0 %v3941
    %v3943 = vpop.xlane.xlu0 %3942
    %v3944 = vsel %vm3670, %v3891, 0.0
    %3945 = vadd.xlane.f32.xlu0 %v3944
    %v3946 = vpop.xlane.xlu0 %3945
    %v3947 = vsel %vm3670, %v3892, 0.0
    %3948 = vadd.xlane.f32.xlu0 %v3947
    %v3949 = vpop.xlane.xlu0 %3948
    %v3950 = vsel %vm3670, %v3893, 0.0
    %3951 = vadd.xlane.f32.xlu0 %v3950
    %v3952 = vpop.xlane.xlu0 %3951
    %v3953 = vsel %vm3670, %v3894, 0.0
    %3954 = vadd.xlane.f32.xlu0 %v3953
    %v3955 = vpop.xlane.xlu0 %3954
    %v3956 = vsel %vm3670, %v3895, 0.0
    %3957 = vadd.xlane.f32.xlu0 %v3956
    %v3958 = vpop.xlane.xlu0 %3957
    %v3959 = vsel %vm3670, %v3896, 0.0
    %3960 = vadd.xlane.f32.xlu0 %v3959
    %v3961 = vpop.xlane.xlu0 %3960
    %v3962 = vsel %vm3670, %v3897, 0.0
    %3963 = vadd.xlane.f32.xlu0 %v3962
    %v3964 = vpop.xlane.xlu0 %3963
    %v3965 = vsel %vm3670, %v3898, 0.0
    %3966 = vadd.xlane.f32.xlu0 %v3965
    %v3967 = vpop.xlane.xlu0 %3966
    %v3968 = vsel %vm3670, %v3899, 0.0
    %3969 = vadd.xlane.f32.xlu0 %v3968
    %v3970 = vpop.xlane.xlu0 %3969
    %v3971 = vsel %vm3670, %v3900, 0.0
    %3972 = vadd.xlane.f32.xlu0 %v3971
    %v3973 = vpop.xlane.xlu0 %3972
    %v3974 = vsel %vm3670, %v3901, 0.0
    %3975 = vadd.xlane.f32.xlu0 %v3974
    %v3976 = vpop.xlane.xlu0 %3975
    %v3977 = vsel %vm3670, %v3902, 0.0
    %3978 = vadd.xlane.f32.xlu0 %v3977
    %v3979 = vpop.xlane.xlu0 %3978
    %v3980 = vsel %vm3670, %v3903, 0.0
    %3981 = vadd.xlane.f32.xlu0 %v3980
    %v3982 = vpop.xlane.xlu0 %3981
    %v3983 = vsel %vm3670, %v3904, 0.0
    %3984 = vadd.xlane.f32.xlu0 %v3983
    %v3985 = vpop.xlane.xlu0 %3984
    %v3986 = vsel %vm3670, %v3905, 0.0
    %3987 = vadd.xlane.f32.xlu0 %v3986
    %v3988 = vpop.xlane.xlu0 %3987
    %v3989 = vsel %vm3670, %v3906, 0.0
    %3990 = vadd.xlane.f32.xlu0 %v3989
    %v3991 = vpop.xlane.xlu0 %3990
    %v3992 = vsel %vm3670, %v3907, 0.0
    %3993 = vadd.xlane.f32.xlu0 %v3992
    %v3994 = vpop.xlane.xlu0 %3993
    %v3995 = vsel %vm3670, %v3908, 0.0
    %3996 = vadd.xlane.f32.xlu0 %v3995
    %v3997 = vpop.xlane.xlu0 %3996
    %v3998 = vsel %vm3670, %v3909, 0.0
    %3999 = vadd.xlane.f32.xlu0 %v3998
    %v4000 = vpop.xlane.xlu0 %3999
    %v4001 = vsel %vm3670, %v3910, 0.0
    %4002 = vadd.xlane.f32.xlu0 %v4001
    %v4003 = vpop.xlane.xlu0 %4002
    %v4004 = vsel %vm3670, %v3911, 0.0
    %4005 = vadd.xlane.f32.xlu0 %v4004
    %v4006 = vpop.xlane.xlu0 %4005
    %v4007 = vsel %vm3670, %v3912, 0.0
    %4008 = vadd.xlane.f32.xlu0 %v4007
    %v4009 = vpop.xlane.xlu0 %4008
    %v4010 = vsel %vm3670, %v3913, 0.0
    %4011 = vadd.xlane.f32.xlu0 %v4010
    %v4012 = vpop.xlane.xlu0 %4011
    %v4013 = vsel %vm3670, %v3914, 0.0
    %4014 = vadd.xlane.f32.xlu0 %v4013
    %v4015 = vpop.xlane.xlu0 %4014
    %v4016 = vsel %vm3670, %v3915, 0.0
    %4017 = vadd.xlane.f32.xlu0 %v4016
    %v4018 = vpop.xlane.xlu0 %4017
    %v4019 = vsel %vm3670, %v3916, 0.0
    %4020 = vadd.xlane.f32.xlu0 %v4019
    %v4021 = vpop.xlane.xlu0 %4020
    %v4022 = vsel %vm3670, %v3917, 0.0
    %4023 = vadd.xlane.f32.xlu0 %v4022
    %v4024 = vpop.xlane.xlu0 %4023
    %v4025 = vsel %vm3670, %v3918, 0.0
    %4026 = vadd.xlane.f32.xlu0 %v4025
    %v4027 = vpop.xlane.xlu0 %4026
    %v4028 = vsel %vm3670, %v3919, 0.0
    %4029 = vadd.xlane.f32.xlu0 %v4028
    %v4030 = vpop.xlane.xlu0 %4029
    %v4031 = vsel %vm3670, %v3920, 0.0
    %4032 = vadd.xlane.f32.xlu0 %v4031
    %v4033 = vpop.xlane.xlu0 %4032
    %v4034 = vsel %vm3670, %v3921, 0.0
    %4035 = vadd.xlane.f32.xlu0 %v4034
    %v4036 = vpop.xlane.xlu0 %4035
    %v4037 = vsel %vm3670, %v3922, 0.0
    %4038 = vadd.xlane.f32.xlu0 %v4037
    %v4039 = vpop.xlane.xlu0 %4038
    %v4040 = vsel %vm3670, %v3923, 0.0
    %4041 = vadd.xlane.f32.xlu0 %v4040
    %v4042 = vpop.xlane.xlu0 %4041
    %v4043 = vsel %vm3670, %v3924, 0.0
    %4044 = vadd.xlane.f32.xlu0 %v4043
    %v4045 = vpop.xlane.xlu0 %4044
    %v4046 = vsel %vm3670, %v3925, 0.0
    %4047 = vadd.xlane.f32.xlu0 %v4046
    %v4048 = vpop.xlane.xlu0 %4047
    %v4049 = vsel %vm3670, %v3926, 0.0
    %4050 = vadd.xlane.f32.xlu0 %v4049
    %v4051 = vpop.xlane.xlu0 %4050
    %v4052 = vsel %vm3670, %v3927, 0.0
    %4053 = vadd.xlane.f32.xlu0 %v4052
    %v4054 = vpop.xlane.xlu0 %4053
    %v4055 = vsel %vm3670, %v3928, 0.0
    %4056 = vadd.xlane.f32.xlu0 %v4055
    %v4057 = vpop.xlane.xlu0 %4056
    %v4058 = vmul.f32 %v3931, 0.020408163
    %v4059 = vmul.f32 %v3934, 0.020408163
    %v4060 = vmul.f32 %v3937, 0.020408163
    %v4061 = vmul.f32 %v3940, 0.020408163
    %v4062 = vmul.f32 %v3943, 0.020408163
    %v4063 = vmul.f32 %v3946, 0.020408163
    %v4064 = vmul.f32 %v3949, 0.020408163
    %v4065 = vmul.f32 %v3952, 0.020408163
    %v4066 = vmul.f32 %v3955, 0.020408163
    %v4067 = vmul.f32 %v3958, 0.020408163
    %v4068 = vmul.f32 %v3961, 0.020408163
    %v4069 = vmul.f32 %v3964, 0.020408163
    %v4070 = vmul.f32 %v3967, 0.020408163
    %v4071 = vmul.f32 %v3970, 0.020408163
    %v4072 = vmul.f32 %v3973, 0.020408163
    %v4073 = vmul.f32 %v3976, 0.020408163
    %v4074 = vmul.f32 %v3979, 0.020408163
    %v4075 = vmul.f32 %v3982, 0.020408163
    %v4076 = vmul.f32 %v3985, 0.020408163
    %v4077 = vmul.f32 %v3988, 0.020408163
    %v4078 = vmul.f32 %v3991, 0.020408163
    %v4079 = vmul.f32 %v3994, 0.020408163
    %v4080 = vmul.f32 %v3997, 0.020408163
    %v4081 = vmul.f32 %v4000, 0.020408163
    %v4082 = vmul.f32 %v4003, 0.020408163
    %v4083 = vmul.f32 %v4006, 0.020408163
    %v4084 = vmul.f32 %v4009, 0.020408163
    %v4085 = vmul.f32 %v4012, 0.020408163
    %v4086 = vmul.f32 %v4015, 0.020408163
    %v4087 = vmul.f32 %v4018, 0.020408163
    %v4088 = vmul.f32 %v4021, 0.020408163
    %v4089 = vmul.f32 %v4024, 0.020408163
    %v4090 = vmul.f32 %v4027, 0.020408163
    %v4091 = vmul.f32 %v4030, 0.020408163
    %v4092 = vmul.f32 %v4033, 0.020408163
    %v4093 = vmul.f32 %v4036, 0.020408163
    %v4094 = vmul.f32 %v4039, 0.020408163
    %v4095 = vmul.f32 %v4042, 0.020408163
    %v4096 = vmul.f32 %v4045, 0.020408163
    %v4097 = vmul.f32 %v4048, 0.020408163
    %v4098 = vmul.f32 %v4051, 0.020408163
    %v4099 = vmul.f32 %v4054, 0.020408163
    %v4100 = vmul.f32 %v4057, 0.020408163
    %v4101 = vmax.f32 %v4058, 0.0
    %v4102 = vmax.f32 %v4059, 0.0
    %v4103 = vmax.f32 %v4060, 0.0
    %v4104 = vmax.f32 %v4061, 0.0
    %v4105 = vmax.f32 %v4062, 0.0
    %v4106 = vmax.f32 %v4063, 0.0
    %v4107 = vmax.f32 %v4064, 0.0
    %v4108 = vmax.f32 %v4065, 0.0
    %v4109 = vmax.f32 %v4066, 0.0
    %v4110 = vmax.f32 %v4067, 0.0
    %v4111 = vmax.f32 %v4068, 0.0
    %v4112 = vmax.f32 %v4069, 0.0
    %v4113 = vmax.f32 %v4070, 0.0
    %v4114 = vmax.f32 %v4071, 0.0
    %v4115 = vmax.f32 %v4072, 0.0
    %v4116 = vmax.f32 %v4073, 0.0
    %v4117 = vmax.f32 %v4074, 0.0
    %v4118 = vmax.f32 %v4075, 0.0
    %v4119 = vmax.f32 %v4076, 0.0
    %v4120 = vmax.f32 %v4077, 0.0
    %v4121 = vmax.f32 %v4078, 0.0
    %v4122 = vmax.f32 %v4079, 0.0
    %v4123 = vmax.f32 %v4080, 0.0
    %v4124 = vmax.f32 %v4081, 0.0
    %v4125 = vmax.f32 %v4082, 0.0
    %v4126 = vmax.f32 %v4083, 0.0
    %v4127 = vmax.f32 %v4084, 0.0
    %v4128 = vmax.f32 %v4085, 0.0
    %v4129 = vmax.f32 %v4086, 0.0
    %v4130 = vmax.f32 %v4087, 0.0
    %v4131 = vmax.f32 %v4088, 0.0
    %v4132 = vmax.f32 %v4089, 0.0
    %v4133 = vmax.f32 %v4090, 0.0
    %v4134 = vmax.f32 %v4091, 0.0
    %v4135 = vmax.f32 %v4092, 0.0
    %v4136 = vmax.f32 %v4093, 0.0
    %v4137 = vmax.f32 %v4094, 0.0
    %v4138 = vmax.f32 %v4095, 0.0
    %v4139 = vmax.f32 %v4096, 0.0
    %v4140 = vmax.f32 %v4097, 0.0
    %v4141 = vmax.f32 %v4098, 0.0
    %v4142 = vmax.f32 %v4099, 0.0
    %v4143 = vmax.f32 %v4100, 0.0
    %v4144 = vadd.f32 %v4101, 0.001
    %v4145 = vadd.f32 %v4102, 0.001
    %v4146 = vadd.f32 %v4103, 0.001
    %v4147 = vadd.f32 %v4104, 0.001
    %v4148 = vadd.f32 %v4105, 0.001
    %v4149 = vadd.f32 %v4106, 0.001
    %v4150 = vadd.f32 %v4107, 0.001
    %v4151 = vadd.f32 %v4108, 0.001
    %v4152 = vadd.f32 %v4109, 0.001
    %v4153 = vadd.f32 %v4110, 0.001
    %v4154 = vadd.f32 %v4111, 0.001
    %v4155 = vadd.f32 %v4112, 0.001
    %v4156 = vadd.f32 %v4113, 0.001
    %v4157 = vadd.f32 %v4114, 0.001
    %v4158 = vadd.f32 %v4115, 0.001
    %v4159 = vadd.f32 %v4116, 0.001
    %v4160 = vadd.f32 %v4117, 0.001
    %v4161 = vadd.f32 %v4118, 0.001
    %v4162 = vadd.f32 %v4119, 0.001
    %v4163 = vadd.f32 %v4120, 0.001
    %v4164 = vadd.f32 %v4121, 0.001
    %v4165 = vadd.f32 %v4122, 0.001
    %v4166 = vadd.f32 %v4123, 0.001
    %v4167 = vadd.f32 %v4124, 0.001
    %v4168 = vadd.f32 %v4125, 0.001
    %v4169 = vadd.f32 %v4126, 0.001
    %v4170 = vadd.f32 %v4127, 0.001
    %v4171 = vadd.f32 %v4128, 0.001
    %v4172 = vadd.f32 %v4129, 0.001
    %v4173 = vadd.f32 %v4130, 0.001
    %v4174 = vadd.f32 %v4131, 0.001
    %v4175 = vadd.f32 %v4132, 0.001
    %v4176 = vadd.f32 %v4133, 0.001
    %v4177 = vadd.f32 %v4134, 0.001
    %v4178 = vadd.f32 %v4135, 0.001
    %v4179 = vadd.f32 %v4136, 0.001
    %v4180 = vadd.f32 %v4137, 0.001
    %v4181 = vadd.f32 %v4138, 0.001
    %v4182 = vadd.f32 %v4139, 0.001
    %v4183 = vadd.f32 %v4140, 0.001
    %v4184 = vadd.f32 %v4141, 0.001
    %v4185 = vadd.f32 %v4142, 0.001
    %v4186 = vadd.f32 %v4143, 0.001
    %v4187 = vrsqrt.pop %v4144
    %v4188 = vrsqrt.pop %v4145
    %v4189 = vrsqrt.pop %v4146
    %v4190 = vrsqrt.pop %v4147
    %v4191 = vrsqrt.pop %v4148
    %v4192 = vrsqrt.pop %v4149
    %v4193 = vrsqrt.pop %v4150
    %v4194 = vrsqrt.pop %v4151
    %v4195 = vrsqrt.pop %v4152
    %v4196 = vrsqrt.pop %v4153
    %v4197 = vrsqrt.pop %v4154
    %v4198 = vrsqrt.pop %v4155
    %v4199 = vrsqrt.pop %v4156
    %v4200 = vrsqrt.pop %v4157
    %v4201 = vrsqrt.pop %v4158
    %v4202 = vrsqrt.pop %v4159
    %v4203 = vrsqrt.pop %v4160
    %v4204 = vrsqrt.pop %v4161
    %v4205 = vrsqrt.pop %v4162
    %v4206 = vrsqrt.pop %v4163
    %v4207 = vrsqrt.pop %v4164
    %v4208 = vrsqrt.pop %v4165
    %v4209 = vrsqrt.pop %v4166
    %v4210 = vrsqrt.pop %v4167
    %v4211 = vrsqrt.pop %v4168
    %v4212 = vrsqrt.pop %v4169
    %v4213 = vrsqrt.pop %v4170
    %v4214 = vrsqrt.pop %v4171
    %v4215 = vrsqrt.pop %v4172
    %v4216 = vrsqrt.pop %v4173
    %v4217 = vrsqrt.pop %v4174
    %v4218 = vrsqrt.pop %v4175
    %v4219 = vrsqrt.pop %v4176
    %v4220 = vrsqrt.pop %v4177
    %v4221 = vrsqrt.pop %v4178
    %v4222 = vrsqrt.pop %v4179
    %v4223 = vrsqrt.pop %v4180
    %v4224 = vrsqrt.pop %v4181
    %v4225 = vrsqrt.pop %v4182
    %v4226 = vrsqrt.pop %v4183
    %v4227 = vrsqrt.pop %v4184
    %v4228 = vrsqrt.pop %v4185
    %v4229 = vrsqrt.pop %v4186
    %v4230 = vld [vmem:[%s2] sm:$0xff]
    %v4231 = vld [vmem:[%s2 + $0x8] sm:$0xff]
    %v4232 = vld [vmem:[%s2 + $0x10] sm:$0xff]
    %v4233 = vld [vmem:[%s2 + $0x18] sm:$0xff]
    %v4234 = vld [vmem:[%s2 + $0x20] sm:$0xff]
    %v4235 = vld [vmem:[%s2 + $0x28] sm:$0xff]
    %v4236 = vld [vmem:[%s2 + $0x30] sm:$0xff]
    %v4237 = vld [vmem:[%s2 + $0x38] sm:$0xff]
    %v4238 = vld [vmem:[%s2 + $0x40] sm:$0xff]
    %v4239 = vld [vmem:[%s2 + $0x48] sm:$0xff]
    %v4240 = vld [vmem:[%s2 + $0x50] sm:$0xff]
    %v4241 = vld [vmem:[%s2 + $0x58] sm:$0xff]
    %v4242 = vld [vmem:[%s2 + $0x60] sm:$0xff]
    %v4243 = vld [vmem:[%s2 + $0x68] sm:$0xff]
    %v4244 = vld [vmem:[%s2 + $0x70] sm:$0xff]
    %v4245 = vld [vmem:[%s2 + $0x78] sm:$0xff]
    %v4246 = vld [vmem:[%s2 + $0x80] sm:$0xff]
    %v4247 = vld [vmem:[%s2 + $0x88] sm:$0xff]
    %v4248 = vld [vmem:[%s2 + $0x90] sm:$0xff]
    %v4249 = vld [vmem:[%s2 + $0x98] sm:$0xff]
    %v4250 = vld [vmem:[%s2 + $0xa0] sm:$0xff]
    %v4251 = vld [vmem:[%s2 + $0xa8] sm:$0xff]
    %v4252 = vld [vmem:[%s2 + $0xb0] sm:$0xff]
    %v4253 = vld [vmem:[%s2 + $0xb8] sm:$0xff]
    %v4254 = vld [vmem:[%s2 + $0xc0] sm:$0xff]
    %v4255 = vld [vmem:[%s2 + $0xc8] sm:$0xff]
    %v4256 = vld [vmem:[%s2 + $0xd0] sm:$0xff]
    %v4257 = vld [vmem:[%s2 + $0xd8] sm:$0xff]
    %v4258 = vld [vmem:[%s2 + $0xe0] sm:$0xff]
    %v4259 = vld [vmem:[%s2 + $0xe8] sm:$0xff]
    %v4260 = vld [vmem:[%s2 + $0xf0] sm:$0xff]
    %v4261 = vld [vmem:[%s2 + $0xf8] sm:$0xff]
    %v4262 = vld [vmem:[%s2 + $0x100] sm:$0xff]
    %v4263 = vld [vmem:[%s2 + $0x108] sm:$0xff]
    %v4264 = vld [vmem:[%s2 + $0x110] sm:$0xff]
    %v4265 = vld [vmem:[%s2 + $0x118] sm:$0xff]
    %v4266 = vld [vmem:[%s2 + $0x120] sm:$0xff]
    %v4267 = vld [vmem:[%s2 + $0x128] sm:$0xff]
    %v4268 = vld [vmem:[%s2 + $0x130] sm:$0xff]
    %v4269 = vld [vmem:[%s2 + $0x138] sm:$0xff]
    %v4270 = vld [vmem:[%s2 + $0x140] sm:$0xff]
    %v4271 = vld [vmem:[%s2 + $0x148] sm:$0xff]
    %v4272 = vld [vmem:[%s2 + $0x150] sm:$0xff]
    %v4273 = vmul.f32 %v4187, %v4230
    %v4274 = vmul.f32 %v4188, %v4231
    %v4275 = vmul.f32 %v4189, %v4232
    %v4276 = vmul.f32 %v4190, %v4233
    %v4277 = vmul.f32 %v4191, %v4234
    %v4278 = vmul.f32 %v4192, %v4235
    %v4279 = vmul.f32 %v4193, %v4236
    %v4280 = vmul.f32 %v4194, %v4237
    %v4281 = vmul.f32 %v4195, %v4238
    %v4282 = vmul.f32 %v4196, %v4239
    %v4283 = vmul.f32 %v4197, %v4240
    %v4284 = vmul.f32 %v4198, %v4241
    %v4285 = vmul.f32 %v4199, %v4242
    %v4286 = vmul.f32 %v4200, %v4243
    %v4287 = vmul.f32 %v4201, %v4244
    %v4288 = vmul.f32 %v4202, %v4245
    %v4289 = vmul.f32 %v4203, %v4246
    %v4290 = vmul.f32 %v4204, %v4247
    %v4291 = vmul.f32 %v4205, %v4248
    %v4292 = vmul.f32 %v4206, %v4249
    %v4293 = vmul.f32 %v4207, %v4250
    %v4294 = vmul.f32 %v4208, %v4251
    %v4295 = vmul.f32 %v4209, %v4252
    %v4296 = vmul.f32 %v4210, %v4253
    %v4297 = vmul.f32 %v4211, %v4254
    %v4298 = vmul.f32 %v4212, %v4255
    %v4299 = vmul.f32 %v4213, %v4256
    %v4300 = vmul.f32 %v4214, %v4257
    %v4301 = vmul.f32 %v4215, %v4258
    %v4302 = vmul.f32 %v4216, %v4259
    %v4303 = vmul.f32 %v4217, %v4260
    %v4304 = vmul.f32 %v4218, %v4261
    %v4305 = vmul.f32 %v4219, %v4262
    %v4306 = vmul.f32 %v4220, %v4263
    %v4307 = vmul.f32 %v4221, %v4264
    %v4308 = vmul.f32 %v4222, %v4265
    %v4309 = vmul.f32 %v4223, %v4266
    %v4310 = vmul.f32 %v4224, %v4267
    %v4311 = vmul.f32 %v4225, %v4268
    %v4312 = vmul.f32 %v4226, %v4269
    %v4313 = vmul.f32 %v4227, %v4270
    %v4314 = vmul.f32 %v4228, %v4271
    %v4315 = vmul.f32 %v4229, %v4272
    %4317 = vset.pattern.permute.xlu0 0
    %4318 = vperm.xlu0 %4317, %v4273
    %v4319 = vpop.permute.xlu0 %4318
    %4322 = vset.pattern.permute.xlu0 0
    %4323 = vperm.xlu0 %4322, %v4274
    %v4324 = vpop.permute.xlu0 %4323
    %4327 = vset.pattern.permute.xlu0 0
    %4328 = vperm.xlu0 %4327, %v4275
    %v4329 = vpop.permute.xlu0 %4328
    %4332 = vset.pattern.permute.xlu0 0
    %4333 = vperm.xlu0 %4332, %v4276
    %v4334 = vpop.permute.xlu0 %4333
    %4337 = vset.pattern.permute.xlu0 0
    %4338 = vperm.xlu0 %4337, %v4277
    %v4339 = vpop.permute.xlu0 %4338
    %4342 = vset.pattern.permute.xlu0 0
    %4343 = vperm.xlu0 %4342, %v4278
    %v4344 = vpop.permute.xlu0 %4343
    %4347 = vset.pattern.permute.xlu0 0
    %4348 = vperm.xlu0 %4347, %v4279
    %v4349 = vpop.permute.xlu0 %4348
    %4352 = vset.pattern.permute.xlu0 0
    %4353 = vperm.xlu0 %4352, %v4280
    %v4354 = vpop.permute.xlu0 %4353
    %4357 = vset.pattern.permute.xlu0 0
    %4358 = vperm.xlu0 %4357, %v4281
    %v4359 = vpop.permute.xlu0 %4358
    %4362 = vset.pattern.permute.xlu0 0
    %4363 = vperm.xlu0 %4362, %v4282
    %v4364 = vpop.permute.xlu0 %4363
    %4367 = vset.pattern.permute.xlu0 0
    %4368 = vperm.xlu0 %4367, %v4283
    %v4369 = vpop.permute.xlu0 %4368
    %4372 = vset.pattern.permute.xlu0 0
    %4373 = vperm.xlu0 %4372, %v4284
    %v4374 = vpop.permute.xlu0 %4373
    %4377 = vset.pattern.permute.xlu0 0
    %4378 = vperm.xlu0 %4377, %v4285
    %v4379 = vpop.permute.xlu0 %4378
    %4382 = vset.pattern.permute.xlu0 0
    %4383 = vperm.xlu0 %4382, %v4286
    %v4384 = vpop.permute.xlu0 %4383
    %4387 = vset.pattern.permute.xlu0 0
    %4388 = vperm.xlu0 %4387, %v4287
    %v4389 = vpop.permute.xlu0 %4388
    %4392 = vset.pattern.permute.xlu0 0
    %4393 = vperm.xlu0 %4392, %v4288
    %v4394 = vpop.permute.xlu0 %4393
    %4397 = vset.pattern.permute.xlu0 0
    %4398 = vperm.xlu0 %4397, %v4289
    %v4399 = vpop.permute.xlu0 %4398
    %4402 = vset.pattern.permute.xlu0 0
    %4403 = vperm.xlu0 %4402, %v4290
    %v4404 = vpop.permute.xlu0 %4403
    %4407 = vset.pattern.permute.xlu0 0
    %4408 = vperm.xlu0 %4407, %v4291
    %v4409 = vpop.permute.xlu0 %4408
    %4412 = vset.pattern.permute.xlu0 0
    %4413 = vperm.xlu0 %4412, %v4292
    %v4414 = vpop.permute.xlu0 %4413
    %4417 = vset.pattern.permute.xlu0 0
    %4418 = vperm.xlu0 %4417, %v4293
    %v4419 = vpop.permute.xlu0 %4418
    %4422 = vset.pattern.permute.xlu0 0
    %4423 = vperm.xlu0 %4422, %v4294
    %v4424 = vpop.permute.xlu0 %4423
    %4427 = vset.pattern.permute.xlu0 0
    %4428 = vperm.xlu0 %4427, %v4295
    %v4429 = vpop.permute.xlu0 %4428
    %4432 = vset.pattern.permute.xlu0 0
    %4433 = vperm.xlu0 %4432, %v4296
    %v4434 = vpop.permute.xlu0 %4433
    %4437 = vset.pattern.permute.xlu0 0
    %4438 = vperm.xlu0 %4437, %v4297
    %v4439 = vpop.permute.xlu0 %4438
    %4442 = vset.pattern.permute.xlu0 0
    %4443 = vperm.xlu0 %4442, %v4298
    %v4444 = vpop.permute.xlu0 %4443
    %4447 = vset.pattern.permute.xlu0 0
    %4448 = vperm.xlu0 %4447, %v4299
    %v4449 = vpop.permute.xlu0 %4448
    %4452 = vset.pattern.permute.xlu0 0
    %4453 = vperm.xlu0 %4452, %v4300
    %v4454 = vpop.permute.xlu0 %4453
    %4457 = vset.pattern.permute.xlu0 0
    %4458 = vperm.xlu0 %4457, %v4301
    %v4459 = vpop.permute.xlu0 %4458
    %4462 = vset.pattern.permute.xlu0 0
    %4463 = vperm.xlu0 %4462, %v4302
    %v4464 = vpop.permute.xlu0 %4463
    %4467 = vset.pattern.permute.xlu0 0
    %4468 = vperm.xlu0 %4467, %v4303
    %v4469 = vpop.permute.xlu0 %4468
    %4472 = vset.pattern.permute.xlu0 0
    %4473 = vperm.xlu0 %4472, %v4304
    %v4474 = vpop.permute.xlu0 %4473
    %4477 = vset.pattern.permute.xlu0 0
    %4478 = vperm.xlu0 %4477, %v4305
    %v4479 = vpop.permute.xlu0 %4478
    %4482 = vset.pattern.permute.xlu0 0
    %4483 = vperm.xlu0 %4482, %v4306
    %v4484 = vpop.permute.xlu0 %4483
    %4487 = vset.pattern.permute.xlu0 0
    %4488 = vperm.xlu0 %4487, %v4307
    %v4489 = vpop.permute.xlu0 %4488
    %4492 = vset.pattern.permute.xlu0 0
    %4493 = vperm.xlu0 %4492, %v4308
    %v4494 = vpop.permute.xlu0 %4493
    %4497 = vset.pattern.permute.xlu0 0
    %4498 = vperm.xlu0 %4497, %v4309
    %v4499 = vpop.permute.xlu0 %4498
    %4502 = vset.pattern.permute.xlu0 0
    %4503 = vperm.xlu0 %4502, %v4310
    %v4504 = vpop.permute.xlu0 %4503
    %4507 = vset.pattern.permute.xlu0 0
    %4508 = vperm.xlu0 %4507, %v4311
    %v4509 = vpop.permute.xlu0 %4508
    %4512 = vset.pattern.permute.xlu0 0
    %4513 = vperm.xlu0 %4512, %v4312
    %v4514 = vpop.permute.xlu0 %4513
    %4517 = vset.pattern.permute.xlu0 0
    %4518 = vperm.xlu0 %4517, %v4313
    %v4519 = vpop.permute.xlu0 %4518
    %4522 = vset.pattern.permute.xlu0 0
    %4523 = vperm.xlu0 %4522, %v4314
    %v4524 = vpop.permute.xlu0 %4523
    %4527 = vset.pattern.permute.xlu0 0
    %4528 = vperm.xlu0 %4527, %v4315
    %v4529 = vpop.permute.xlu0 %4528
    %v4531 = vmul.f32 %v3843, %v4319
    %v4532 = vmul.f32 %v3844, %v4324
    %v4533 = vmul.f32 %v3845, %v4329
    %v4534 = vmul.f32 %v3846, %v4334
    %v4535 = vmul.f32 %v3847, %v4339
    %v4536 = vmul.f32 %v3848, %v4344
    %v4537 = vmul.f32 %v3849, %v4349
    %v4538 = vmul.f32 %v3850, %v4354
    %v4539 = vmul.f32 %v3851, %v4359
    %v4540 = vmul.f32 %v3852, %v4364
    %v4541 = vmul.f32 %v3853, %v4369
    %v4542 = vmul.f32 %v3854, %v4374
    %v4543 = vmul.f32 %v3855, %v4379
    %v4544 = vmul.f32 %v3856, %v4384
    %v4545 = vmul.f32 %v3857, %v4389
    %v4546 = vmul.f32 %v3858, %v4394
    %v4547 = vmul.f32 %v3859, %v4399
    %v4548 = vmul.f32 %v3860, %v4404
    %v4549 = vmul.f32 %v3861, %v4409
    %v4550 = vmul.f32 %v3862, %v4414
    %v4551 = vmul.f32 %v3863, %v4419
    %v4552 = vmul.f32 %v3864, %v4424
    %v4553 = vmul.f32 %v3865, %v4429
    %v4554 = vmul.f32 %v3866, %v4434
    %v4555 = vmul.f32 %v3867, %v4439
    %v4556 = vmul.f32 %v3868, %v4444
    %v4557 = vmul.f32 %v3869, %v4449
    %v4558 = vmul.f32 %v3870, %v4454
    %v4559 = vmul.f32 %v3871, %v4459
    %v4560 = vmul.f32 %v3872, %v4464
    %v4561 = vmul.f32 %v3873, %v4469
    %v4562 = vmul.f32 %v3874, %v4474
    %v4563 = vmul.f32 %v3875, %v4479
    %v4564 = vmul.f32 %v3876, %v4484
    %v4565 = vmul.f32 %v3877, %v4489
    %v4566 = vmul.f32 %v3878, %v4494
    %v4567 = vmul.f32 %v3879, %v4499
    %v4568 = vmul.f32 %v3880, %v4504
    %v4569 = vmul.f32 %v3881, %v4509
    %v4570 = vmul.f32 %v3882, %v4514
    %v4571 = vmul.f32 %v3883, %v4519
    %v4572 = vmul.f32 %v3884, %v4524
    %v4573 = vmul.f32 %v3885, %v4529
    %v4574 = vld [vmem:[%s3] sm:$0xff]
    %v4575 = vld [vmem:[%s3 + $0x8] sm:$0xff]
    %v4576 = vld [vmem:[%s3 + $0x10] sm:$0xff]
    %v4577 = vld [vmem:[%s3 + $0x18] sm:$0xff]
    %v4578 = vld [vmem:[%s3 + $0x20] sm:$0xff]
    %v4579 = vld [vmem:[%s3 + $0x28] sm:$0xff]
    %v4580 = vld [vmem:[%s3 + $0x30] sm:$0xff]
    %v4581 = vld [vmem:[%s3 + $0x38] sm:$0xff]
    %v4582 = vld [vmem:[%s3 + $0x40] sm:$0xff]
    %v4583 = vld [vmem:[%s3 + $0x48] sm:$0xff]
    %v4584 = vld [vmem:[%s3 + $0x50] sm:$0xff]
    %v4585 = vld [vmem:[%s3 + $0x58] sm:$0xff]
    %v4586 = vld [vmem:[%s3 + $0x60] sm:$0xff]
    %v4587 = vld [vmem:[%s3 + $0x68] sm:$0xff]
    %v4588 = vld [vmem:[%s3 + $0x70] sm:$0xff]
    %v4589 = vld [vmem:[%s3 + $0x78] sm:$0xff]
    %v4590 = vld [vmem:[%s3 + $0x80] sm:$0xff]
    %v4591 = vld [vmem:[%s3 + $0x88] sm:$0xff]
    %v4592 = vld [vmem:[%s3 + $0x90] sm:$0xff]
    %v4593 = vld [vmem:[%s3 + $0x98] sm:$0xff]
    %v4594 = vld [vmem:[%s3 + $0xa0] sm:$0xff]
    %v4595 = vld [vmem:[%s3 + $0xa8] sm:$0xff]
    %v4596 = vld [vmem:[%s3 + $0xb0] sm:$0xff]
    %v4597 = vld [vmem:[%s3 + $0xb8] sm:$0xff]
    %v4598 = vld [vmem:[%s3 + $0xc0] sm:$0xff]
    %v4599 = vld [vmem:[%s3 + $0xc8] sm:$0xff]
    %v4600 = vld [vmem:[%s3 + $0xd0] sm:$0xff]
    %v4601 = vld [vmem:[%s3 + $0xd8] sm:$0xff]
    %v4602 = vld [vmem:[%s3 + $0xe0] sm:$0xff]
    %v4603 = vld [vmem:[%s3 + $0xe8] sm:$0xff]
    %v4604 = vld [vmem:[%s3 + $0xf0] sm:$0xff]
    %v4605 = vld [vmem:[%s3 + $0xf8] sm:$0xff]
    %v4606 = vld [vmem:[%s3 + $0x100] sm:$0xff]
    %v4607 = vld [vmem:[%s3 + $0x108] sm:$0xff]
    %v4608 = vld [vmem:[%s3 + $0x110] sm:$0xff]
    %v4609 = vld [vmem:[%s3 + $0x118] sm:$0xff]
    %v4610 = vld [vmem:[%s3 + $0x120] sm:$0xff]
    %v4611 = vld [vmem:[%s3 + $0x128] sm:$0xff]
    %v4612 = vld [vmem:[%s3 + $0x130] sm:$0xff]
    %v4613 = vld [vmem:[%s3 + $0x138] sm:$0xff]
    %v4614 = vld [vmem:[%s3 + $0x140] sm:$0xff]
    %v4615 = vld [vmem:[%s3 + $0x148] sm:$0xff]
    %v4616 = vld [vmem:[%s3 + $0x150] sm:$0xff]
    %4618 = vset.pattern.permute.xlu0 0
    %4619 = vperm.xlu0 %4618, %v4574
    %v4620 = vpop.permute.xlu0 %4619
    %4623 = vset.pattern.permute.xlu0 0
    %4624 = vperm.xlu0 %4623, %v4575
    %v4625 = vpop.permute.xlu0 %4624
    %4628 = vset.pattern.permute.xlu0 0
    %4629 = vperm.xlu0 %4628, %v4576
    %v4630 = vpop.permute.xlu0 %4629
    %4633 = vset.pattern.permute.xlu0 0
    %4634 = vperm.xlu0 %4633, %v4577
    %v4635 = vpop.permute.xlu0 %4634
    %4638 = vset.pattern.permute.xlu0 0
    %4639 = vperm.xlu0 %4638, %v4578
    %v4640 = vpop.permute.xlu0 %4639
    %4643 = vset.pattern.permute.xlu0 0
    %4644 = vperm.xlu0 %4643, %v4579
    %v4645 = vpop.permute.xlu0 %4644
    %4648 = vset.pattern.permute.xlu0 0
    %4649 = vperm.xlu0 %4648, %v4580
    %v4650 = vpop.permute.xlu0 %4649
    %4653 = vset.pattern.permute.xlu0 0
    %4654 = vperm.xlu0 %4653, %v4581
    %v4655 = vpop.permute.xlu0 %4654
    %4658 = vset.pattern.permute.xlu0 0
    %4659 = vperm.xlu0 %4658, %v4582
    %v4660 = vpop.permute.xlu0 %4659
    %4663 = vset.pattern.permute.xlu0 0
    %4664 = vperm.xlu0 %4663, %v4583
    %v4665 = vpop.permute.xlu0 %4664
    %4668 = vset.pattern.permute.xlu0 0
    %4669 = vperm.xlu0 %4668, %v4584
    %v4670 = vpop.permute.xlu0 %4669
    %4673 = vset.pattern.permute.xlu0 0
    %4674 = vperm.xlu0 %4673, %v4585
    %v4675 = vpop.permute.xlu0 %4674
    %4678 = vset.pattern.permute.xlu0 0
    %4679 = vperm.xlu0 %4678, %v4586
    %v4680 = vpop.permute.xlu0 %4679
    %4683 = vset.pattern.permute.xlu0 0
    %4684 = vperm.xlu0 %4683, %v4587
    %v4685 = vpop.permute.xlu0 %4684
    %4688 = vset.pattern.permute.xlu0 0
    %4689 = vperm.xlu0 %4688, %v4588
    %v4690 = vpop.permute.xlu0 %4689
    %4693 = vset.pattern.permute.xlu0 0
    %4694 = vperm.xlu0 %4693, %v4589
    %v4695 = vpop.permute.xlu0 %4694
    %4698 = vset.pattern.permute.xlu0 0
    %4699 = vperm.xlu0 %4698, %v4590
    %v4700 = vpop.permute.xlu0 %4699
    %4703 = vset.pattern.permute.xlu0 0
    %4704 = vperm.xlu0 %4703, %v4591
    %v4705 = vpop.permute.xlu0 %4704
    %4708 = vset.pattern.permute.xlu0 0
    %4709 = vperm.xlu0 %4708, %v4592
    %v4710 = vpop.permute.xlu0 %4709
    %4713 = vset.pattern.permute.xlu0 0
    %4714 = vperm.xlu0 %4713, %v4593
    %v4715 = vpop.permute.xlu0 %4714
    %4718 = vset.pattern.permute.xlu0 0
    %4719 = vperm.xlu0 %4718, %v4594
    %v4720 = vpop.permute.xlu0 %4719
    %4723 = vset.pattern.permute.xlu0 0
    %4724 = vperm.xlu0 %4723, %v4595
    %v4725 = vpop.permute.xlu0 %4724
    %4728 = vset.pattern.permute.xlu0 0
    %4729 = vperm.xlu0 %4728, %v4596
    %v4730 = vpop.permute.xlu0 %4729
    %4733 = vset.pattern.permute.xlu0 0
    %4734 = vperm.xlu0 %4733, %v4597
    %v4735 = vpop.permute.xlu0 %4734
    %4738 = vset.pattern.permute.xlu0 0
    %4739 = vperm.xlu0 %4738, %v4598
    %v4740 = vpop.permute.xlu0 %4739
    %4743 = vset.pattern.permute.xlu0 0
    %4744 = vperm.xlu0 %4743, %v4599
    %v4745 = vpop.permute.xlu0 %4744
    %4748 = vset.pattern.permute.xlu0 0
    %4749 = vperm.xlu0 %4748, %v4600
    %v4750 = vpop.permute.xlu0 %4749
    %4753 = vset.pattern.permute.xlu0 0
    %4754 = vperm.xlu0 %4753, %v4601
    %v4755 = vpop.permute.xlu0 %4754
    %4758 = vset.pattern.permute.xlu0 0
    %4759 = vperm.xlu0 %4758, %v4602
    %v4760 = vpop.permute.xlu0 %4759
    %4763 = vset.pattern.permute.xlu0 0
    %4764 = vperm.xlu0 %4763, %v4603
    %v4765 = vpop.permute.xlu0 %4764
    %4768 = vset.pattern.permute.xlu0 0
    %4769 = vperm.xlu0 %4768, %v4604
    %v4770 = vpop.permute.xlu0 %4769
    %4773 = vset.pattern.permute.xlu0 0
    %4774 = vperm.xlu0 %4773, %v4605
    %v4775 = vpop.permute.xlu0 %4774
    %4778 = vset.pattern.permute.xlu0 0
    %4779 = vperm.xlu0 %4778, %v4606
    %v4780 = vpop.permute.xlu0 %4779
    %4783 = vset.pattern.permute.xlu0 0
    %4784 = vperm.xlu0 %4783, %v4607
    %v4785 = vpop.permute.xlu0 %4784
    %4788 = vset.pattern.permute.xlu0 0
    %4789 = vperm.xlu0 %4788, %v4608
    %v4790 = vpop.permute.xlu0 %4789
    %4793 = vset.pattern.permute.xlu0 0
    %4794 = vperm.xlu0 %4793, %v4609
    %v4795 = vpop.permute.xlu0 %4794
    %4798 = vset.pattern.permute.xlu0 0
    %4799 = vperm.xlu0 %4798, %v4610
    %v4800 = vpop.permute.xlu0 %4799
    %4803 = vset.pattern.permute.xlu0 0
    %4804 = vperm.xlu0 %4803, %v4611
    %v4805 = vpop.permute.xlu0 %4804
    %4808 = vset.pattern.permute.xlu0 0
    %4809 = vperm.xlu0 %4808, %v4612
    %v4810 = vpop.permute.xlu0 %4809
    %4813 = vset.pattern.permute.xlu0 0
    %4814 = vperm.xlu0 %4813, %v4613
    %v4815 = vpop.permute.xlu0 %4814
    %4818 = vset.pattern.permute.xlu0 0
    %4819 = vperm.xlu0 %4818, %v4614
    %v4820 = vpop.permute.xlu0 %4819
    %4823 = vset.pattern.permute.xlu0 0
    %4824 = vperm.xlu0 %4823, %v4615
    %v4825 = vpop.permute.xlu0 %4824
    %4828 = vset.pattern.permute.xlu0 0
    %4829 = vperm.xlu0 %4828, %v4616
    %v4830 = vpop.permute.xlu0 %4829
    %v4832 = vadd.f32 %v4531, %v4620
    %v4833 = vadd.f32 %v4532, %v4625
    %v4834 = vadd.f32 %v4533, %v4630
    %v4835 = vadd.f32 %v4534, %v4635
    %v4836 = vadd.f32 %v4535, %v4640
    %v4837 = vadd.f32 %v4536, %v4645
    %v4838 = vadd.f32 %v4537, %v4650
    %v4839 = vadd.f32 %v4538, %v4655
    %v4840 = vadd.f32 %v4539, %v4660
    %v4841 = vadd.f32 %v4540, %v4665
    %v4842 = vadd.f32 %v4541, %v4670
    %v4843 = vadd.f32 %v4542, %v4675
    %v4844 = vadd.f32 %v4543, %v4680
    %v4845 = vadd.f32 %v4544, %v4685
    %v4846 = vadd.f32 %v4545, %v4690
    %v4847 = vadd.f32 %v4546, %v4695
    %v4848 = vadd.f32 %v4547, %v4700
    %v4849 = vadd.f32 %v4548, %v4705
    %v4850 = vadd.f32 %v4549, %v4710
    %v4851 = vadd.f32 %v4550, %v4715
    %v4852 = vadd.f32 %v4551, %v4720
    %v4853 = vadd.f32 %v4552, %v4725
    %v4854 = vadd.f32 %v4553, %v4730
    %v4855 = vadd.f32 %v4554, %v4735
    %v4856 = vadd.f32 %v4555, %v4740
    %v4857 = vadd.f32 %v4556, %v4745
    %v4858 = vadd.f32 %v4557, %v4750
    %v4859 = vadd.f32 %v4558, %v4755
    %v4860 = vadd.f32 %v4559, %v4760
    %v4861 = vadd.f32 %v4560, %v4765
    %v4862 = vadd.f32 %v4561, %v4770
    %v4863 = vadd.f32 %v4562, %v4775
    %v4864 = vadd.f32 %v4563, %v4780
    %v4865 = vadd.f32 %v4564, %v4785
    %v4866 = vadd.f32 %v4565, %v4790
    %v4867 = vadd.f32 %v4566, %v4795
    %v4868 = vadd.f32 %v4567, %v4800
    %v4869 = vadd.f32 %v4568, %v4805
    %v4870 = vadd.f32 %v4569, %v4810
    %v4871 = vadd.f32 %v4570, %v4815
    %v4872 = vadd.f32 %v4571, %v4820
    %v4873 = vadd.f32 %v4572, %v4825
    %v4874 = vadd.f32 %v4573, %v4830
    %4875 = vst.msk [vmem:[%s4] sm:$0xff] %vm3670, %v4832
    %4876 = vst.msk [vmem:[%s4 + $0x8] sm:$0xff] %vm3670, %v4833
    %4877 = vst.msk [vmem:[%s4 + $0x10] sm:$0xff] %vm3670, %v4834
    %4878 = vst.msk [vmem:[%s4 + $0x18] sm:$0xff] %vm3670, %v4835
    %4879 = vst.msk [vmem:[%s4 + $0x20] sm:$0xff] %vm3670, %v4836
    %4880 = vst.msk [vmem:[%s4 + $0x28] sm:$0xff] %vm3670, %v4837
    %4881 = vst.msk [vmem:[%s4 + $0x30] sm:$0xff] %vm3670, %v4838
    %4882 = vst.msk [vmem:[%s4 + $0x38] sm:$0xff] %vm3670, %v4839
    %4883 = vst.msk [vmem:[%s4 + $0x40] sm:$0xff] %vm3670, %v4840
    %4884 = vst.msk [vmem:[%s4 + $0x48] sm:$0xff] %vm3670, %v4841
    %4885 = vst.msk [vmem:[%s4 + $0x50] sm:$0xff] %vm3670, %v4842
    %4886 = vst.msk [vmem:[%s4 + $0x58] sm:$0xff] %vm3670, %v4843
    %4887 = vst.msk [vmem:[%s4 + $0x60] sm:$0xff] %vm3670, %v4844
    %4888 = vst.msk [vmem:[%s4 + $0x68] sm:$0xff] %vm3670, %v4845
    %4889 = vst.msk [vmem:[%s4 + $0x70] sm:$0xff] %vm3670, %v4846
    %4890 = vst.msk [vmem:[%s4 + $0x78] sm:$0xff] %vm3670, %v4847
    %4891 = vst.msk [vmem:[%s4 + $0x80] sm:$0xff] %vm3670, %v4848
    %4892 = vst.msk [vmem:[%s4 + $0x88] sm:$0xff] %vm3670, %v4849
    %4893 = vst.msk [vmem:[%s4 + $0x90] sm:$0xff] %vm3670, %v4850
    %4894 = vst.msk [vmem:[%s4 + $0x98] sm:$0xff] %vm3670, %v4851
    %4895 = vst.msk [vmem:[%s4 + $0xa0] sm:$0xff] %vm3670, %v4852
    %4896 = vst.msk [vmem:[%s4 + $0xa8] sm:$0xff] %vm3670, %v4853
    %4897 = vst.msk [vmem:[%s4 + $0xb0] sm:$0xff] %vm3670, %v4854
    %4898 = vst.msk [vmem:[%s4 + $0xb8] sm:$0xff] %vm3670, %v4855
    %4899 = vst.msk [vmem:[%s4 + $0xc0] sm:$0xff] %vm3670, %v4856
    %4900 = vst.msk [vmem:[%s4 + $0xc8] sm:$0xff] %vm3670, %v4857
    %4901 = vst.msk [vmem:[%s4 + $0xd0] sm:$0xff] %vm3670, %v4858
    %4902 = vst.msk [vmem:[%s4 + $0xd8] sm:$0xff] %vm3670, %v4859
    %4903 = vst.msk [vmem:[%s4 + $0xe0] sm:$0xff] %vm3670, %v4860
    %4904 = vst.msk [vmem:[%s4 + $0xe8] sm:$0xff] %vm3670, %v4861
    %4905 = vst.msk [vmem:[%s4 + $0xf0] sm:$0xff] %vm3670, %v4862
    %4906 = vst.msk [vmem:[%s4 + $0xf8] sm:$0xff] %vm3670, %v4863
    %4907 = vst.msk [vmem:[%s4 + $0x100] sm:$0xff] %vm3670, %v4864
    %4908 = vst.msk [vmem:[%s4 + $0x108] sm:$0xff] %vm3670, %v4865
    %4909 = vst.msk [vmem:[%s4 + $0x110] sm:$0xff] %vm3670, %v4866
    %4910 = vst.msk [vmem:[%s4 + $0x118] sm:$0xff] %vm3670, %v4867
    %4911 = vst.msk [vmem:[%s4 + $0x120] sm:$0xff] %vm3670, %v4868
    %4912 = vst.msk [vmem:[%s4 + $0x128] sm:$0xff] %vm3670, %v4869
    %4913 = vst.msk [vmem:[%s4 + $0x130] sm:$0xff] %vm3670, %v4870
    %4914 = vst.msk [vmem:[%s4 + $0x138] sm:$0xff] %vm3670, %v4871
    %4915 = vst.msk [vmem:[%s4 + $0x140] sm:$0xff] %vm3670, %v4872
    %4916 = vst.msk [vmem:[%s4 + $0x148] sm:$0xff] %vm3670, %v4873
    %4917 = vst.msk [vmem:[%s4 + $0x150] sm:$0xff] %vm3670, %v4874
    // Predicated region
    $region22: #{tpu_custom_call.1} parent=1 // pred_check
      _
    $region23: #{tpu_custom_call.1} parent=1 // pred_check_branch
      %4919 = sbr.rel (0) target = $region25
    $region24: #{tpu_custom_call.1} parent=1 // pred_region
      _
    $region25: #{tpu_custom_call.1} parent=1 // pred_fallthru
      _
    // Predicated region
    $region26: #{tpu_custom_call.1} parent=1 // pred_check
      _
    $region27: #{tpu_custom_call.1} parent=1 // pred_check_branch
      %4921 = sbr.rel (0) target = $region29
    $region28: #{tpu_custom_call.1} parent=1 // pred_region
      _
    $region29: #{tpu_custom_call.1} parent=1 // pred_fallthru
      _
    %4922 = vsyncpa [#allocation3], 1

</llo_original>
